<compile_context>
chip_gen: v6e
topology: v6e:2x2x1
jax: 0.10.0
libtpu: 0.0.40
codegen_flags: <defaults>
</compile_context>

<pallas_src>
import functools
import math

import jax
import jax.numpy as jnp
from jax.experimental import pallas as pl
from jax.experimental.pallas import tpu as pltpu

LN_EPS = 1e-5  # torch.nn.LayerNorm default eps


# ----------------------------- in-kernel math -----------------------------

def _erf(x):
    # Abramowitz & Stegun 7.1.26 polynomial (max abs err ~1.5e-7) — matches
    # torch's exact (erf-based) F.gelu well below f32 noise; exp -> EUP.
    a1, a2, a3, a4, a5 = (0.254829592, -0.284496736, 1.421413741,
                          -1.453152027, 1.061405429)
    p = 0.3275911
    s = jnp.where(x >= 0.0, 1.0, -1.0)
    ax = jnp.abs(x)
    t = 1.0 / (1.0 + p * ax)
    poly = ((((a5 * t + a4) * t + a3) * t + a2) * t + a1) * t
    return s * (1.0 - poly * jnp.exp(-ax * ax))


def _gelu_exact(x):
    return 0.5 * x * (1.0 + _erf(x * (1.0 / math.sqrt(2.0))))


def _layer_norm(h, gamma, beta):
    # f32 statistics, biased variance (matches torch.nn.LayerNorm).
    mean = jnp.mean(h, axis=-1, keepdims=True)
    var = jnp.mean((h - mean) ** 2, axis=-1, keepdims=True)
    return (h - mean) * jax.lax.rsqrt(var + LN_EPS) * gamma + beta


def _attention(h_q, kv_ref, w_q, w_o, b_o, *, n_heads, d_head):
    """Multi-head attention against a cached, fused K|V buffer.

    h_q   : (Tq,  D)        f32   (LayerNormed query-tile activations)
    kv_ref: (Skv, 2*H*Dh)   bf16  VMEM scratch ref, K then V along lanes
    w_q   : (D,  H*Dh)      bf16
    w_o   : (H*Dh, D)       bf16      b_o: (1, D) f32
    """
    hd = n_heads * d_head
    scale = 1.0 / math.sqrt(d_head)

    # Fused, lane-dense query projection (bf16 in, f32 accumulate).
    q = jnp.dot(h_q.astype(jnp.bfloat16), w_q,
                preferred_element_type=jnp.float32)            # (Tq, H*Dh)

    # Per-head softmax(q k^T) v; contraction dim is d_head so this is narrow
    # on the MXU whichever way it is written.  Softmax math stays f32.
    heads = []
    for hh in range(n_heads):                                  # static unroll
        lo, hi = hh * d_head, (hh + 1) * d_head
        q_h = q[:, lo:hi].astype(jnp.bfloat16)
        k_h = kv_ref[:, lo:hi]                                 # bf16 cache
        v_h = kv_ref[:, hd + lo:hd + hi]                       # bf16 cache
        s = jax.lax.dot_general(q_h, k_h, (((1,), (1,)), ((), ())),
                                preferred_element_type=jnp.float32) * scale
        s = s - jnp.max(s, axis=-1, keepdims=True)
        p = jnp.exp(s)
        p = p * pl.reciprocal(jnp.sum(p, axis=-1, keepdims=True), approx=True)
        heads.append(jnp.dot(p.astype(jnp.bfloat16), v_h,
                             preferred_element_type=jnp.float32)
                     .astype(jnp.bfloat16))                    # (Tq, Dh)

    # Single fused output projection instead of per-head accumulation.
    o = jnp.concatenate(heads, axis=-1)                        # (Tq, H*Dh) bf16
    return jnp.dot(o, w_o, preferred_element_type=jnp.float32) + b_o


def _block_kernel(xf_ref, ctx_ref,
                  ln0_g_ref, ln0_b_ref, wq0_ref, wkv0_ref, wo0_ref, bo0_ref,
                  ln1_g_ref, ln1_b_ref, wq1_ref, wkv1_ref, wo1_ref, bo1_ref,
                  ln2_g_ref, ln2_b_ref, wff1_ref, bff1_ref, wff2_ref, bff2_ref,
                  o_ref,
                  kv0_ref, kv1_ref,
                  *, n_heads, d_head, d_ff, q_tile):
    qi = pl.program_id(1)

    # ---- per-batch K/V caches: compute once (qi == 0), reuse for all tiles
    @pl.when(qi == 0)
    def _():
        x_full = xf_ref[...].astype(jnp.float32)               # (S, D)
        h_kv = _layer_norm(x_full, ln0_g_ref[...], ln0_b_ref[...])
        kv0_ref[...] = jnp.dot(
            h_kv.astype(jnp.bfloat16), wkv0_ref[...],
            preferred_element_type=jnp.float32).astype(jnp.bfloat16)
        ctx = ctx_ref[...].astype(jnp.bfloat16)                # (Sc, Dc)
        kv1_ref[...] = jnp.dot(
            ctx, wkv1_ref[...],
            preferred_element_type=jnp.float32).astype(jnp.bfloat16)

    # Query tile of the residual stream, sliced from the resident full block.
    row0 = pl.multiple_of(qi * q_tile, q_tile)
    x = xf_ref[pl.ds(row0, q_tile), :].astype(jnp.float32)     # (TQ, D)

    # --- self-attention + residual ---
    h_q = _layer_norm(x, ln0_g_ref[...], ln0_b_ref[...])
    x = x + _attention(h_q, kv0_ref, wq0_ref[...], wo0_ref[...], bo0_ref[...],
                       n_heads=n_heads, d_head=d_head)

    # --- cross-attention + residual ---
    h_q = _layer_norm(x, ln1_g_ref[...], ln1_b_ref[...])
    x = x + _attention(h_q, kv1_ref, wq1_ref[...], wo1_ref[...], bo1_ref[...],
                       n_heads=n_heads, d_head=d_head)

    # --- GEGLU feed-forward + residual (value/gate projections fused) ---
    h = _layer_norm(x, ln2_g_ref[...], ln2_b_ref[...])
    vg = jnp.dot(h.astype(jnp.bfloat16), wff1_ref[...],
                 preferred_element_type=jnp.float32) + bff1_ref[...]  # (TQ, 8D)
    hidden = vg[:, :d_ff] * _gelu_exact(vg[:, d_ff:])                 # f32
    ff = jnp.dot(hidden.astype(jnp.bfloat16), wff2_ref[...],
                 preferred_element_type=jnp.float32) + bff2_ref[...]
    x = x + ff

    o_ref[...] = x.astype(o_ref.dtype)


# ------------------------------- wrapper -----------------------------------

def basic_transformer_block(x, context, params, *, n_heads, d_head, q_tile=None):
    B, S, D = x.shape
    _, Sc, Dc = context.shape
    hd = n_heads * d_head
    d_ff = params["wff2"].shape[0]          # 4 * d_model

    if q_tile is None:
        q_tile = S if S <= 128 else 128
    assert S % q_tile == 0 and (q_tile % 8 == 0 or q_tile == S)
    n_q = S // q_tile

    f32, bf16 = jnp.float32, jnp.bfloat16

    # Pre-fuse / pre-cast weights on the host: K|V and FFN value|gate are
    # concatenated so each projection is one lane-dense bf16 matmul.
    weights = [
        params["ln0_g"].astype(f32), params["ln0_b"].astype(f32),
        params["wq0"].astype(bf16),
        jnp.concatenate([params["wk0"], params["wv0"]], axis=1).astype(bf16),
        params["wo0"].astype(bf16), params["bo0"].astype(f32),
        params["ln1_g"].astype(f32), params["ln1_b"].astype(f32),
        params["wq1"].astype(bf16),
        jnp.concatenate([params["wk1"], params["wv1"]], axis=1).astype(bf16),
        params["wo1"].astype(bf16), params["bo1"].astype(f32),
        params["ln2_g"].astype(f32), params["ln2_b"].astype(f32),
        jnp.concatenate([params["wffv"], params["wffg"]], axis=1).astype(bf16),
        jnp.concatenate([params["bffv"], params["bffg"]], axis=1).astype(f32),
        params["wff2"].astype(bf16), params["bff2"].astype(f32),
    ]
    assert params["wq0"].shape[1] == hd

    def _const_spec(w):
        # Whole-array block, constant index map -> resident weight in VMEM
        # (fetched once; not re-DMA'd between grid steps).
        return pl.BlockSpec(w.shape, lambda b, qi: (0,) * w.ndim)

    in_specs = [
        # full sequence of x: query tiles are sliced from it in-kernel and it
        # feeds the self-attention K/V cache at qi == 0
        pl.BlockSpec((None, S, D), lambda b, qi: (b, 0, 0)),
        # conditioning context (cross-attention K/V source)
        pl.BlockSpec((None, Sc, Dc), lambda b, qi: (b, 0, 0)),
    ] + [_const_spec(w) for w in weights]

    kernel = functools.partial(_block_kernel, n_heads=n_heads, d_head=d_head,
                               d_ff=d_ff, q_tile=q_tile)

    return pl.pallas_call(
        kernel,
        out_shape=jax.ShapeDtypeStruct((B, S, D), x.dtype),
        grid_spec=pltpu.PrefetchScalarGridSpec(
            num_scalar_prefetch=0,
            grid=(B, n_q),
            in_specs=in_specs,
            out_specs=pl.BlockSpec((None, q_tile, D), lambda b, qi: (b, qi, 0)),
            scratch_shapes=[
                pltpu.VMEM((S, 2 * hd), bf16),    # self-attn K|V cache
                pltpu.VMEM((Sc, 2 * hd), bf16),   # cross-attn K|V cache
            ]),
        compiler_params=pltpu.CompilerParams(
            # batch axis megacore-parallel; query-tile axis carries the
            # per-batch K/V caches, so it must be sequential ("arbitrary").
            dimension_semantics=("parallel", "arbitrary"),
            vmem_limit_bytes=48 * 1024 * 1024),
    )(x, context, *weights)


# --------------------------- params & reference -----------------------------

def init_params(key, d_model, n_heads, d_head, d_cond):
    d_inner = n_heads * d_head
    d_ff = 4 * d_model
    ks = jax.random.split(key, 11)

    def w(k, shape):
        return jax.random.normal(k, shape, jnp.float32) / math.sqrt(shape[0])

    return dict(
        ln0_g=jnp.ones((1, d_model), jnp.float32),
        ln0_b=jnp.zeros((1, d_model), jnp.float32),
        wq0=w(ks[0], (d_model, d_inner)),
        wk0=w(ks[1], (d_model, d_inner)),
        wv0=w(ks[2], (d_model, d_inner)),
        wo0=w(ks[3], (d_inner, d_model)),
        bo0=jnp.zeros((1, d_model), jnp.float32),
        ln1_g=jnp.ones((1, d_model), jnp.float32),
        ln1_b=jnp.zeros((1, d_model), jnp.float32),
        wq1=w(ks[4], (d_model, d_inner)),
        wk1=w(ks[5], (d_cond, d_inner)),
        wv1=w(ks[6], (d_cond, d_inner)),
        wo1=w(ks[7], (d_inner, d_model)),
        bo1=jnp.zeros((1, d_model), jnp.float32),
        ln2_g=jnp.ones((1, d_model), jnp.float32),
        ln2_b=jnp.zeros((1, d_model), jnp.float32),
        wffv=w(ks[8], (d_model, d_ff)),
        bffv=jnp.zeros((1, d_ff), jnp.float32),
        wffg=w(ks[9], (d_model, d_ff)),
        bffg=jnp.zeros((1, d_ff), jnp.float32),
        wff2=w(ks[10], (d_ff, d_model)),
        bff2=jnp.zeros((1, d_model), jnp.float32),
    )


def reference_block(x, context, params, *, n_heads, d_head):
    """Pure-JAX reference mirroring the kernel's mixed precision (bf16 matmul
    operands, f32 accumulation / softmax / LN / residuals), so the comparison
    isolates kernel correctness from expected bf16 rounding."""
    bf16, f32 = jnp.bfloat16, jnp.float32

    def mm(a, w):  # (B, S, K) @ (K, N) with bf16 operands, f32 accumulate
        return jnp.einsum("bsk,kn->bsn", a.astype(bf16), w.astype(bf16),
                          preferred_element_type=f32)

    def ln(h, g, b):
        m = h.mean(-1, keepdims=True)
        v = ((h - m) ** 2).mean(-1, keepdims=True)
        return (h - m) / jnp.sqrt(v + LN_EPS) * g + b

    def attn(h, c, wq, wk, wv, wo, bo):
        B, S, _ = h.shape
        Sc = c.shape[1]
        q = mm(h, wq).reshape(B, S, n_heads, d_head)
        k = mm(c, wk).reshape(B, Sc, n_heads, d_head)
        v = mm(c, wv).reshape(B, Sc, n_heads, d_head)
        s = jnp.einsum("bqhd,bkhd->bhqk", q.astype(bf16), k.astype(bf16),
                       preferred_element_type=f32) / math.sqrt(d_head)
        p = jax.nn.softmax(s, axis=-1)
        o = jnp.einsum("bhqk,bkhd->bqhd", p.astype(bf16), v.astype(bf16),
                       preferred_element_type=f32).reshape(B, S, n_heads * d_head)
        return mm(o, wo) + bo

    x = x + attn(ln(x, params["ln0_g"], params["ln0_b"]),
                 ln(x, params["ln0_g"], params["ln0_b"]),
                 params["wq0"], params["wk0"], params["wv0"],
                 params["wo0"], params["bo0"])
    x = x + attn(ln(x, params["ln1_g"], params["ln1_b"]), context,
                 params["wq1"], params["wk1"], params["wv1"],
                 params["wo1"], params["bo1"])
    h = ln(x, params["ln2_g"], params["ln2_b"])
    val = mm(h, params["wffv"]) + params["bffv"]
    gate = mm(h, params["wffg"]) + params["bffg"]
    x = x + mm(val * jax.nn.gelu(gate, approximate=False), params["wff2"]) \
          + params["bff2"]
    return x


# --------------------------------- main -------------------------------------

if __name__ == "__main__":
    d_model, n_heads, d_head, d_cond = 32, 4, 8, 16
    B, S, Sc = 2, 16, 8

    key = jax.random.PRNGKey(0)
    kx, kc, kp = jax.random.split(key, 3)
    x = jax.random.normal(kx, (B, S, d_model), jnp.float32)
    context = jax.random.normal(kc, (B, Sc, d_cond), jnp.float32)
    params = init_params(kp, d_model, n_heads, d_head, d_cond)

    out = basic_transformer_block(x, context, params,
                                  n_heads=n_heads, d_head=d_head, q_tile=8)
    out = jax.block_until_ready(out)

    ref = reference_block(x, context, params, n_heads=n_heads, d_head=d_head)
    assert out.shape == (B, S, d_model)
    err = float(jnp.max(jnp.abs(out - ref)))
    assert jnp.allclose(out, ref, atol=2e-2, rtol=2e-2), f"max err {err}"

    print("KERNEL_OK")
</pallas_src>

<mosaic_0001>
module attributes {stable_mosaic.version = 11 : i64} {
  func.func @_block_kernel(%arg0: i32, %arg1: i32, %arg2: memref<1x16x32xf32, #tpu.memory_space<vmem>>, %arg3: memref<1x8x16xf32, #tpu.memory_space<vmem>>, %arg4: memref<1x32xf32, #tpu.memory_space<vmem>>, %arg5: memref<1x32xf32, #tpu.memory_space<vmem>>, %arg6: memref<32x32xbf16, #tpu.memory_space<vmem>>, %arg7: memref<32x64xbf16, #tpu.memory_space<vmem>>, %arg8: memref<32x32xbf16, #tpu.memory_space<vmem>>, %arg9: memref<1x32xf32, #tpu.memory_space<vmem>>, %arg10: memref<1x32xf32, #tpu.memory_space<vmem>>, %arg11: memref<1x32xf32, #tpu.memory_space<vmem>>, %arg12: memref<32x32xbf16, #tpu.memory_space<vmem>>, %arg13: memref<16x64xbf16, #tpu.memory_space<vmem>>, %arg14: memref<32x32xbf16, #tpu.memory_space<vmem>>, %arg15: memref<1x32xf32, #tpu.memory_space<vmem>>, %arg16: memref<1x32xf32, #tpu.memory_space<vmem>>, %arg17: memref<1x32xf32, #tpu.memory_space<vmem>>, %arg18: memref<32x256xbf16, #tpu.memory_space<vmem>>, %arg19: memref<1x256xf32, #tpu.memory_space<vmem>>, %arg20: memref<128x32xbf16, #tpu.memory_space<vmem>>, %arg21: memref<1x32xf32, #tpu.memory_space<vmem>>, %arg22: memref<1x8x32xf32, #tpu.memory_space<vmem>>, %arg23: memref<16x64xbf16, #tpu.memory_space<vmem>>, %arg24: memref<8x64xbf16, #tpu.memory_space<vmem>>) attributes {dimension_semantics = [#tpu.dimension_semantics<parallel>, #tpu.dimension_semantics<arbitrary>], iteration_bounds = array<i64: 2, 2>, scalar_prefetch = 0 : i64, scratch_operands = 2 : i64, tpu.core_type = #tpu.core_type<tc>, window_params = [{transform_indices = @transform_0, window_bounds = array<i64: 1, 16, 32>}, {transform_indices = @transform_1, window_bounds = array<i64: 1, 8, 16>}, {pipeline_mode = #tpu.pipeline_mode<synchronous>, transform_indices = @transform_2, window_bounds = array<i64: 1, 32>}, {pipeline_mode = #tpu.pipeline_mode<synchronous>, transform_indices = @transform_3, window_bounds = array<i64: 1, 32>}, {pipeline_mode = #tpu.pipeline_mode<synchronous>, transform_indices = @transform_4, window_bounds = array<i64: 32, 32>}, {pipeline_mode = #tpu.pipeline_mode<synchronous>, transform_indices = @transform_5, window_bounds = array<i64: 32, 64>}, {pipeline_mode = #tpu.pipeline_mode<synchronous>, transform_indices = @transform_6, window_bounds = array<i64: 32, 32>}, {pipeline_mode = #tpu.pipeline_mode<synchronous>, transform_indices = @transform_7, window_bounds = array<i64: 1, 32>}, {pipeline_mode = #tpu.pipeline_mode<synchronous>, transform_indices = @transform_8, window_bounds = array<i64: 1, 32>}, {pipeline_mode = #tpu.pipeline_mode<synchronous>, transform_indices = @transform_9, window_bounds = array<i64: 1, 32>}, {pipeline_mode = #tpu.pipeline_mode<synchronous>, transform_indices = @transform_10, window_bounds = array<i64: 32, 32>}, {pipeline_mode = #tpu.pipeline_mode<synchronous>, transform_indices = @transform_11, window_bounds = array<i64: 16, 64>}, {pipeline_mode = #tpu.pipeline_mode<synchronous>, transform_indices = @transform_12, window_bounds = array<i64: 32, 32>}, {pipeline_mode = #tpu.pipeline_mode<synchronous>, transform_indices = @transform_13, window_bounds = array<i64: 1, 32>}, {pipeline_mode = #tpu.pipeline_mode<synchronous>, transform_indices = @transform_14, window_bounds = array<i64: 1, 32>}, {pipeline_mode = #tpu.pipeline_mode<synchronous>, transform_indices = @transform_15, window_bounds = array<i64: 1, 32>}, {pipeline_mode = #tpu.pipeline_mode<synchronous>, transform_indices = @transform_16, window_bounds = array<i64: 32, 256>}, {pipeline_mode = #tpu.pipeline_mode<synchronous>, transform_indices = @transform_17, window_bounds = array<i64: 1, 256>}, {pipeline_mode = #tpu.pipeline_mode<synchronous>, transform_indices = @transform_18, window_bounds = array<i64: 128, 32>}, {pipeline_mode = #tpu.pipeline_mode<synchronous>, transform_indices = @transform_19, window_bounds = array<i64: 1, 32>}, {transform_indices = @transform_20, window_bounds = array<i64: 1, 8, 32>}]} {
    %c0_i32 = arith.constant 0 : i32
    %0 = arith.cmpi eq, %arg1, %c0_i32 : i32
    %1 = arith.extui %0 : i1 to i32
    %c0_i32_0 = arith.constant 0 : i32
    %2 = arith.cmpi ne, %1, %c0_i32_0 : i32
    scf.if %2 {
      %c0_138 = arith.constant 0 : index
      %c0_139 = arith.constant 0 : index
      %c0_140 = arith.constant 0 : index
      %320 = vector.load %arg2[%c0_138, %c0_139, %c0_140] : memref<1x16x32xf32, #tpu.memory_space<vmem>>, vector<1x16x32xf32>
      %321 = vector.shape_cast %320 : vector<1x16x32xf32> to vector<16x32xf32>
      %c0_141 = arith.constant 0 : index
      %c0_142 = arith.constant 0 : index
      %322 = vector.load %arg4[%c0_141, %c0_142] : memref<1x32xf32, #tpu.memory_space<vmem>>, vector<1x32xf32>
      %c0_143 = arith.constant 0 : index
      %c0_144 = arith.constant 0 : index
      %323 = vector.load %arg5[%c0_143, %c0_144] : memref<1x32xf32, #tpu.memory_space<vmem>>, vector<1x32xf32>
      %cst_145 = arith.constant dense<0.000000e+00> : vector<16xf32>
      %324 = vector.multi_reduction <add>, %321, %cst_145 [1] : vector<16x32xf32> to vector<16xf32>
      %325 = vector.shape_cast %324 : vector<16xf32> to vector<16x1xf32>
      %cst_146 = arith.constant 3.200000e+01 : f32
      %326 = vector.broadcast %cst_146 : f32 to vector<16x1xf32>
      %327 = arith.divf %325, %326 : vector<16x1xf32>
      %328 = vector.broadcast %327 : vector<16x1xf32> to vector<16x32xf32>
      %329 = arith.subf %321, %328 : vector<16x32xf32>
      %330 = arith.mulf %329, %329 : vector<16x32xf32>
      %cst_147 = arith.constant dense<0.000000e+00> : vector<16xf32>
      %331 = vector.multi_reduction <add>, %330, %cst_147 [1] : vector<16x32xf32> to vector<16xf32>
      %332 = vector.shape_cast %331 : vector<16xf32> to vector<16x1xf32>
      %cst_148 = arith.constant 3.200000e+01 : f32
      %333 = vector.broadcast %cst_148 : f32 to vector<16x1xf32>
      %334 = arith.divf %332, %333 : vector<16x1xf32>
      %335 = vector.broadcast %327 : vector<16x1xf32> to vector<16x32xf32>
      %336 = arith.subf %321, %335 : vector<16x32xf32>
      %cst_149 = arith.constant 9.99999974E-6 : f32
      %337 = vector.broadcast %cst_149 : f32 to vector<16x1xf32>
      %338 = arith.addf %334, %337 : vector<16x1xf32>
      %339 = math.rsqrt %338 : vector<16x1xf32>
      %340 = vector.broadcast %339 : vector<16x1xf32> to vector<16x32xf32>
      %341 = arith.mulf %336, %340 : vector<16x32xf32>
      %342 = vector.broadcast %322 : vector<1x32xf32> to vector<16x32xf32>
      %343 = arith.mulf %341, %342 : vector<16x32xf32>
      %344 = vector.broadcast %323 : vector<1x32xf32> to vector<16x32xf32>
      %345 = arith.addf %343, %344 : vector<16x32xf32>
      %346 = arith.truncf %345 : vector<16x32xf32> to vector<16x32xbf16>
      %c0_150 = arith.constant 0 : index
      %c0_151 = arith.constant 0 : index
      %347 = vector.load %arg7[%c0_150, %c0_151] : memref<32x64xbf16, #tpu.memory_space<vmem>>, vector<32x64xbf16>
      %cst_152 = arith.constant dense<0.000000e+00> : vector<16x64xf32>
      %348 = tpu.matmul %346, %347, %cst_152 {dimension_numbers = #tpu.dot_dimension_numbers<[1], [0], [0], [1], [0, 0, 1, 1], [], []>} : vector<16x32xbf16>, vector<32x64xbf16>, vector<16x64xf32> -> vector<16x64xf32>
      %349 = arith.truncf %348 : vector<16x64xf32> to vector<16x64xbf16>
      %c0_153 = arith.constant 0 : index
      %c0_154 = arith.constant 0 : index
      %350 = vector.load %arg23[%c0_153, %c0_154] : memref<16x64xbf16, #tpu.memory_space<vmem>>, vector<16x64xbf16>
      tpu.vector_store %arg23[%c0_153, %c0_154], %349 {strides = array<i32>} : memref<16x64xbf16, #tpu.memory_space<vmem>>, vector<16x64xbf16>,
      %c0_155 = arith.constant 0 : index
      %c0_156 = arith.constant 0 : index
      %c0_157 = arith.constant 0 : index
      %351 = vector.load %arg3[%c0_155, %c0_156, %c0_157] : memref<1x8x16xf32, #tpu.memory_space<vmem>>, vector<1x8x16xf32>
      %352 = vector.shape_cast %351 : vector<1x8x16xf32> to vector<8x16xf32>
      %353 = arith.truncf %352 : vector<8x16xf32> to vector<8x16xbf16>
      %c0_158 = arith.constant 0 : index
      %c0_159 = arith.constant 0 : index
      %354 = vector.load %arg13[%c0_158, %c0_159] : memref<16x64xbf16, #tpu.memory_space<vmem>>, vector<16x64xbf16>
      %cst_160 = arith.constant dense<0.000000e+00> : vector<8x64xf32>
      %355 = tpu.matmul %353, %354, %cst_160 {dimension_numbers = #tpu.dot_dimension_numbers<[1], [0], [0], [1], [0, 0, 1, 1], [], []>} : vector<8x16xbf16>, vector<16x64xbf16>, vector<8x64xf32> -> vector<8x64xf32>
      %356 = arith.truncf %355 : vector<8x64xf32> to vector<8x64xbf16>
      %c0_161 = arith.constant 0 : index
      %c0_162 = arith.constant 0 : index
      %357 = vector.load %arg24[%c0_161, %c0_162] : memref<8x64xbf16, #tpu.memory_space<vmem>>, vector<8x64xbf16>
      tpu.vector_store %arg24[%c0_161, %c0_162], %356 {strides = array<i32>} : memref<8x64xbf16, #tpu.memory_space<vmem>>, vector<8x64xbf16>,
    } else {
    }
    %c8_i32 = arith.constant 8 : i32
    %3 = arith.muli %arg1, %c8_i32 : i32
    %4 = tpu.assume_multiple %3, 8 : i32
    %c0 = arith.constant 0 : index
    %5 = arith.index_cast %4 : i32 to index
    %c0_1 = arith.constant 0 : index
    %6 = vector.load %arg2[%c0, %5, %c0_1] : memref<1x16x32xf32, #tpu.memory_space<vmem>>, vector<1x8x32xf32>
    %7 = vector.shape_cast %6 : vector<1x8x32xf32> to vector<8x32xf32>
    %c0_2 = arith.constant 0 : index
    %c0_3 = arith.constant 0 : index
    %8 = vector.load %arg4[%c0_2, %c0_3] : memref<1x32xf32, #tpu.memory_space<vmem>>, vector<1x32xf32>
    %c0_4 = arith.constant 0 : index
    %c0_5 = arith.constant 0 : index
    %9 = vector.load %arg5[%c0_4, %c0_5] : memref<1x32xf32, #tpu.memory_space<vmem>>, vector<1x32xf32>
    %cst = arith.constant dense<0.000000e+00> : vector<8xf32>
    %10 = vector.multi_reduction <add>, %7, %cst [1] : vector<8x32xf32> to vector<8xf32>
    %11 = vector.shape_cast %10 : vector<8xf32> to vector<8x1xf32>
    %cst_6 = arith.constant 3.200000e+01 : f32
    %12 = vector.broadcast %cst_6 : f32 to vector<8x1xf32>
    %13 = arith.divf %11, %12 : vector<8x1xf32>
    %14 = vector.broadcast %13 : vector<8x1xf32> to vector<8x32xf32>
    %15 = arith.subf %7, %14 : vector<8x32xf32>
    %16 = arith.mulf %15, %15 : vector<8x32xf32>
    %cst_7 = arith.constant dense<0.000000e+00> : vector<8xf32>
    %17 = vector.multi_reduction <add>, %16, %cst_7 [1] : vector<8x32xf32> to vector<8xf32>
    %18 = vector.shape_cast %17 : vector<8xf32> to vector<8x1xf32>
    %cst_8 = arith.constant 3.200000e+01 : f32
    %19 = vector.broadcast %cst_8 : f32 to vector<8x1xf32>
    %20 = arith.divf %18, %19 : vector<8x1xf32>
    %21 = vector.broadcast %13 : vector<8x1xf32> to vector<8x32xf32>
    %22 = arith.subf %7, %21 : vector<8x32xf32>
    %cst_9 = arith.constant 9.99999974E-6 : f32
    %23 = vector.broadcast %cst_9 : f32 to vector<8x1xf32>
    %24 = arith.addf %20, %23 : vector<8x1xf32>
    %25 = math.rsqrt %24 : vector<8x1xf32>
    %26 = vector.broadcast %25 : vector<8x1xf32> to vector<8x32xf32>
    %27 = arith.mulf %22, %26 : vector<8x32xf32>
    %28 = vector.broadcast %8 : vector<1x32xf32> to vector<8x32xf32>
    %29 = arith.mulf %27, %28 : vector<8x32xf32>
    %30 = vector.broadcast %9 : vector<1x32xf32> to vector<8x32xf32>
    %31 = arith.addf %29, %30 : vector<8x32xf32>
    %c0_10 = arith.constant 0 : index
    %c0_11 = arith.constant 0 : index
    %32 = vector.load %arg6[%c0_10, %c0_11] : memref<32x32xbf16, #tpu.memory_space<vmem>>, vector<32x32xbf16>
    %c0_12 = arith.constant 0 : index
    %c0_13 = arith.constant 0 : index
    %33 = vector.load %arg8[%c0_12, %c0_13] : memref<32x32xbf16, #tpu.memory_space<vmem>>, vector<32x32xbf16>
    %c0_14 = arith.constant 0 : index
    %c0_15 = arith.constant 0 : index
    %34 = vector.load %arg9[%c0_14, %c0_15] : memref<1x32xf32, #tpu.memory_space<vmem>>, vector<1x32xf32>
    %35 = arith.truncf %31 : vector<8x32xf32> to vector<8x32xbf16>
    %cst_16 = arith.constant dense<0.000000e+00> : vector<8x32xf32>
    %36 = tpu.matmul %35, %32, %cst_16 {dimension_numbers = #tpu.dot_dimension_numbers<[1], [0], [0], [1], [0, 0, 1, 1], [], []>} : vector<8x32xbf16>, vector<32x32xbf16>, vector<8x32xf32> -> vector<8x32xf32>
    %37 = vector.extract_strided_slice %36 {offsets = [0, 0], sizes = [8, 8], strides = [1, 1]} : vector<8x32xf32> to vector<8x8xf32>
    %38 = arith.truncf %37 : vector<8x8xf32> to vector<8x8xbf16>
    %c0_17 = arith.constant 0 : index
    %c0_18 = arith.constant 0 : index
    %39 = vector.load %arg23[%c0_17, %c0_18] : memref<16x64xbf16, #tpu.memory_space<vmem>>, vector<16x8xbf16>
    %c0_19 = arith.constant 0 : index
    %c32 = arith.constant 32 : index
    %40 = vector.load %arg23[%c0_19, %c32] : memref<16x64xbf16, #tpu.memory_space<vmem>>, vector<16x8xbf16>
    %cst_20 = arith.constant dense<0.000000e+00> : vector<8x16xf32>
    %41 = tpu.matmul %38, %39, %cst_20 {dimension_numbers = #tpu.dot_dimension_numbers<[1], [1], [0], [0], [0, 0, 1, 0], [], []>} : vector<8x8xbf16>, vector<16x8xbf16>, vector<8x16xf32> -> vector<8x16xf32>
    %cst_21 = arith.constant 0.353553385 : f32
    %42 = vector.broadcast %cst_21 : f32 to vector<8x16xf32>
    %43 = arith.mulf %41, %42 : vector<8x16xf32>
    %cst_22 = arith.constant dense<0xFF800000> : vector<8xf32>
    %44 = vector.multi_reduction <maximumf>, %43, %cst_22 [1] : vector<8x16xf32> to vector<8xf32>
    %45 = vector.shape_cast %44 : vector<8xf32> to vector<8x1xf32>
    %46 = vector.broadcast %45 : vector<8x1xf32> to vector<8x16xf32>
    %47 = arith.subf %43, %46 : vector<8x16xf32>
    %48 = math.exp %47 : vector<8x16xf32>
    %cst_23 = arith.constant dense<0.000000e+00> : vector<8xf32>
    %49 = vector.multi_reduction <add>, %48, %cst_23 [1] : vector<8x16xf32> to vector<8xf32>
    %50 = vector.shape_cast %49 : vector<8xf32> to vector<8x1xf32>
    %51 = tpu.reciprocal %50 {approx = true} : vector<8x1xf32> -> vector<8x1xf32>
    %52 = vector.broadcast %51 : vector<8x1xf32> to vector<8x16xf32>
    %53 = arith.mulf %48, %52 : vector<8x16xf32>
    %54 = arith.truncf %53 : vector<8x16xf32> to vector<8x16xbf16>
    %cst_24 = arith.constant dense<0.000000e+00> : vector<8x8xf32>
    %55 = tpu.matmul %54, %40, %cst_24 {dimension_numbers = #tpu.dot_dimension_numbers<[1], [0], [0], [1], [0, 0, 1, 1], [], []>} : vector<8x16xbf16>, vector<16x8xbf16>, vector<8x8xf32> -> vector<8x8xf32>
    %56 = arith.truncf %55 : vector<8x8xf32> to vector<8x8xbf16>
    %57 = vector.extract_strided_slice %36 {offsets = [0, 8], sizes = [8, 8], strides = [1, 1]} : vector<8x32xf32> to vector<8x8xf32>
    %58 = arith.truncf %57 : vector<8x8xf32> to vector<8x8xbf16>
    %c0_25 = arith.constant 0 : index
    %c8 = arith.constant 8 : index
    %59 = vector.load %arg23[%c0_25, %c8] : memref<16x64xbf16, #tpu.memory_space<vmem>>, vector<16x8xbf16>
    %c0_26 = arith.constant 0 : index
    %c40 = arith.constant 40 : index
    %60 = vector.load %arg23[%c0_26, %c40] : memref<16x64xbf16, #tpu.memory_space<vmem>>, vector<16x8xbf16>
    %cst_27 = arith.constant dense<0.000000e+00> : vector<8x16xf32>
    %61 = tpu.matmul %58, %59, %cst_27 {dimension_numbers = #tpu.dot_dimension_numbers<[1], [1], [0], [0], [0, 0, 1, 0], [], []>} : vector<8x8xbf16>, vector<16x8xbf16>, vector<8x16xf32> -> vector<8x16xf32>
    %cst_28 = arith.constant 0.353553385 : f32
    %62 = vector.broadcast %cst_28 : f32 to vector<8x16xf32>
    %63 = arith.mulf %61, %62 : vector<8x16xf32>
    %cst_29 = arith.constant dense<0xFF800000> : vector<8xf32>
    %64 = vector.multi_reduction <maximumf>, %63, %cst_29 [1] : vector<8x16xf32> to vector<8xf32>
    %65 = vector.shape_cast %64 : vector<8xf32> to vector<8x1xf32>
    %66 = vector.broadcast %65 : vector<8x1xf32> to vector<8x16xf32>
    %67 = arith.subf %63, %66 : vector<8x16xf32>
    %68 = math.exp %67 : vector<8x16xf32>
    %cst_30 = arith.constant dense<0.000000e+00> : vector<8xf32>
    %69 = vector.multi_reduction <add>, %68, %cst_30 [1] : vector<8x16xf32> to vector<8xf32>
    %70 = vector.shape_cast %69 : vector<8xf32> to vector<8x1xf32>
    %71 = tpu.reciprocal %70 {approx = true} : vector<8x1xf32> -> vector<8x1xf32>
    %72 = vector.broadcast %71 : vector<8x1xf32> to vector<8x16xf32>
    %73 = arith.mulf %68, %72 : vector<8x16xf32>
    %74 = arith.truncf %73 : vector<8x16xf32> to vector<8x16xbf16>
    %cst_31 = arith.constant dense<0.000000e+00> : vector<8x8xf32>
    %75 = tpu.matmul %74, %60, %cst_31 {dimension_numbers = #tpu.dot_dimension_numbers<[1], [0], [0], [1], [0, 0, 1, 1], [], []>} : vector<8x16xbf16>, vector<16x8xbf16>, vector<8x8xf32> -> vector<8x8xf32>
    %76 = arith.truncf %75 : vector<8x8xf32> to vector<8x8xbf16>
    %77 = vector.extract_strided_slice %36 {offsets = [0, 16], sizes = [8, 8], strides = [1, 1]} : vector<8x32xf32> to vector<8x8xf32>
    %78 = arith.truncf %77 : vector<8x8xf32> to vector<8x8xbf16>
    %c0_32 = arith.constant 0 : index
    %c16 = arith.constant 16 : index
    %79 = vector.load %arg23[%c0_32, %c16] : memref<16x64xbf16, #tpu.memory_space<vmem>>, vector<16x8xbf16>
    %c0_33 = arith.constant 0 : index
    %c48 = arith.constant 48 : index
    %80 = vector.load %arg23[%c0_33, %c48] : memref<16x64xbf16, #tpu.memory_space<vmem>>, vector<16x8xbf16>
    %cst_34 = arith.constant dense<0.000000e+00> : vector<8x16xf32>
    %81 = tpu.matmul %78, %79, %cst_34 {dimension_numbers = #tpu.dot_dimension_numbers<[1], [1], [0], [0], [0, 0, 1, 0], [], []>} : vector<8x8xbf16>, vector<16x8xbf16>, vector<8x16xf32> -> vector<8x16xf32>
    %cst_35 = arith.constant 0.353553385 : f32
    %82 = vector.broadcast %cst_35 : f32 to vector<8x16xf32>
    %83 = arith.mulf %81, %82 : vector<8x16xf32>
    %cst_36 = arith.constant dense<0xFF800000> : vector<8xf32>
    %84 = vector.multi_reduction <maximumf>, %83, %cst_36 [1] : vector<8x16xf32> to vector<8xf32>
    %85 = vector.shape_cast %84 : vector<8xf32> to vector<8x1xf32>
    %86 = vector.broadcast %85 : vector<8x1xf32> to vector<8x16xf32>
    %87 = arith.subf %83, %86 : vector<8x16xf32>
    %88 = math.exp %87 : vector<8x16xf32>
    %cst_37 = arith.constant dense<0.000000e+00> : vector<8xf32>
    %89 = vector.multi_reduction <add>, %88, %cst_37 [1] : vector<8x16xf32> to vector<8xf32>
    %90 = vector.shape_cast %89 : vector<8xf32> to vector<8x1xf32>
    %91 = tpu.reciprocal %90 {approx = true} : vector<8x1xf32> -> vector<8x1xf32>
    %92 = vector.broadcast %91 : vector<8x1xf32> to vector<8x16xf32>
    %93 = arith.mulf %88, %92 : vector<8x16xf32>
    %94 = arith.truncf %93 : vector<8x16xf32> to vector<8x16xbf16>
    %cst_38 = arith.constant dense<0.000000e+00> : vector<8x8xf32>
    %95 = tpu.matmul %94, %80, %cst_38 {dimension_numbers = #tpu.dot_dimension_numbers<[1], [0], [0], [1], [0, 0, 1, 1], [], []>} : vector<8x16xbf16>, vector<16x8xbf16>, vector<8x8xf32> -> vector<8x8xf32>
    %96 = arith.truncf %95 : vector<8x8xf32> to vector<8x8xbf16>
    %97 = vector.extract_strided_slice %36 {offsets = [0, 24], sizes = [8, 8], strides = [1, 1]} : vector<8x32xf32> to vector<8x8xf32>
    %98 = arith.truncf %97 : vector<8x8xf32> to vector<8x8xbf16>
    %c0_39 = arith.constant 0 : index
    %c24 = arith.constant 24 : index
    %99 = vector.load %arg23[%c0_39, %c24] : memref<16x64xbf16, #tpu.memory_space<vmem>>, vector<16x8xbf16>
    %c0_40 = arith.constant 0 : index
    %c56 = arith.constant 56 : index
    %100 = vector.load %arg23[%c0_40, %c56] : memref<16x64xbf16, #tpu.memory_space<vmem>>, vector<16x8xbf16>
    %cst_41 = arith.constant dense<0.000000e+00> : vector<8x16xf32>
    %101 = tpu.matmul %98, %99, %cst_41 {dimension_numbers = #tpu.dot_dimension_numbers<[1], [1], [0], [0], [0, 0, 1, 0], [], []>} : vector<8x8xbf16>, vector<16x8xbf16>, vector<8x16xf32> -> vector<8x16xf32>
    %cst_42 = arith.constant 0.353553385 : f32
    %102 = vector.broadcast %cst_42 : f32 to vector<8x16xf32>
    %103 = arith.mulf %101, %102 : vector<8x16xf32>
    %cst_43 = arith.constant dense<0xFF800000> : vector<8xf32>
    %104 = vector.multi_reduction <maximumf>, %103, %cst_43 [1] : vector<8x16xf32> to vector<8xf32>
    %105 = vector.shape_cast %104 : vector<8xf32> to vector<8x1xf32>
    %106 = vector.broadcast %105 : vector<8x1xf32> to vector<8x16xf32>
    %107 = arith.subf %103, %106 : vector<8x16xf32>
    %108 = math.exp %107 : vector<8x16xf32>
    %cst_44 = arith.constant dense<0.000000e+00> : vector<8xf32>
    %109 = vector.multi_reduction <add>, %108, %cst_44 [1] : vector<8x16xf32> to vector<8xf32>
    %110 = vector.shape_cast %109 : vector<8xf32> to vector<8x1xf32>
    %111 = tpu.reciprocal %110 {approx = true} : vector<8x1xf32> -> vector<8x1xf32>
    %112 = vector.broadcast %111 : vector<8x1xf32> to vector<8x16xf32>
    %113 = arith.mulf %108, %112 : vector<8x16xf32>
    %114 = arith.truncf %113 : vector<8x16xf32> to vector<8x16xbf16>
    %cst_45 = arith.constant dense<0.000000e+00> : vector<8x8xf32>
    %115 = tpu.matmul %114, %100, %cst_45 {dimension_numbers = #tpu.dot_dimension_numbers<[1], [0], [0], [1], [0, 0, 1, 1], [], []>} : vector<8x16xbf16>, vector<16x8xbf16>, vector<8x8xf32> -> vector<8x8xf32>
    %116 = arith.truncf %115 : vector<8x8xf32> to vector<8x8xbf16>
    %117 = tpu.concatenate %56, %76, %96, %116 in 1 : vector<8x8xbf16>, vector<8x8xbf16>, vector<8x8xbf16>, vector<8x8xbf16> -> vector<8x32xbf16>
    %cst_46 = arith.constant dense<0.000000e+00> : vector<8x32xf32>
    %118 = tpu.matmul %117, %33, %cst_46 {dimension_numbers = #tpu.dot_dimension_numbers<[1], [0], [0], [1], [0, 0, 1, 1], [], []>} : vector<8x32xbf16>, vector<32x32xbf16>, vector<8x32xf32> -> vector<8x32xf32>
    %119 = vector.broadcast %34 : vector<1x32xf32> to vector<8x32xf32>
    %120 = arith.addf %118, %119 : vector<8x32xf32>
    %121 = arith.addf %7, %120 : vector<8x32xf32>
    %c0_47 = arith.constant 0 : index
    %c0_48 = arith.constant 0 : index
    %122 = vector.load %arg10[%c0_47, %c0_48] : memref<1x32xf32, #tpu.memory_space<vmem>>, vector<1x32xf32>
    %c0_49 = arith.constant 0 : index
    %c0_50 = arith.constant 0 : index
    %123 = vector.load %arg11[%c0_49, %c0_50] : memref<1x32xf32, #tpu.memory_space<vmem>>, vector<1x32xf32>
    %cst_51 = arith.constant dense<0.000000e+00> : vector<8xf32>
    %124 = vector.multi_reduction <add>, %121, %cst_51 [1] : vector<8x32xf32> to vector<8xf32>
    %125 = vector.shape_cast %124 : vector<8xf32> to vector<8x1xf32>
    %cst_52 = arith.constant 3.200000e+01 : f32
    %126 = vector.broadcast %cst_52 : f32 to vector<8x1xf32>
    %127 = arith.divf %125, %126 : vector<8x1xf32>
    %128 = vector.broadcast %127 : vector<8x1xf32> to vector<8x32xf32>
    %129 = arith.subf %121, %128 : vector<8x32xf32>
    %130 = arith.mulf %129, %129 : vector<8x32xf32>
    %cst_53 = arith.constant dense<0.000000e+00> : vector<8xf32>
    %131 = vector.multi_reduction <add>, %130, %cst_53 [1] : vector<8x32xf32> to vector<8xf32>
    %132 = vector.shape_cast %131 : vector<8xf32> to vector<8x1xf32>
    %cst_54 = arith.constant 3.200000e+01 : f32
    %133 = vector.broadcast %cst_54 : f32 to vector<8x1xf32>
    %134 = arith.divf %132, %133 : vector<8x1xf32>
    %135 = vector.broadcast %127 : vector<8x1xf32> to vector<8x32xf32>
    %136 = arith.subf %121, %135 : vector<8x32xf32>
    %cst_55 = arith.constant 9.99999974E-6 : f32
    %137 = vector.broadcast %cst_55 : f32 to vector<8x1xf32>
    %138 = arith.addf %134, %137 : vector<8x1xf32>
    %139 = math.rsqrt %138 : vector<8x1xf32>
    %140 = vector.broadcast %139 : vector<8x1xf32> to vector<8x32xf32>
    %141 = arith.mulf %136, %140 : vector<8x32xf32>
    %142 = vector.broadcast %122 : vector<1x32xf32> to vector<8x32xf32>
    %143 = arith.mulf %141, %142 : vector<8x32xf32>
    %144 = vector.broadcast %123 : vector<1x32xf32> to vector<8x32xf32>
    %145 = arith.addf %143, %144 : vector<8x32xf32>
    %c0_56 = arith.constant 0 : index
    %c0_57 = arith.constant 0 : index
    %146 = vector.load %arg12[%c0_56, %c0_57] : memref<32x32xbf16, #tpu.memory_space<vmem>>, vector<32x32xbf16>
    %c0_58 = arith.constant 0 : index
    %c0_59 = arith.constant 0 : index
    %147 = vector.load %arg14[%c0_58, %c0_59] : memref<32x32xbf16, #tpu.memory_space<vmem>>, vector<32x32xbf16>
    %c0_60 = arith.constant 0 : index
    %c0_61 = arith.constant 0 : index
    %148 = vector.load %arg15[%c0_60, %c0_61] : memref<1x32xf32, #tpu.memory_space<vmem>>, vector<1x32xf32>
    %149 = arith.truncf %145 : vector<8x32xf32> to vector<8x32xbf16>
    %cst_62 = arith.constant dense<0.000000e+00> : vector<8x32xf32>
    %150 = tpu.matmul %149, %146, %cst_62 {dimension_numbers = #tpu.dot_dimension_numbers<[1], [0], [0], [1], [0, 0, 1, 1], [], []>} : vector<8x32xbf16>, vector<32x32xbf16>, vector<8x32xf32> -> vector<8x32xf32>
    %151 = vector.extract_strided_slice %150 {offsets = [0, 0], sizes = [8, 8], strides = [1, 1]} : vector<8x32xf32> to vector<8x8xf32>
    %152 = arith.truncf %151 : vector<8x8xf32> to vector<8x8xbf16>
    %c0_63 = arith.constant 0 : index
    %c0_64 = arith.constant 0 : index
    %153 = vector.load %arg24[%c0_63, %c0_64] : memref<8x64xbf16, #tpu.memory_space<vmem>>, vector<8x8xbf16>
    %c0_65 = arith.constant 0 : index
    %c32_66 = arith.constant 32 : index
    %154 = vector.load %arg24[%c0_65, %c32_66] : memref<8x64xbf16, #tpu.memory_space<vmem>>, vector<8x8xbf16>
    %cst_67 = arith.constant dense<0.000000e+00> : vector<8x8xf32>
    %155 = tpu.matmul %152, %153, %cst_67 {dimension_numbers = #tpu.dot_dimension_numbers<[1], [1], [0], [0], [0, 0, 1, 0], [], []>} : vector<8x8xbf16>, vector<8x8xbf16>, vector<8x8xf32> -> vector<8x8xf32>
    %cst_68 = arith.constant 0.353553385 : f32
    %156 = vector.broadcast %cst_68 : f32 to vector<8x8xf32>
    %157 = arith.mulf %155, %156 : vector<8x8xf32>
    %cst_69 = arith.constant dense<0xFF800000> : vector<8xf32>
    %158 = vector.multi_reduction <maximumf>, %157, %cst_69 [1] : vector<8x8xf32> to vector<8xf32>
    %159 = vector.shape_cast %158 : vector<8xf32> to vector<8x1xf32>
    %160 = vector.broadcast %159 : vector<8x1xf32> to vector<8x8xf32>
    %161 = arith.subf %157, %160 : vector<8x8xf32>
    %162 = math.exp %161 : vector<8x8xf32>
    %cst_70 = arith.constant dense<0.000000e+00> : vector<8xf32>
    %163 = vector.multi_reduction <add>, %162, %cst_70 [1] : vector<8x8xf32> to vector<8xf32>
    %164 = vector.shape_cast %163 : vector<8xf32> to vector<8x1xf32>
    %165 = tpu.reciprocal %164 {approx = true} : vector<8x1xf32> -> vector<8x1xf32>
    %166 = vector.broadcast %165 : vector<8x1xf32> to vector<8x8xf32>
    %167 = arith.mulf %162, %166 : vector<8x8xf32>
    %168 = arith.truncf %167 : vector<8x8xf32> to vector<8x8xbf16>
    %cst_71 = arith.constant dense<0.000000e+00> : vector<8x8xf32>
    %169 = tpu.matmul %168, %154, %cst_71 {dimension_numbers = #tpu.dot_dimension_numbers<[1], [0], [0], [1], [0, 0, 1, 1], [], []>} : vector<8x8xbf16>, vector<8x8xbf16>, vector<8x8xf32> -> vector<8x8xf32>
    %170 = arith.truncf %169 : vector<8x8xf32> to vector<8x8xbf16>
    %171 = vector.extract_strided_slice %150 {offsets = [0, 8], sizes = [8, 8], strides = [1, 1]} : vector<8x32xf32> to vector<8x8xf32>
    %172 = arith.truncf %171 : vector<8x8xf32> to vector<8x8xbf16>
    %c0_72 = arith.constant 0 : index
    %c8_73 = arith.constant 8 : index
    %173 = vector.load %arg24[%c0_72, %c8_73] : memref<8x64xbf16, #tpu.memory_space<vmem>>, vector<8x8xbf16>
    %c0_74 = arith.constant 0 : index
    %c40_75 = arith.constant 40 : index
    %174 = vector.load %arg24[%c0_74, %c40_75] : memref<8x64xbf16, #tpu.memory_space<vmem>>, vector<8x8xbf16>
    %cst_76 = arith.constant dense<0.000000e+00> : vector<8x8xf32>
    %175 = tpu.matmul %172, %173, %cst_76 {dimension_numbers = #tpu.dot_dimension_numbers<[1], [1], [0], [0], [0, 0, 1, 0], [], []>} : vector<8x8xbf16>, vector<8x8xbf16>, vector<8x8xf32> -> vector<8x8xf32>
    %cst_77 = arith.constant 0.353553385 : f32
    %176 = vector.broadcast %cst_77 : f32 to vector<8x8xf32>
    %177 = arith.mulf %175, %176 : vector<8x8xf32>
    %cst_78 = arith.constant dense<0xFF800000> : vector<8xf32>
    %178 = vector.multi_reduction <maximumf>, %177, %cst_78 [1] : vector<8x8xf32> to vector<8xf32>
    %179 = vector.shape_cast %178 : vector<8xf32> to vector<8x1xf32>
    %180 = vector.broadcast %179 : vector<8x1xf32> to vector<8x8xf32>
    %181 = arith.subf %177, %180 : vector<8x8xf32>
    %182 = math.exp %181 : vector<8x8xf32>
    %cst_79 = arith.constant dense<0.000000e+00> : vector<8xf32>
    %183 = vector.multi_reduction <add>, %182, %cst_79 [1] : vector<8x8xf32> to vector<8xf32>
    %184 = vector.shape_cast %183 : vector<8xf32> to vector<8x1xf32>
    %185 = tpu.reciprocal %184 {approx = true} : vector<8x1xf32> -> vector<8x1xf32>
    %186 = vector.broadcast %185 : vector<8x1xf32> to vector<8x8xf32>
    %187 = arith.mulf %182, %186 : vector<8x8xf32>
    %188 = arith.truncf %187 : vector<8x8xf32> to vector<8x8xbf16>
    %cst_80 = arith.constant dense<0.000000e+00> : vector<8x8xf32>
    %189 = tpu.matmul %188, %174, %cst_80 {dimension_numbers = #tpu.dot_dimension_numbers<[1], [0], [0], [1], [0, 0, 1, 1], [], []>} : vector<8x8xbf16>, vector<8x8xbf16>, vector<8x8xf32> -> vector<8x8xf32>
    %190 = arith.truncf %189 : vector<8x8xf32> to vector<8x8xbf16>
    %191 = vector.extract_strided_slice %150 {offsets = [0, 16], sizes = [8, 8], strides = [1, 1]} : vector<8x32xf32> to vector<8x8xf32>
    %192 = arith.truncf %191 : vector<8x8xf32> to vector<8x8xbf16>
    %c0_81 = arith.constant 0 : index
    %c16_82 = arith.constant 16 : index
    %193 = vector.load %arg24[%c0_81, %c16_82] : memref<8x64xbf16, #tpu.memory_space<vmem>>, vector<8x8xbf16>
    %c0_83 = arith.constant 0 : index
    %c48_84 = arith.constant 48 : index
    %194 = vector.load %arg24[%c0_83, %c48_84] : memref<8x64xbf16, #tpu.memory_space<vmem>>, vector<8x8xbf16>
    %cst_85 = arith.constant dense<0.000000e+00> : vector<8x8xf32>
    %195 = tpu.matmul %192, %193, %cst_85 {dimension_numbers = #tpu.dot_dimension_numbers<[1], [1], [0], [0], [0, 0, 1, 0], [], []>} : vector<8x8xbf16>, vector<8x8xbf16>, vector<8x8xf32> -> vector<8x8xf32>
    %cst_86 = arith.constant 0.353553385 : f32
    %196 = vector.broadcast %cst_86 : f32 to vector<8x8xf32>
    %197 = arith.mulf %195, %196 : vector<8x8xf32>
    %cst_87 = arith.constant dense<0xFF800000> : vector<8xf32>
    %198 = vector.multi_reduction <maximumf>, %197, %cst_87 [1] : vector<8x8xf32> to vector<8xf32>
    %199 = vector.shape_cast %198 : vector<8xf32> to vector<8x1xf32>
    %200 = vector.broadcast %199 : vector<8x1xf32> to vector<8x8xf32>
    %201 = arith.subf %197, %200 : vector<8x8xf32>
    %202 = math.exp %201 : vector<8x8xf32>
    %cst_88 = arith.constant dense<0.000000e+00> : vector<8xf32>
    %203 = vector.multi_reduction <add>, %202, %cst_88 [1] : vector<8x8xf32> to vector<8xf32>
    %204 = vector.shape_cast %203 : vector<8xf32> to vector<8x1xf32>
    %205 = tpu.reciprocal %204 {approx = true} : vector<8x1xf32> -> vector<8x1xf32>
    %206 = vector.broadcast %205 : vector<8x1xf32> to vector<8x8xf32>
    %207 = arith.mulf %202, %206 : vector<8x8xf32>
    %208 = arith.truncf %207 : vector<8x8xf32> to vector<8x8xbf16>
    %cst_89 = arith.constant dense<0.000000e+00> : vector<8x8xf32>
    %209 = tpu.matmul %208, %194, %cst_89 {dimension_numbers = #tpu.dot_dimension_numbers<[1], [0], [0], [1], [0, 0, 1, 1], [], []>} : vector<8x8xbf16>, vector<8x8xbf16>, vector<8x8xf32> -> vector<8x8xf32>
    %210 = arith.truncf %209 : vector<8x8xf32> to vector<8x8xbf16>
    %211 = vector.extract_strided_slice %150 {offsets = [0, 24], sizes = [8, 8], strides = [1, 1]} : vector<8x32xf32> to vector<8x8xf32>
    %212 = arith.truncf %211 : vector<8x8xf32> to vector<8x8xbf16>
    %c0_90 = arith.constant 0 : index
    %c24_91 = arith.constant 24 : index
    %213 = vector.load %arg24[%c0_90, %c24_91] : memref<8x64xbf16, #tpu.memory_space<vmem>>, vector<8x8xbf16>
    %c0_92 = arith.constant 0 : index
    %c56_93 = arith.constant 56 : index
    %214 = vector.load %arg24[%c0_92, %c56_93] : memref<8x64xbf16, #tpu.memory_space<vmem>>, vector<8x8xbf16>
    %cst_94 = arith.constant dense<0.000000e+00> : vector<8x8xf32>
    %215 = tpu.matmul %212, %213, %cst_94 {dimension_numbers = #tpu.dot_dimension_numbers<[1], [1], [0], [0], [0, 0, 1, 0], [], []>} : vector<8x8xbf16>, vector<8x8xbf16>, vector<8x8xf32> -> vector<8x8xf32>
    %cst_95 = arith.constant 0.353553385 : f32
    %216 = vector.broadcast %cst_95 : f32 to vector<8x8xf32>
    %217 = arith.mulf %215, %216 : vector<8x8xf32>
    %cst_96 = arith.constant dense<0xFF800000> : vector<8xf32>
    %218 = vector.multi_reduction <maximumf>, %217, %cst_96 [1] : vector<8x8xf32> to vector<8xf32>
    %219 = vector.shape_cast %218 : vector<8xf32> to vector<8x1xf32>
    %220 = vector.broadcast %219 : vector<8x1xf32> to vector<8x8xf32>
    %221 = arith.subf %217, %220 : vector<8x8xf32>
    %222 = math.exp %221 : vector<8x8xf32>
    %cst_97 = arith.constant dense<0.000000e+00> : vector<8xf32>
    %223 = vector.multi_reduction <add>, %222, %cst_97 [1] : vector<8x8xf32> to vector<8xf32>
    %224 = vector.shape_cast %223 : vector<8xf32> to vector<8x1xf32>
    %225 = tpu.reciprocal %224 {approx = true} : vector<8x1xf32> -> vector<8x1xf32>
    %226 = vector.broadcast %225 : vector<8x1xf32> to vector<8x8xf32>
    %227 = arith.mulf %222, %226 : vector<8x8xf32>
    %228 = arith.truncf %227 : vector<8x8xf32> to vector<8x8xbf16>
    %cst_98 = arith.constant dense<0.000000e+00> : vector<8x8xf32>
    %229 = tpu.matmul %228, %214, %cst_98 {dimension_numbers = #tpu.dot_dimension_numbers<[1], [0], [0], [1], [0, 0, 1, 1], [], []>} : vector<8x8xbf16>, vector<8x8xbf16>, vector<8x8xf32> -> vector<8x8xf32>
    %230 = arith.truncf %229 : vector<8x8xf32> to vector<8x8xbf16>
    %231 = tpu.concatenate %170, %190, %210, %230 in 1 : vector<8x8xbf16>, vector<8x8xbf16>, vector<8x8xbf16>, vector<8x8xbf16> -> vector<8x32xbf16>
    %cst_99 = arith.constant dense<0.000000e+00> : vector<8x32xf32>
    %232 = tpu.matmul %231, %147, %cst_99 {dimension_numbers = #tpu.dot_dimension_numbers<[1], [0], [0], [1], [0, 0, 1, 1], [], []>} : vector<8x32xbf16>, vector<32x32xbf16>, vector<8x32xf32> -> vector<8x32xf32>
    %233 = vector.broadcast %148 : vector<1x32xf32> to vector<8x32xf32>
    %234 = arith.addf %232, %233 : vector<8x32xf32>
    %235 = arith.addf %121, %234 : vector<8x32xf32>
    %c0_100 = arith.constant 0 : index
    %c0_101 = arith.constant 0 : index
    %236 = vector.load %arg16[%c0_100, %c0_101] : memref<1x32xf32, #tpu.memory_space<vmem>>, vector<1x32xf32>
    %c0_102 = arith.constant 0 : index
    %c0_103 = arith.constant 0 : index
    %237 = vector.load %arg17[%c0_102, %c0_103] : memref<1x32xf32, #tpu.memory_space<vmem>>, vector<1x32xf32>
    %cst_104 = arith.constant dense<0.000000e+00> : vector<8xf32>
    %238 = vector.multi_reduction <add>, %235, %cst_104 [1] : vector<8x32xf32> to vector<8xf32>
    %239 = vector.shape_cast %238 : vector<8xf32> to vector<8x1xf32>
    %cst_105 = arith.constant 3.200000e+01 : f32
    %240 = vector.broadcast %cst_105 : f32 to vector<8x1xf32>
    %241 = arith.divf %239, %240 : vector<8x1xf32>
    %242 = vector.broadcast %241 : vector<8x1xf32> to vector<8x32xf32>
    %243 = arith.subf %235, %242 : vector<8x32xf32>
    %244 = arith.mulf %243, %243 : vector<8x32xf32>
    %cst_106 = arith.constant dense<0.000000e+00> : vector<8xf32>
    %245 = vector.multi_reduction <add>, %244, %cst_106 [1] : vector<8x32xf32> to vector<8xf32>
    %246 = vector.shape_cast %245 : vector<8xf32> to vector<8x1xf32>
    %cst_107 = arith.constant 3.200000e+01 : f32
    %247 = vector.broadcast %cst_107 : f32 to vector<8x1xf32>
    %248 = arith.divf %246, %247 : vector<8x1xf32>
    %249 = vector.broadcast %241 : vector<8x1xf32> to vector<8x32xf32>
    %250 = arith.subf %235, %249 : vector<8x32xf32>
    %cst_108 = arith.constant 9.99999974E-6 : f32
    %251 = vector.broadcast %cst_108 : f32 to vector<8x1xf32>
    %252 = arith.addf %248, %251 : vector<8x1xf32>
    %253 = math.rsqrt %252 : vector<8x1xf32>
    %254 = vector.broadcast %253 : vector<8x1xf32> to vector<8x32xf32>
    %255 = arith.mulf %250, %254 : vector<8x32xf32>
    %256 = vector.broadcast %236 : vector<1x32xf32> to vector<8x32xf32>
    %257 = arith.mulf %255, %256 : vector<8x32xf32>
    %258 = vector.broadcast %237 : vector<1x32xf32> to vector<8x32xf32>
    %259 = arith.addf %257, %258 : vector<8x32xf32>
    %260 = arith.truncf %259 : vector<8x32xf32> to vector<8x32xbf16>
    %c0_109 = arith.constant 0 : index
    %c0_110 = arith.constant 0 : index
    %261 = vector.load %arg18[%c0_109, %c0_110] : memref<32x256xbf16, #tpu.memory_space<vmem>>, vector<32x256xbf16>
    %cst_111 = arith.constant dense<0.000000e+00> : vector<8x256xf32>
    %262 = tpu.matmul %260, %261, %cst_111 {dimension_numbers = #tpu.dot_dimension_numbers<[1], [0], [0], [1], [0, 0, 1, 1], [], []>} : vector<8x32xbf16>, vector<32x256xbf16>, vector<8x256xf32> -> vector<8x256xf32>
    %c0_112 = arith.constant 0 : index
    %c0_113 = arith.constant 0 : index
    %263 = vector.load %arg19[%c0_112, %c0_113] : memref<1x256xf32, #tpu.memory_space<vmem>>, vector<1x256xf32>
    %264 = vector.broadcast %263 : vector<1x256xf32> to vector<8x256xf32>
    %265 = arith.addf %262, %264 : vector<8x256xf32>
    %266 = vector.extract_strided_slice %265 {offsets = [0, 0], sizes = [8, 128], strides = [1, 1]} : vector<8x256xf32> to vector<8x128xf32>
    %267 = vector.extract_strided_slice %265 {offsets = [0, 128], sizes = [8, 128], strides = [1, 1]} : vector<8x256xf32> to vector<8x128xf32>
    %cst_114 = arith.constant 5.000000e-01 : f32
    %268 = vector.broadcast %cst_114 : f32 to vector<8x128xf32>
    %269 = arith.mulf %268, %267 : vector<8x128xf32>
    %cst_115 = arith.constant 0.707106769 : f32
    %270 = vector.broadcast %cst_115 : f32 to vector<8x128xf32>
    %271 = arith.mulf %267, %270 : vector<8x128xf32>
    %cst_116 = arith.constant 0.000000e+00 : f32
    %272 = vector.broadcast %cst_116 : f32 to vector<8x128xf32>
    %273 = arith.cmpf oge, %271, %272 : vector<8x128xf32>
    %cst_117 = arith.constant 1.000000e+00 : f32
    %cst_118 = arith.constant -1.000000e+00 : f32
    %274 = vector.broadcast %cst_117 : f32 to vector<8x128xf32>
    %275 = vector.broadcast %cst_118 : f32 to vector<8x128xf32>
    %276 = arith.select %273, %274, %275 : vector<8x128xi1>, vector<8x128xf32>
    %277 = math.absf %271 : vector<8x128xf32>
    %cst_119 = arith.constant 0.327591091 : f32
    %278 = vector.broadcast %cst_119 : f32 to vector<8x128xf32>
    %279 = arith.mulf %278, %277 : vector<8x128xf32>
    %cst_120 = arith.constant 1.000000e+00 : f32
    %280 = vector.broadcast %cst_120 : f32 to vector<8x128xf32>
    %281 = arith.addf %280, %279 : vector<8x128xf32>
    %cst_121 = arith.constant 1.000000e+00 : f32
    %282 = vector.broadcast %cst_121 : f32 to vector<8x128xf32>
    %283 = arith.divf %282, %281 : vector<8x128xf32>
    %cst_122 = arith.constant 1.06140542 : f32
    %284 = vector.broadcast %cst_122 : f32 to vector<8x128xf32>
    %285 = arith.mulf %284, %283 : vector<8x128xf32>
    %cst_123 = arith.constant -1.45315206 : f32
    %286 = vector.broadcast %cst_123 : f32 to vector<8x128xf32>
    %287 = arith.addf %285, %286 : vector<8x128xf32>
    %288 = arith.mulf %287, %283 : vector<8x128xf32>
    %cst_124 = arith.constant 1.42141378 : f32
    %289 = vector.broadcast %cst_124 : f32 to vector<8x128xf32>
    %290 = arith.addf %288, %289 : vector<8x128xf32>
    %291 = arith.mulf %290, %283 : vector<8x128xf32>
    %cst_125 = arith.constant -0.284496725 : f32
    %292 = vector.broadcast %cst_125 : f32 to vector<8x128xf32>
    %293 = arith.addf %291, %292 : vector<8x128xf32>
    %294 = arith.mulf %293, %283 : vector<8x128xf32>
    %cst_126 = arith.constant 0.254829586 : f32
    %295 = vector.broadcast %cst_126 : f32 to vector<8x128xf32>
    %296 = arith.addf %294, %295 : vector<8x128xf32>
    %297 = arith.mulf %296, %283 : vector<8x128xf32>
    %cst_127 = arith.constant 0.000000e+00 : f32
    %298 = vector.broadcast %cst_127 : f32 to vector<8x128xf32>
    %299 = arith.subf %298, %277 : vector<8x128xf32>
    %300 = arith.mulf %299, %277 : vector<8x128xf32>
    %301 = math.exp %300 : vector<8x128xf32>
    %302 = arith.mulf %297, %301 : vector<8x128xf32>
    %cst_128 = arith.constant 1.000000e+00 : f32
    %303 = vector.broadcast %cst_128 : f32 to vector<8x128xf32>
    %304 = arith.subf %303, %302 : vector<8x128xf32>
    %305 = arith.mulf %276, %304 : vector<8x128xf32>
    %cst_129 = arith.constant 1.000000e+00 : f32
    %306 = vector.broadcast %cst_129 : f32 to vector<8x128xf32>
    %307 = arith.addf %306, %305 : vector<8x128xf32>
    %308 = arith.mulf %269, %307 : vector<8x128xf32>
    %309 = arith.mulf %266, %308 : vector<8x128xf32>
    %310 = arith.truncf %309 : vector<8x128xf32> to vector<8x128xbf16>
    %c0_130 = arith.constant 0 : index
    %c0_131 = arith.constant 0 : index
    %311 = vector.load %arg20[%c0_130, %c0_131] : memref<128x32xbf16, #tpu.memory_space<vmem>>, vector<128x32xbf16>
    %cst_132 = arith.constant dense<0.000000e+00> : vector<8x32xf32>
    %312 = tpu.matmul %310, %311, %cst_132 {dimension_numbers = #tpu.dot_dimension_numbers<[1], [0], [0], [1], [0, 0, 1, 1], [], []>} : vector<8x128xbf16>, vector<128x32xbf16>, vector<8x32xf32> -> vector<8x32xf32>
    %c0_133 = arith.constant 0 : index
    %c0_134 = arith.constant 0 : index
    %313 = vector.load %arg21[%c0_133, %c0_134] : memref<1x32xf32, #tpu.memory_space<vmem>>, vector<1x32xf32>
    %314 = vector.broadcast %313 : vector<1x32xf32> to vector<8x32xf32>
    %315 = arith.addf %312, %314 : vector<8x32xf32>
    %316 = arith.addf %235, %315 : vector<8x32xf32>
    %c0_135 = arith.constant 0 : index
    %c0_136 = arith.constant 0 : index
    %c0_137 = arith.constant 0 : index
    %317 = vector.load %arg22[%c0_135, %c0_136, %c0_137] : memref<1x8x32xf32, #tpu.memory_space<vmem>>, vector<1x8x32xf32>
    %318 = vector.shape_cast %317 : vector<1x8x32xf32> to vector<8x32xf32>
    %319 = vector.shape_cast %316 : vector<8x32xf32> to vector<1x8x32xf32>
    tpu.vector_store %arg22[%c0_135, %c0_136, %c0_137], %319 {strides = array<i32>} : memref<1x8x32xf32, #tpu.memory_space<vmem>>, vector<1x8x32xf32>,
    return
  }
  func.func @transform_0(%arg0: i32, %arg1: i32) -> (i32, i32, i32) {
    %c0_i32 = arith.constant 0 : i32
    %c0_i32_0 = arith.constant 0 : i32
    %c0_i32_1 = arith.constant 0 : i32
    return %arg0, %c0_i32, %c0_i32_0 : i32, i32, i32
  }
  func.func @transform_1(%arg0: i32, %arg1: i32) -> (i32, i32, i32) {
    %c0_i32 = arith.constant 0 : i32
    %c0_i32_0 = arith.constant 0 : i32
    %c0_i32_1 = arith.constant 0 : i32
    return %arg0, %c0_i32, %c0_i32_0 : i32, i32, i32
  }
  func.func @transform_2(%arg0: i32, %arg1: i32) -> (i32, i32) {
    %c0_i32 = arith.constant 0 : i32
    %c0_i32_0 = arith.constant 0 : i32
    %c0_i32_1 = arith.constant 0 : i32
    return %c0_i32, %c0_i32_0 : i32, i32
  }
  func.func @transform_3(%arg0: i32, %arg1: i32) -> (i32, i32) {
    %c0_i32 = arith.constant 0 : i32
    %c0_i32_0 = arith.constant 0 : i32
    %c0_i32_1 = arith.constant 0 : i32
    return %c0_i32, %c0_i32_0 : i32, i32
  }
  func.func @transform_4(%arg0: i32, %arg1: i32) -> (i32, i32) {
    %c0_i32 = arith.constant 0 : i32
    %c0_i32_0 = arith.constant 0 : i32
    %c0_i32_1 = arith.constant 0 : i32
    return %c0_i32, %c0_i32_0 : i32, i32
  }
  func.func @transform_5(%arg0: i32, %arg1: i32) -> (i32, i32) {
    %c0_i32 = arith.constant 0 : i32
    %c0_i32_0 = arith.constant 0 : i32
    %c0_i32_1 = arith.constant 0 : i32
    return %c0_i32, %c0_i32_0 : i32, i32
  }
  func.func @transform_6(%arg0: i32, %arg1: i32) -> (i32, i32) {
    %c0_i32 = arith.constant 0 : i32
    %c0_i32_0 = arith.constant 0 : i32
    %c0_i32_1 = arith.constant 0 : i32
    return %c0_i32, %c0_i32_0 : i32, i32
  }
  func.func @transform_7(%arg0: i32, %arg1: i32) -> (i32, i32) {
    %c0_i32 = arith.constant 0 : i32
    %c0_i32_0 = arith.constant 0 : i32
    %c0_i32_1 = arith.constant 0 : i32
    return %c0_i32, %c0_i32_0 : i32, i32
  }
  func.func @transform_8(%arg0: i32, %arg1: i32) -> (i32, i32) {
    %c0_i32 = arith.constant 0 : i32
    %c0_i32_0 = arith.constant 0 : i32
    %c0_i32_1 = arith.constant 0 : i32
    return %c0_i32, %c0_i32_0 : i32, i32
  }
  func.func @transform_9(%arg0: i32, %arg1: i32) -> (i32, i32) {
    %c0_i32 = arith.constant 0 : i32
    %c0_i32_0 = arith.constant 0 : i32
    %c0_i32_1 = arith.constant 0 : i32
    return %c0_i32, %c0_i32_0 : i32, i32
  }
  func.func @transform_10(%arg0: i32, %arg1: i32) -> (i32, i32) {
    %c0_i32 = arith.constant 0 : i32
    %c0_i32_0 = arith.constant 0 : i32
    %c0_i32_1 = arith.constant 0 : i32
    return %c0_i32, %c0_i32_0 : i32, i32
  }
  func.func @transform_11(%arg0: i32, %arg1: i32) -> (i32, i32) {
    %c0_i32 = arith.constant 0 : i32
    %c0_i32_0 = arith.constant 0 : i32
    %c0_i32_1 = arith.constant 0 : i32
    return %c0_i32, %c0_i32_0 : i32, i32
  }
  func.func @transform_12(%arg0: i32, %arg1: i32) -> (i32, i32) {
    %c0_i32 = arith.constant 0 : i32
    %c0_i32_0 = arith.constant 0 : i32
    %c0_i32_1 = arith.constant 0 : i32
    return %c0_i32, %c0_i32_0 : i32, i32
  }
  func.func @transform_13(%arg0: i32, %arg1: i32) -> (i32, i32) {
    %c0_i32 = arith.constant 0 : i32
    %c0_i32_0 = arith.constant 0 : i32
    %c0_i32_1 = arith.constant 0 : i32
    return %c0_i32, %c0_i32_0 : i32, i32
  }
  func.func @transform_14(%arg0: i32, %arg1: i32) -> (i32, i32) {
    %c0_i32 = arith.constant 0 : i32
    %c0_i32_0 = arith.constant 0 : i32
    %c0_i32_1 = arith.constant 0 : i32
    return %c0_i32, %c0_i32_0 : i32, i32
  }
  func.func @transform_15(%arg0: i32, %arg1: i32) -> (i32, i32) {
    %c0_i32 = arith.constant 0 : i32
    %c0_i32_0 = arith.constant 0 : i32
    %c0_i32_1 = arith.constant 0 : i32
    return %c0_i32, %c0_i32_0 : i32, i32
  }
  func.func @transform_16(%arg0: i32, %arg1: i32) -> (i32, i32) {
    %c0_i32 = arith.constant 0 : i32
    %c0_i32_0 = arith.constant 0 : i32
    %c0_i32_1 = arith.constant 0 : i32
    return %c0_i32, %c0_i32_0 : i32, i32
  }
  func.func @transform_17(%arg0: i32, %arg1: i32) -> (i32, i32) {
    %c0_i32 = arith.constant 0 : i32
    %c0_i32_0 = arith.constant 0 : i32
    %c0_i32_1 = arith.constant 0 : i32
    return %c0_i32, %c0_i32_0 : i32, i32
  }
  func.func @transform_18(%arg0: i32, %arg1: i32) -> (i32, i32) {
    %c0_i32 = arith.constant 0 : i32
    %c0_i32_0 = arith.constant 0 : i32
    %c0_i32_1 = arith.constant 0 : i32
    return %c0_i32, %c0_i32_0 : i32, i32
  }
  func.func @transform_19(%arg0: i32, %arg1: i32) -> (i32, i32) {
    %c0_i32 = arith.constant 0 : i32
    %c0_i32_0 = arith.constant 0 : i32
    %c0_i32_1 = arith.constant 0 : i32
    return %c0_i32, %c0_i32_0 : i32, i32
  }
  func.func @transform_20(%arg0: i32, %arg1: i32) -> (i32, i32, i32) {
    %c0_i32 = arith.constant 0 : i32
    %c0_i32_0 = arith.constant 0 : i32
    return %arg0, %arg1, %c0_i32 : i32, i32, i32
  }
}

</mosaic_0001>

<llo_original>
// kernel: tpu_custom_call.1
$region0: #{tpu_custom_call.1}
  #allocation0 [shape = 'u32[]', space=smem, size = 0x4, offset = 0x4, fixed_abs, tag = 'smem constant byte address 0x4 - core index']
  #allocation1 [shape = 'u32[144,128]{1,0:T(1,128)}', space=vmem, size = 0x12000, scoped, tag = 'internal scratch']
  #allocation2 [shape = 'bf16[16,64]{1,0:T(8,128)(2,1)}', space=vmem, size = 0x1000, scoped, tag = 'scratch operand']
  #allocation3 [shape = 'bf16[8,64]{1,0:T(8,128)(2,1)}', space=vmem, size = 0x800, scoped, tag = 'scratch operand']
  %s0 = inlined_call_operand.vmem [shape: f32[2,16,32], index: 0, kind: input, shape index: {}]
  %s1 = inlined_call_operand.vmem [shape: f32[2,8,16], index: 1, kind: input, shape index: {}]
  %s2 = inlined_call_operand.hbm [shape: f32[1,32], index: 2, kind: input, shape index: {}]
  %s3 = inlined_call_operand.hbm [shape: f32[1,32], index: 3, kind: input, shape index: {}]
  %s4 = inlined_call_operand.hbm [shape: bf16[32,32], index: 4, kind: input, shape index: {}]
  %s5 = inlined_call_operand.hbm [shape: bf16[32,64], index: 5, kind: input, shape index: {}]
  %s6 = inlined_call_operand.hbm [shape: bf16[32,32], index: 6, kind: input, shape index: {}]
  %s7 = inlined_call_operand.hbm [shape: f32[1,32], index: 7, kind: input, shape index: {}]
  %s8 = inlined_call_operand.hbm [shape: f32[1,32], index: 8, kind: input, shape index: {}]
  %s9 = inlined_call_operand.hbm [shape: f32[1,32], index: 9, kind: input, shape index: {}]
  %s10 = inlined_call_operand.vmem [shape: bf16[32,32], index: 10, kind: input, shape index: {}]
  %s11 = inlined_call_operand.hbm [shape: bf16[16,64], index: 11, kind: input, shape index: {}]
  %s12 = inlined_call_operand.hbm [shape: bf16[32,32], index: 12, kind: input, shape index: {}]
  %s13 = inlined_call_operand.hbm [shape: f32[1,32], index: 13, kind: input, shape index: {}]
  %s14 = inlined_call_operand.hbm [shape: f32[1,32], index: 14, kind: input, shape index: {}]
  %s15 = inlined_call_operand.hbm [shape: f32[1,32], index: 15, kind: input, shape index: {}]
  %s16 = inlined_call_operand.vmem [shape: bf16[32,256], index: 16, kind: input, shape index: {}]
  %s17 = inlined_call_operand.hbm [shape: f32[1,256], index: 17, kind: input, shape index: {}]
  %s18 = inlined_call_operand.vmem [shape: bf16[128,32], index: 18, kind: input, shape index: {}]
  %s19 = inlined_call_operand.vmem [shape: f32[1,32], index: 19, kind: input, shape index: {}]
  %s20 = inlined_call_operand.hbm [shape: f32[2,16,32], index: 20, kind: output, shape index: {}]
  %s21 = sld [smem:[#allocation0]]
  $region173: #{tpu_custom_call.1} parent=0
    _
  %s23 = ssub.s32 1, %s21
  %s24 = scalar_select 0, %s23, %s21
  $region1: #{tpu_custom_call.1} parent=0
    #allocation4 [shape = 'u8[512]{0}', space=vmem, size = 0x400, scoped, tag = 'input window, operand 2, single buffered']
    #allocation5 [shape = 's32[2]{0}', space=sflag, size = 0x8, scoped, tag = 'scoped memory for tpu_custom_call.1']
    #allocation6 [shape = 's32[2]{0}', space=sflag, size = 0x8, scoped, tag = 'scoped memory for tpu_custom_call.1']
    #allocation7 [shape = 'u8[512]{0}', space=vmem, size = 0x400, scoped, tag = 'input window, operand 3, single buffered']
    #allocation8 [shape = 's32[1]{0}', space=sflag, size = 0x4, scoped, tag = 'scoped memory for tpu_custom_call.1']
    #allocation9 [shape = 'u8[8192]{0}', space=vmem, size = 0x2000, scoped, tag = 'input window, operand 4, single buffered']
    #allocation10 [shape = 'u8[8192]{0}', space=vmem, size = 0x2000, scoped, tag = 'input window, operand 5, single buffered']
    #allocation11 [shape = 's32[1]{0}', space=sflag, size = 0x4, scoped, tag = 'scoped memory for tpu_custom_call.1']
    #allocation12 [shape = 'u8[8192]{0}', space=vmem, size = 0x2000, scoped, tag = 'input window, operand 6, single buffered']
    #allocation13 [shape = 'u8[512]{0}', space=vmem, size = 0x400, scoped, tag = 'input window, operand 7, single buffered']
    #allocation14 [shape = 's32[1]{0}', space=sflag, size = 0x4, scoped, tag = 'scoped memory for tpu_custom_call.1']
    #allocation15 [shape = 'u8[512]{0}', space=vmem, size = 0x400, scoped, tag = 'input window, operand 8, single buffered']
    #allocation16 [shape = 'u8[512]{0}', space=vmem, size = 0x400, scoped, tag = 'input window, operand 9, single buffered']
    #allocation17 [shape = 's32[1]{0}', space=sflag, size = 0x4, scoped, tag = 'scoped memory for tpu_custom_call.1']
    #allocation18 [shape = 'u8[4096]{0}', space=vmem, size = 0x1000, scoped, tag = 'input window, operand 11, single buffered']
    #allocation19 [shape = 'u8[8192]{0}', space=vmem, size = 0x2000, scoped, tag = 'input window, operand 12, single buffered']
    #allocation20 [shape = 's32[1]{0}', space=sflag, size = 0x4, scoped, tag = 'scoped memory for tpu_custom_call.1']
    #allocation21 [shape = 'u8[512]{0}', space=vmem, size = 0x400, scoped, tag = 'input window, operand 13, single buffered']
    #allocation22 [shape = 'u8[512]{0}', space=vmem, size = 0x400, scoped, tag = 'input window, operand 14, single buffered']
    #allocation23 [shape = 's32[1]{0}', space=sflag, size = 0x4, scoped, tag = 'scoped memory for tpu_custom_call.1']
    #allocation24 [shape = 'u8[512]{0}', space=vmem, size = 0x400, scoped, tag = 'input window, operand 15, single buffered']
    #allocation25 [shape = 'u8[1024]{0}', space=vmem, size = 0x400, scoped, tag = 'input window, operand 17, single buffered']
    #allocation26 [shape = 's32[1]{0}', space=sflag, size = 0x4, scoped, tag = 'scoped memory for tpu_custom_call.1']
    #allocation27 [shape = 'u8[8192]{0}', space=vmem, size = 0x2000, scoped, tag = 'output window, operand 0']
    %25 = vsyncpa [#allocation5], 0
    %26 = vsyncpa [#allocation8], 0
    %27 = vsyncpa [#allocation11], 0
    %28 = vsyncpa [#allocation14], 0
    %29 = vsyncpa [#allocation17], 0
    %30 = vsyncpa [#allocation20], 0
    %31 = vsyncpa [#allocation23], 0
    %32 = vsyncpa [#allocation26], 0
    %33 = vsyncpa [#allocation6], 0
    %s34 = scalar_lea.sflag [#allocation6], 1
    %35 = vsyncpa %s34, 0
    loop: start=0, step=1, limit=6
    $region2: #{tpu_custom_call.1} parent=1 // loop_pre_header
      _
    $region3: #{tpu_custom_call.1} parent=1 // loop_header
      %s37 = sphi 0, %s41
      %p38 = scmp.ge.s32.totalorder %s37, 6
      %s44 = sphi 0, %s56
      %s45 = sphi 0, %s52
      %s46 = sphi 0, %s44
      %s47 = sphi 0, %s45
      %s48 = sphi 0, %s46
      %s49 = sphi 0, %s47
      %s59 = sphi 0, %s61
      %s62 = sphi 0, %s59
      %s63 = sphi 0, %s62
      %s79 = sphi 0, %s63
      %s85 = sphi 0, %s87
      %s88 = sphi 0, %s85
      %s89 = sphi 0, %s88
      %s105 = sphi 0, %s89
      %s109 = sphi 0, %s109
      %s111 = sphi 0, %s109
      %s112 = sphi 0, %s111
      %s126 = sphi 0, %s112
      %s130 = sphi 0, %s130
      %s132 = sphi 0, %s130
      %s133 = sphi 0, %s132
      %s147 = sphi 0, %s133
      %s151 = sphi 0, %s151
      %s153 = sphi 0, %s151
      %s154 = sphi 0, %s153
      %s168 = sphi 0, %s154
      %s172 = sphi 0, %s172
      %s174 = sphi 0, %s172
      %s175 = sphi 0, %s174
      %s189 = sphi 0, %s175
      %s193 = sphi 0, %s193
      %s195 = sphi 0, %s193
      %s196 = sphi 0, %s195
      %s210 = sphi 0, %s196
      %s214 = sphi 0, %s214
      %s216 = sphi 0, %s214
      %s217 = sphi 0, %s216
      %s231 = sphi 0, %s217
      %s235 = sphi 0, %s235
      %s237 = sphi 0, %s235
      %s238 = sphi 0, %s237
      %s252 = sphi 0, %s238
      %s256 = sphi 0, %s256
      %s258 = sphi 0, %s256
      %s259 = sphi 0, %s258
      %s273 = sphi 0, %s259
      %s277 = sphi 0, %s277
      %s279 = sphi 0, %s277
      %s280 = sphi 0, %s279
      %s294 = sphi 0, %s280
      %s298 = sphi 0, %s298
      %s300 = sphi 0, %s298
      %s301 = sphi 0, %s300
      %s315 = sphi 0, %s301
      %s319 = sphi 0, %s319
      %s321 = sphi 0, %s319
      %s322 = sphi 0, %s321
      %s336 = sphi 0, %s322
      %s340 = sphi 0, %s340
      %s342 = sphi 0, %s340
      %s343 = sphi 0, %s342
      %s357 = sphi 0, %s343
      %s361 = sphi 0, %s361
      %s363 = sphi 0, %s361
      %s364 = sphi 0, %s363
      %s378 = sphi 0, %s364
      %s382 = sphi 0, %s382
      %s384 = sphi 0, %s382
      %s385 = sphi 0, %s384
      %s399 = sphi 0, %s385
      %s403 = sphi 0, %s403
      %s405 = sphi 0, %s403
      %s406 = sphi 0, %s405
      %s420 = sphi 0, %s406
      %s424 = sphi 0, %s424
      %s426 = sphi 0, %s424
      %s427 = sphi 0, %s426
      %s441 = sphi 0, %s427
      %s445 = sphi 0, %s445
      %s447 = sphi 0, %s445
      %s448 = sphi 0, %s447
      %s462 = sphi 0, %s448
      %s466 = sphi 0, %s466
      %s468 = sphi 0, %s466
      %s469 = sphi 0, %s468
      %s483 = sphi 0, %s469
      %s491 = sphi 0, %s493
      %s494 = sphi 0, %s491
      %s495 = sphi 0, %s494
      %s511 = sphi 0, %s495
    $region4: #{tpu_custom_call.1} parent=1 // loop_header_branch
      %40 = sbr.rel (%p38) target = $region8
    $region5: #{tpu_custom_call.1} parent=1 // loop_body
      %s42 = ssub.s32 %s37, 1
      %s43 = ssub.s32 %s37, 2
      %s50 = sadd.s32 1, %s45
      %p51 = scmp.ge.s32.totalorder %s50, 2
      %s52 = scalar_select %p51, 0, %s50
      %s53 = sadd.s32 1, %s44
      %s54 = scalar_select %p51, %s53, %s44
      %p55 = scmp.ge.s32.totalorder %s54, 2
      %s56 = scalar_select %p55, 0, %s54
      %s57 = ssub.s32 %s44, %s56
      %p58 = scmp.eq.s32.totalorder %s57, 0
      %s60 = sadd.s32 %s59, 1
      %s61 = scalar_select %p58, %s59, %s60
      %p64 = pneg %p58
      %p65 = scmp.eq.s32.totalorder %s37, 3
      %p66 = por %p64, %p65
      %p67 = scmp.ne.s32.totalorder %s59, %s62
      %p68 = scmp.eq.s32.totalorder %s37, 0
      %p69 = por %p67, %p68
      %p70 = scmp.ne.s32.totalorder %s59, %s62
      %p71 = scmp.eq.s32.totalorder %s42, 3
      %p72 = por %p70, %p71
      %p73 = scmp.ne.s32.totalorder %s62, %s63
      %p74 = scmp.eq.s32.totalorder %s42, 0
      %p75 = por %p73, %p74
      %p76 = scmp.ne.s32.totalorder %s62, %s63
      %p77 = scmp.eq.s32.totalorder %s43, 3
      %p78 = por %p76, %p77
      %p80 = scmp.ne.s32.totalorder %s63, %s79
      %p81 = scmp.eq.s32.totalorder %s43, 0
      %p82 = por %p80, %p81
      %s83 = ssub.s32 %s44, %s56
      %p84 = scmp.eq.s32.totalorder %s83, 0
      %s86 = sadd.s32 %s85, 1
      %s87 = scalar_select %p84, %s85, %s86
      %p90 = pneg %p84
      %p91 = scmp.eq.s32.totalorder %s37, 3
      %p92 = por %p90, %p91
      %p93 = scmp.ne.s32.totalorder %s85, %s88
      %p94 = scmp.eq.s32.totalorder %s37, 0
      %p95 = por %p93, %p94
      %p96 = scmp.ne.s32.totalorder %s85, %s88
      %p97 = scmp.eq.s32.totalorder %s42, 3
      %p98 = por %p96, %p97
      %p99 = scmp.ne.s32.totalorder %s88, %s89
      %p100 = scmp.eq.s32.totalorder %s42, 0
      %p101 = por %p99, %p100
      %p102 = scmp.ne.s32.totalorder %s88, %s89
      %p103 = scmp.eq.s32.totalorder %s43, 3
      %p104 = por %p102, %p103
      %p106 = scmp.ne.s32.totalorder %s89, %s105
      %p107 = scmp.eq.s32.totalorder %s43, 0
      %p108 = por %p106, %p107
      %s110 = sadd.s32 %s109, 1
      %p113 = scmp.eq.s32.totalorder %s37, 3
      %p114 = scmp.ne.s32.totalorder %s109, %s111
      %p115 = scmp.eq.s32.totalorder %s37, 0
      %p116 = por %p114, %p115
      %p117 = scmp.ne.s32.totalorder %s109, %s111
      %p118 = scmp.eq.s32.totalorder %s42, 3
      %p119 = por %p117, %p118
      %p120 = scmp.ne.s32.totalorder %s111, %s112
      %p121 = scmp.eq.s32.totalorder %s42, 0
      %p122 = por %p120, %p121
      %p123 = scmp.ne.s32.totalorder %s111, %s112
      %p124 = scmp.eq.s32.totalorder %s43, 3
      %p125 = por %p123, %p124
      %p127 = scmp.ne.s32.totalorder %s112, %s126
      %p128 = scmp.eq.s32.totalorder %s43, 0
      %p129 = por %p127, %p128
      %s131 = sadd.s32 %s130, 1
      %p134 = scmp.eq.s32.totalorder %s37, 3
      %p135 = scmp.ne.s32.totalorder %s130, %s132
      %p136 = scmp.eq.s32.totalorder %s37, 0
      %p137 = por %p135, %p136
      %p138 = scmp.ne.s32.totalorder %s130, %s132
      %p139 = scmp.eq.s32.totalorder %s42, 3
      %p140 = por %p138, %p139
      %p141 = scmp.ne.s32.totalorder %s132, %s133
      %p142 = scmp.eq.s32.totalorder %s42, 0
      %p143 = por %p141, %p142
      %p144 = scmp.ne.s32.totalorder %s132, %s133
      %p145 = scmp.eq.s32.totalorder %s43, 3
      %p146 = por %p144, %p145
      %p148 = scmp.ne.s32.totalorder %s133, %s147
      %p149 = scmp.eq.s32.totalorder %s43, 0
      %p150 = por %p148, %p149
      %s152 = sadd.s32 %s151, 1
      %p155 = scmp.eq.s32.totalorder %s37, 3
      %p156 = scmp.ne.s32.totalorder %s151, %s153
      %p157 = scmp.eq.s32.totalorder %s37, 0
      %p158 = por %p156, %p157
      %p159 = scmp.ne.s32.totalorder %s151, %s153
      %p160 = scmp.eq.s32.totalorder %s42, 3
      %p161 = por %p159, %p160
      %p162 = scmp.ne.s32.totalorder %s153, %s154
      %p163 = scmp.eq.s32.totalorder %s42, 0
      %p164 = por %p162, %p163
      %p165 = scmp.ne.s32.totalorder %s153, %s154
      %p166 = scmp.eq.s32.totalorder %s43, 3
      %p167 = por %p165, %p166
      %p169 = scmp.ne.s32.totalorder %s154, %s168
      %p170 = scmp.eq.s32.totalorder %s43, 0
      %p171 = por %p169, %p170
      %s173 = sadd.s32 %s172, 1
      %p176 = scmp.eq.s32.totalorder %s37, 3
      %p177 = scmp.ne.s32.totalorder %s172, %s174
      %p178 = scmp.eq.s32.totalorder %s37, 0
      %p179 = por %p177, %p178
      %p180 = scmp.ne.s32.totalorder %s172, %s174
      %p181 = scmp.eq.s32.totalorder %s42, 3
      %p182 = por %p180, %p181
      %p183 = scmp.ne.s32.totalorder %s174, %s175
      %p184 = scmp.eq.s32.totalorder %s42, 0
      %p185 = por %p183, %p184
      %p186 = scmp.ne.s32.totalorder %s174, %s175
      %p187 = scmp.eq.s32.totalorder %s43, 3
      %p188 = por %p186, %p187
      %p190 = scmp.ne.s32.totalorder %s175, %s189
      %p191 = scmp.eq.s32.totalorder %s43, 0
      %p192 = por %p190, %p191
      %s194 = sadd.s32 %s193, 1
      %p197 = scmp.eq.s32.totalorder %s37, 3
      %p198 = scmp.ne.s32.totalorder %s193, %s195
      %p199 = scmp.eq.s32.totalorder %s37, 0
      %p200 = por %p198, %p199
      %p201 = scmp.ne.s32.totalorder %s193, %s195
      %p202 = scmp.eq.s32.totalorder %s42, 3
      %p203 = por %p201, %p202
      %p204 = scmp.ne.s32.totalorder %s195, %s196
      %p205 = scmp.eq.s32.totalorder %s42, 0
      %p206 = por %p204, %p205
      %p207 = scmp.ne.s32.totalorder %s195, %s196
      %p208 = scmp.eq.s32.totalorder %s43, 3
      %p209 = por %p207, %p208
      %p211 = scmp.ne.s32.totalorder %s196, %s210
      %p212 = scmp.eq.s32.totalorder %s43, 0
      %p213 = por %p211, %p212
      %s215 = sadd.s32 %s214, 1
      %p218 = scmp.eq.s32.totalorder %s37, 3
      %p219 = scmp.ne.s32.totalorder %s214, %s216
      %p220 = scmp.eq.s32.totalorder %s37, 0
      %p221 = por %p219, %p220
      %p222 = scmp.ne.s32.totalorder %s214, %s216
      %p223 = scmp.eq.s32.totalorder %s42, 3
      %p224 = por %p222, %p223
      %p225 = scmp.ne.s32.totalorder %s216, %s217
      %p226 = scmp.eq.s32.totalorder %s42, 0
      %p227 = por %p225, %p226
      %p228 = scmp.ne.s32.totalorder %s216, %s217
      %p229 = scmp.eq.s32.totalorder %s43, 3
      %p230 = por %p228, %p229
      %p232 = scmp.ne.s32.totalorder %s217, %s231
      %p233 = scmp.eq.s32.totalorder %s43, 0
      %p234 = por %p232, %p233
      %s236 = sadd.s32 %s235, 1
      %p239 = scmp.eq.s32.totalorder %s37, 3
      %p240 = scmp.ne.s32.totalorder %s235, %s237
      %p241 = scmp.eq.s32.totalorder %s37, 0
      %p242 = por %p240, %p241
      %p243 = scmp.ne.s32.totalorder %s235, %s237
      %p244 = scmp.eq.s32.totalorder %s42, 3
      %p245 = por %p243, %p244
      %p246 = scmp.ne.s32.totalorder %s237, %s238
      %p247 = scmp.eq.s32.totalorder %s42, 0
      %p248 = por %p246, %p247
      %p249 = scmp.ne.s32.totalorder %s237, %s238
      %p250 = scmp.eq.s32.totalorder %s43, 3
      %p251 = por %p249, %p250
      %p253 = scmp.ne.s32.totalorder %s238, %s252
      %p254 = scmp.eq.s32.totalorder %s43, 0
      %p255 = por %p253, %p254
      %s257 = sadd.s32 %s256, 1
      %p260 = scmp.eq.s32.totalorder %s37, 3
      %p261 = scmp.ne.s32.totalorder %s256, %s258
      %p262 = scmp.eq.s32.totalorder %s37, 0
      %p263 = por %p261, %p262
      %p264 = scmp.ne.s32.totalorder %s256, %s258
      %p265 = scmp.eq.s32.totalorder %s42, 3
      %p266 = por %p264, %p265
      %p267 = scmp.ne.s32.totalorder %s258, %s259
      %p268 = scmp.eq.s32.totalorder %s42, 0
      %p269 = por %p267, %p268
      %p270 = scmp.ne.s32.totalorder %s258, %s259
      %p271 = scmp.eq.s32.totalorder %s43, 3
      %p272 = por %p270, %p271
      %p274 = scmp.ne.s32.totalorder %s259, %s273
      %p275 = scmp.eq.s32.totalorder %s43, 0
      %p276 = por %p274, %p275
      %s278 = sadd.s32 %s277, 1
      %p281 = scmp.eq.s32.totalorder %s37, 3
      %p282 = scmp.ne.s32.totalorder %s277, %s279
      %p283 = scmp.eq.s32.totalorder %s37, 0
      %p284 = por %p282, %p283
      %p285 = scmp.ne.s32.totalorder %s277, %s279
      %p286 = scmp.eq.s32.totalorder %s42, 3
      %p287 = por %p285, %p286
      %p288 = scmp.ne.s32.totalorder %s279, %s280
      %p289 = scmp.eq.s32.totalorder %s42, 0
      %p290 = por %p288, %p289
      %p291 = scmp.ne.s32.totalorder %s279, %s280
      %p292 = scmp.eq.s32.totalorder %s43, 3
      %p293 = por %p291, %p292
      %p295 = scmp.ne.s32.totalorder %s280, %s294
      %p296 = scmp.eq.s32.totalorder %s43, 0
      %p297 = por %p295, %p296
      %s299 = sadd.s32 %s298, 1
      %p302 = scmp.eq.s32.totalorder %s37, 3
      %p303 = scmp.ne.s32.totalorder %s298, %s300
      %p304 = scmp.eq.s32.totalorder %s37, 0
      %p305 = por %p303, %p304
      %p306 = scmp.ne.s32.totalorder %s298, %s300
      %p307 = scmp.eq.s32.totalorder %s42, 3
      %p308 = por %p306, %p307
      %p309 = scmp.ne.s32.totalorder %s300, %s301
      %p310 = scmp.eq.s32.totalorder %s42, 0
      %p311 = por %p309, %p310
      %p312 = scmp.ne.s32.totalorder %s300, %s301
      %p313 = scmp.eq.s32.totalorder %s43, 3
      %p314 = por %p312, %p313
      %p316 = scmp.ne.s32.totalorder %s301, %s315
      %p317 = scmp.eq.s32.totalorder %s43, 0
      %p318 = por %p316, %p317
      %s320 = sadd.s32 %s319, 1
      %p323 = scmp.eq.s32.totalorder %s37, 3
      %p324 = scmp.ne.s32.totalorder %s319, %s321
      %p325 = scmp.eq.s32.totalorder %s37, 0
      %p326 = por %p324, %p325
      %p327 = scmp.ne.s32.totalorder %s319, %s321
      %p328 = scmp.eq.s32.totalorder %s42, 3
      %p329 = por %p327, %p328
      %p330 = scmp.ne.s32.totalorder %s321, %s322
      %p331 = scmp.eq.s32.totalorder %s42, 0
      %p332 = por %p330, %p331
      %p333 = scmp.ne.s32.totalorder %s321, %s322
      %p334 = scmp.eq.s32.totalorder %s43, 3
      %p335 = por %p333, %p334
      %p337 = scmp.ne.s32.totalorder %s322, %s336
      %p338 = scmp.eq.s32.totalorder %s43, 0
      %p339 = por %p337, %p338
      %s341 = sadd.s32 %s340, 1
      %p344 = scmp.eq.s32.totalorder %s37, 3
      %p345 = scmp.ne.s32.totalorder %s340, %s342
      %p346 = scmp.eq.s32.totalorder %s37, 0
      %p347 = por %p345, %p346
      %p348 = scmp.ne.s32.totalorder %s340, %s342
      %p349 = scmp.eq.s32.totalorder %s42, 3
      %p350 = por %p348, %p349
      %p351 = scmp.ne.s32.totalorder %s342, %s343
      %p352 = scmp.eq.s32.totalorder %s42, 0
      %p353 = por %p351, %p352
      %p354 = scmp.ne.s32.totalorder %s342, %s343
      %p355 = scmp.eq.s32.totalorder %s43, 3
      %p356 = por %p354, %p355
      %p358 = scmp.ne.s32.totalorder %s343, %s357
      %p359 = scmp.eq.s32.totalorder %s43, 0
      %p360 = por %p358, %p359
      %s362 = sadd.s32 %s361, 1
      %p365 = scmp.eq.s32.totalorder %s37, 3
      %p366 = scmp.ne.s32.totalorder %s361, %s363
      %p367 = scmp.eq.s32.totalorder %s37, 0
      %p368 = por %p366, %p367
      %p369 = scmp.ne.s32.totalorder %s361, %s363
      %p370 = scmp.eq.s32.totalorder %s42, 3
      %p371 = por %p369, %p370
      %p372 = scmp.ne.s32.totalorder %s363, %s364
      %p373 = scmp.eq.s32.totalorder %s42, 0
      %p374 = por %p372, %p373
      %p375 = scmp.ne.s32.totalorder %s363, %s364
      %p376 = scmp.eq.s32.totalorder %s43, 3
      %p377 = por %p375, %p376
      %p379 = scmp.ne.s32.totalorder %s364, %s378
      %p380 = scmp.eq.s32.totalorder %s43, 0
      %p381 = por %p379, %p380
      %s383 = sadd.s32 %s382, 1
      %p386 = scmp.eq.s32.totalorder %s37, 3
      %p387 = scmp.ne.s32.totalorder %s382, %s384
      %p388 = scmp.eq.s32.totalorder %s37, 0
      %p389 = por %p387, %p388
      %p390 = scmp.ne.s32.totalorder %s382, %s384
      %p391 = scmp.eq.s32.totalorder %s42, 3
      %p392 = por %p390, %p391
      %p393 = scmp.ne.s32.totalorder %s384, %s385
      %p394 = scmp.eq.s32.totalorder %s42, 0
      %p395 = por %p393, %p394
      %p396 = scmp.ne.s32.totalorder %s384, %s385
      %p397 = scmp.eq.s32.totalorder %s43, 3
      %p398 = por %p396, %p397
      %p400 = scmp.ne.s32.totalorder %s385, %s399
      %p401 = scmp.eq.s32.totalorder %s43, 0
      %p402 = por %p400, %p401
      %s404 = sadd.s32 %s403, 1
      %p407 = scmp.eq.s32.totalorder %s37, 3
      %p408 = scmp.ne.s32.totalorder %s403, %s405
      %p409 = scmp.eq.s32.totalorder %s37, 0
      %p410 = por %p408, %p409
      %p411 = scmp.ne.s32.totalorder %s403, %s405
      %p412 = scmp.eq.s32.totalorder %s42, 3
      %p413 = por %p411, %p412
      %p414 = scmp.ne.s32.totalorder %s405, %s406
      %p415 = scmp.eq.s32.totalorder %s42, 0
      %p416 = por %p414, %p415
      %p417 = scmp.ne.s32.totalorder %s405, %s406
      %p418 = scmp.eq.s32.totalorder %s43, 3
      %p419 = por %p417, %p418
      %p421 = scmp.ne.s32.totalorder %s406, %s420
      %p422 = scmp.eq.s32.totalorder %s43, 0
      %p423 = por %p421, %p422
      %s425 = sadd.s32 %s424, 1
      %p428 = scmp.eq.s32.totalorder %s37, 3
      %p429 = scmp.ne.s32.totalorder %s424, %s426
      %p430 = scmp.eq.s32.totalorder %s37, 0
      %p431 = por %p429, %p430
      %p432 = scmp.ne.s32.totalorder %s424, %s426
      %p433 = scmp.eq.s32.totalorder %s42, 3
      %p434 = por %p432, %p433
      %p435 = scmp.ne.s32.totalorder %s426, %s427
      %p436 = scmp.eq.s32.totalorder %s42, 0
      %p437 = por %p435, %p436
      %p438 = scmp.ne.s32.totalorder %s426, %s427
      %p439 = scmp.eq.s32.totalorder %s43, 3
      %p440 = por %p438, %p439
      %p442 = scmp.ne.s32.totalorder %s427, %s441
      %p443 = scmp.eq.s32.totalorder %s43, 0
      %p444 = por %p442, %p443
      %s446 = sadd.s32 %s445, 1
      %p449 = scmp.eq.s32.totalorder %s37, 3
      %p450 = scmp.ne.s32.totalorder %s445, %s447
      %p451 = scmp.eq.s32.totalorder %s37, 0
      %p452 = por %p450, %p451
      %p453 = scmp.ne.s32.totalorder %s445, %s447
      %p454 = scmp.eq.s32.totalorder %s42, 3
      %p455 = por %p453, %p454
      %p456 = scmp.ne.s32.totalorder %s447, %s448
      %p457 = scmp.eq.s32.totalorder %s42, 0
      %p458 = por %p456, %p457
      %p459 = scmp.ne.s32.totalorder %s447, %s448
      %p460 = scmp.eq.s32.totalorder %s43, 3
      %p461 = por %p459, %p460
      %p463 = scmp.ne.s32.totalorder %s448, %s462
      %p464 = scmp.eq.s32.totalorder %s43, 0
      %p465 = por %p463, %p464
      %s467 = sadd.s32 %s466, 1
      %p470 = scmp.eq.s32.totalorder %s37, 3
      %p471 = scmp.ne.s32.totalorder %s466, %s468
      %p472 = scmp.eq.s32.totalorder %s37, 0
      %p473 = por %p471, %p472
      %p474 = scmp.ne.s32.totalorder %s466, %s468
      %p475 = scmp.eq.s32.totalorder %s42, 3
      %p476 = por %p474, %p475
      %p477 = scmp.ne.s32.totalorder %s468, %s469
      %p478 = scmp.eq.s32.totalorder %s42, 0
      %p479 = por %p477, %p478
      %p480 = scmp.ne.s32.totalorder %s468, %s469
      %p481 = scmp.eq.s32.totalorder %s43, 3
      %p482 = por %p480, %p481
      %p484 = scmp.ne.s32.totalorder %s469, %s483
      %p485 = scmp.eq.s32.totalorder %s43, 0
      %p486 = por %p484, %p485
      %s487 = ssub.s32 %s44, %s56
      %s488 = ssub.s32 %s45, %s52
      %s489 = sor.u32 %s487, %s488
      %p490 = scmp.eq.s32.totalorder %s489, 0
      %s492 = sadd.s32 %s491, 1
      %s493 = scalar_select %p490, %s491, %s492
      %p496 = pneg %p490
      %p497 = scmp.eq.s32.totalorder %s37, 3
      %p498 = por %p496, %p497
      %p499 = scmp.ne.s32.totalorder %s491, %s494
      %p500 = scmp.eq.s32.totalorder %s37, 0
      %p501 = por %p499, %p500
      %p502 = scmp.ne.s32.totalorder %s491, %s494
      %p503 = scmp.eq.s32.totalorder %s42, 3
      %p504 = por %p502, %p503
      %p505 = scmp.ne.s32.totalorder %s494, %s495
      %p506 = scmp.eq.s32.totalorder %s42, 0
      %p507 = por %p505, %p506
      %p508 = scmp.ne.s32.totalorder %s494, %s495
      %p509 = scmp.eq.s32.totalorder %s43, 3
      %p510 = por %p508, %p509
      %p512 = scmp.ne.s32.totalorder %s495, %s511
      %p513 = scmp.eq.s32.totalorder %s43, 0
      %p514 = por %p512, %p513
      %p515 = scmp.le.s32.totalorder 1, %s37
      %p516 = scmp.lt.s32.totalorder %s37, 5
      %p517 = pnand %p515, %p516
      %p518 = pneg %p517
      // Predicated region
      $region9: #{tpu_custom_call.1} parent=5 // pred_check
        _
      $region10: #{tpu_custom_call.1} parent=5 // pred_check_branch
        %520 = sbr.rel (%p517) target = $region12
      $region11: #{tpu_custom_call.1} parent=5 // pred_region
        %s521 = ssub.s32 %s37, 1
        // Predicated region
        $region13: #{tpu_custom_call.1} parent=11 // pred_check
          %p522 = pneg %p122
        $region14: #{tpu_custom_call.1} parent=11 // pred_check_branch
          %524 = sbr.rel (%p522) target = $region16
        $region15: #{tpu_custom_call.1} parent=11 // pred_region
          %s526 = ssub.s32 16, 16
          %527 = vsyncadd [#allocation5], %s526
          %s529 = sshll.u32 [#allocation4], 4
          %s530 = int_to_ptr.vmem [resolvable:$true] %s529
          %532 = dma.hbm_to_vmem [thread:$0]  %s2, 16, %s530, [#allocation5]
        $region16: #{tpu_custom_call.1} parent=11 // pred_fallthru
          _
        // Predicated region
        $region17: #{tpu_custom_call.1} parent=11 // pred_check
          %p533 = pneg %p143
        $region18: #{tpu_custom_call.1} parent=11 // pred_check_branch
          %535 = sbr.rel (%p533) target = $region20
        $region19: #{tpu_custom_call.1} parent=11 // pred_region
          %s537 = ssub.s32 16, 16
          %538 = vsyncadd [#allocation8], %s537
          %s540 = sshll.u32 [#allocation7], 4
          %s541 = int_to_ptr.vmem [resolvable:$true] %s540
          %543 = dma.hbm_to_vmem [thread:$0]  %s3, 16, %s541, [#allocation8]
        $region20: #{tpu_custom_call.1} parent=11 // pred_fallthru
          _
        // Predicated region
        $region21: #{tpu_custom_call.1} parent=11 // pred_check
          %p544 = pneg %p164
        $region22: #{tpu_custom_call.1} parent=11 // pred_check_branch
          %546 = sbr.rel (%p544) target = $region24
        $region23: #{tpu_custom_call.1} parent=11 // pred_region
          %s548 = ssub.s32 256, 256
          %549 = vsyncadd [#allocation8], %s548
          %s550 = sshll.u32 [#allocation9], 4
          %s551 = int_to_ptr.vmem [resolvable:$true] %s550
          %556 = dma.hbm_to_vmem [thread:$0]  %s4, 256, %s551, [#allocation8], 64, 64, 4
        $region24: #{tpu_custom_call.1} parent=11 // pred_fallthru
          _
        // Predicated region
        $region25: #{tpu_custom_call.1} parent=11 // pred_check
          %p557 = pneg %p185
        $region26: #{tpu_custom_call.1} parent=11 // pred_check_branch
          %559 = sbr.rel (%p557) target = $region28
        $region27: #{tpu_custom_call.1} parent=11 // pred_region
          %s561 = ssub.s32 256, 256
          %562 = vsyncadd [#allocation11], %s561
          %s563 = sshll.u32 [#allocation10], 4
          %s564 = int_to_ptr.vmem [resolvable:$true] %s563
          %569 = dma.hbm_to_vmem [thread:$0]  %s5, 256, %s564, [#allocation11], 64, 64, 4
        $region28: #{tpu_custom_call.1} parent=11 // pred_fallthru
          _
        // Predicated region
        $region29: #{tpu_custom_call.1} parent=11 // pred_check
          %p570 = pneg %p206
        $region30: #{tpu_custom_call.1} parent=11 // pred_check_branch
          %572 = sbr.rel (%p570) target = $region32
        $region31: #{tpu_custom_call.1} parent=11 // pred_region
          %s574 = ssub.s32 256, 256
          %575 = vsyncadd [#allocation11], %s574
          %s576 = sshll.u32 [#allocation12], 4
          %s577 = int_to_ptr.vmem [resolvable:$true] %s576
          %582 = dma.hbm_to_vmem [thread:$0]  %s6, 256, %s577, [#allocation11], 64, 64, 4
        $region32: #{tpu_custom_call.1} parent=11 // pred_fallthru
          _
        // Predicated region
        $region33: #{tpu_custom_call.1} parent=11 // pred_check
          %p583 = pneg %p227
        $region34: #{tpu_custom_call.1} parent=11 // pred_check_branch
          %585 = sbr.rel (%p583) target = $region36
        $region35: #{tpu_custom_call.1} parent=11 // pred_region
          %s587 = ssub.s32 16, 16
          %588 = vsyncadd [#allocation14], %s587
          %s590 = sshll.u32 [#allocation13], 4
          %s591 = int_to_ptr.vmem [resolvable:$true] %s590
          %593 = dma.hbm_to_vmem [thread:$0]  %s7, 16, %s591, [#allocation14]
        $region36: #{tpu_custom_call.1} parent=11 // pred_fallthru
          _
        // Predicated region
        $region37: #{tpu_custom_call.1} parent=11 // pred_check
          %p594 = pneg %p248
        $region38: #{tpu_custom_call.1} parent=11 // pred_check_branch
          %596 = sbr.rel (%p594) target = $region40
        $region39: #{tpu_custom_call.1} parent=11 // pred_region
          %s598 = ssub.s32 16, 16
          %599 = vsyncadd [#allocation14], %s598
          %s601 = sshll.u32 [#allocation15], 4
          %s602 = int_to_ptr.vmem [resolvable:$true] %s601
          %604 = dma.hbm_to_vmem [thread:$0]  %s8, 16, %s602, [#allocation14]
        $region40: #{tpu_custom_call.1} parent=11 // pred_fallthru
          _
        // Predicated region
        $region41: #{tpu_custom_call.1} parent=11 // pred_check
          %p605 = pneg %p269
        $region42: #{tpu_custom_call.1} parent=11 // pred_check_branch
          %607 = sbr.rel (%p605) target = $region44
        $region43: #{tpu_custom_call.1} parent=11 // pred_region
          %s609 = ssub.s32 16, 16
          %610 = vsyncadd [#allocation17], %s609
          %s612 = sshll.u32 [#allocation16], 4
          %s613 = int_to_ptr.vmem [resolvable:$true] %s612
          %615 = dma.hbm_to_vmem [thread:$0]  %s9, 16, %s613, [#allocation17]
        $region44: #{tpu_custom_call.1} parent=11 // pred_fallthru
          _
        // Predicated region
        $region45: #{tpu_custom_call.1} parent=11 // pred_check
          %p616 = pneg %p290
        $region46: #{tpu_custom_call.1} parent=11 // pred_check_branch
          %618 = sbr.rel (%p616) target = $region48
        $region47: #{tpu_custom_call.1} parent=11 // pred_region
          _
        $region48: #{tpu_custom_call.1} parent=11 // pred_fallthru
          _
        // Predicated region
        $region49: #{tpu_custom_call.1} parent=11 // pred_check
          %p619 = pneg %p311
        $region50: #{tpu_custom_call.1} parent=11 // pred_check_branch
          %621 = sbr.rel (%p619) target = $region52
        $region51: #{tpu_custom_call.1} parent=11 // pred_region
          %s623 = ssub.s32 128, 128
          %624 = vsyncadd [#allocation17], %s623
          %s625 = sshll.u32 [#allocation18], 4
          %s626 = int_to_ptr.vmem [resolvable:$true] %s625
          %631 = dma.hbm_to_vmem [thread:$0]  %s11, 128, %s626, [#allocation17], 64, 64, 4
        $region52: #{tpu_custom_call.1} parent=11 // pred_fallthru
          _
        // Predicated region
        $region53: #{tpu_custom_call.1} parent=11 // pred_check
          %p632 = pneg %p332
        $region54: #{tpu_custom_call.1} parent=11 // pred_check_branch
          %634 = sbr.rel (%p632) target = $region56
        $region55: #{tpu_custom_call.1} parent=11 // pred_region
          %s636 = ssub.s32 256, 256
          %637 = vsyncadd [#allocation20], %s636
          %s638 = sshll.u32 [#allocation19], 4
          %s639 = int_to_ptr.vmem [resolvable:$true] %s638
          %644 = dma.hbm_to_vmem [thread:$0]  %s12, 256, %s639, [#allocation20], 64, 64, 4
        $region56: #{tpu_custom_call.1} parent=11 // pred_fallthru
          _
        // Predicated region
        $region57: #{tpu_custom_call.1} parent=11 // pred_check
          %p645 = pneg %p353
        $region58: #{tpu_custom_call.1} parent=11 // pred_check_branch
          %647 = sbr.rel (%p645) target = $region60
        $region59: #{tpu_custom_call.1} parent=11 // pred_region
          %s649 = ssub.s32 16, 16
          %650 = vsyncadd [#allocation20], %s649
          %s652 = sshll.u32 [#allocation21], 4
          %s653 = int_to_ptr.vmem [resolvable:$true] %s652
          %655 = dma.hbm_to_vmem [thread:$0]  %s13, 16, %s653, [#allocation20]
        $region60: #{tpu_custom_call.1} parent=11 // pred_fallthru
          _
        // Predicated region
        $region61: #{tpu_custom_call.1} parent=11 // pred_check
          %p656 = pneg %p374
        $region62: #{tpu_custom_call.1} parent=11 // pred_check_branch
          %658 = sbr.rel (%p656) target = $region64
        $region63: #{tpu_custom_call.1} parent=11 // pred_region
          %s660 = ssub.s32 16, 16
          %661 = vsyncadd [#allocation23], %s660
          %s663 = sshll.u32 [#allocation22], 4
          %s664 = int_to_ptr.vmem [resolvable:$true] %s663
          %666 = dma.hbm_to_vmem [thread:$0]  %s14, 16, %s664, [#allocation23]
        $region64: #{tpu_custom_call.1} parent=11 // pred_fallthru
          _
        // Predicated region
        $region65: #{tpu_custom_call.1} parent=11 // pred_check
          %p667 = pneg %p395
        $region66: #{tpu_custom_call.1} parent=11 // pred_check_branch
          %669 = sbr.rel (%p667) target = $region68
        $region67: #{tpu_custom_call.1} parent=11 // pred_region
          %s671 = ssub.s32 16, 16
          %672 = vsyncadd [#allocation23], %s671
          %s674 = sshll.u32 [#allocation24], 4
          %s675 = int_to_ptr.vmem [resolvable:$true] %s674
          %677 = dma.hbm_to_vmem [thread:$0]  %s15, 16, %s675, [#allocation23]
        $region68: #{tpu_custom_call.1} parent=11 // pred_fallthru
          _
        // Predicated region
        $region69: #{tpu_custom_call.1} parent=11 // pred_check
          %p678 = pneg %p416
        $region70: #{tpu_custom_call.1} parent=11 // pred_check_branch
          %680 = sbr.rel (%p678) target = $region72
        $region71: #{tpu_custom_call.1} parent=11 // pred_region
          _
        $region72: #{tpu_custom_call.1} parent=11 // pred_fallthru
          _
        // Predicated region
        $region73: #{tpu_custom_call.1} parent=11 // pred_check
          %p681 = pneg %p437
        $region74: #{tpu_custom_call.1} parent=11 // pred_check_branch
          %683 = sbr.rel (%p681) target = $region76
        $region75: #{tpu_custom_call.1} parent=11 // pred_region
          %s685 = ssub.s32 32, 32
          %686 = vsyncadd [#allocation26], %s685
          %s688 = sshll.u32 [#allocation25], 4
          %s689 = int_to_ptr.vmem [resolvable:$true] %s688
          %691 = dma.hbm_to_vmem [thread:$0]  %s17, 32, %s689, [#allocation26]
        $region76: #{tpu_custom_call.1} parent=11 // pred_fallthru
          _
        // Predicated region
        $region77: #{tpu_custom_call.1} parent=11 // pred_check
          %p692 = pneg %p458
        $region78: #{tpu_custom_call.1} parent=11 // pred_check_branch
          %694 = sbr.rel (%p692) target = $region80
        $region79: #{tpu_custom_call.1} parent=11 // pred_region
          _
        $region80: #{tpu_custom_call.1} parent=11 // pred_fallthru
          _
        // Predicated region
        $region81: #{tpu_custom_call.1} parent=11 // pred_check
          %p695 = pneg %p479
        $region82: #{tpu_custom_call.1} parent=11 // pred_check_branch
          %697 = sbr.rel (%p695) target = $region84
        $region83: #{tpu_custom_call.1} parent=11 // pred_region
          _
        $region84: #{tpu_custom_call.1} parent=11 // pred_fallthru
          _
      $region12: #{tpu_custom_call.1} parent=5 // pred_fallthru
        _
      %p698 = scmp.lt.s32.totalorder %s37, 4
      // Predicated region
      $region85: #{tpu_custom_call.1} parent=5 // pred_check
        %p699 = pneg %p698
      $region86: #{tpu_custom_call.1} parent=5 // pred_check_branch
        %701 = sbr.rel (%p699) target = $region88
      $region87: #{tpu_custom_call.1} parent=5 // pred_region
        // Predicated region
        $region89: #{tpu_custom_call.1} parent=87 // pred_check
          %p702 = pneg %p69
        $region90: #{tpu_custom_call.1} parent=87 // pred_check_branch
          %704 = sbr.rel (%p702) target = $region92
        $region91: #{tpu_custom_call.1} parent=87 // pred_region
          %p705 = scmp.lt.s32.totalorder %s44, 1
          %s706 = scalar_select %p705, %s44, 1
          %s707 = smul.addr %s706, 2
          %s708 = smul.addr %s707, 8
          %s709 = scalar_lea.vmem %s0, %s708
        $region92: #{tpu_custom_call.1} parent=87 // pred_fallthru
          _
        // Predicated region
        $region93: #{tpu_custom_call.1} parent=87 // pred_check
          %p710 = pneg %p95
        $region94: #{tpu_custom_call.1} parent=87 // pred_check_branch
          %712 = sbr.rel (%p710) target = $region96
        $region95: #{tpu_custom_call.1} parent=87 // pred_region
          %p713 = scmp.lt.s32.totalorder %s44, 1
          %s714 = scalar_select %p713, %s44, 1
          %s715 = smul.addr %s714, 8
          %s716 = scalar_lea.vmem %s1, %s715
        $region96: #{tpu_custom_call.1} parent=87 // pred_fallthru
          _
      $region88: #{tpu_custom_call.1} parent=5 // pred_fallthru
        _
      %p717 = scmp.le.s32.totalorder 1, %s37
      %p718 = scmp.lt.s32.totalorder %s37, 5
      %p719 = pnand %p717, %p718
      %p720 = pneg %p719
      // Predicated region
      $region97: #{tpu_custom_call.1} parent=5 // pred_check
        _
      $region98: #{tpu_custom_call.1} parent=5 // pred_check_branch
        %722 = sbr.rel (%p719) target = $region100
      $region99: #{tpu_custom_call.1} parent=5 // pred_region
        %s723 = ssub.s32 %s37, 1
        // Predicated region
        $region101: #{tpu_custom_call.1} parent=99 // pred_check
          %p724 = pneg %p122
        $region102: #{tpu_custom_call.1} parent=99 // pred_check_branch
          %726 = sbr.rel (%p724) target = $region104
        $region103: #{tpu_custom_call.1} parent=99 // pred_region
          %727 = dma.done [#allocation5], 16
        $region104: #{tpu_custom_call.1} parent=99 // pred_fallthru
          _
        // Predicated region
        $region105: #{tpu_custom_call.1} parent=99 // pred_check
          %p728 = pneg %p143
        $region106: #{tpu_custom_call.1} parent=99 // pred_check_branch
          %730 = sbr.rel (%p728) target = $region108
        $region107: #{tpu_custom_call.1} parent=99 // pred_region
          %731 = dma.done [#allocation8], 16
        $region108: #{tpu_custom_call.1} parent=99 // pred_fallthru
          _
        // Predicated region
        $region109: #{tpu_custom_call.1} parent=99 // pred_check
          %p732 = pneg %p164
        $region110: #{tpu_custom_call.1} parent=99 // pred_check_branch
          %734 = sbr.rel (%p732) target = $region112
        $region111: #{tpu_custom_call.1} parent=99 // pred_region
          %735 = dma.done [#allocation8], 256
        $region112: #{tpu_custom_call.1} parent=99 // pred_fallthru
          _
        // Predicated region
        $region113: #{tpu_custom_call.1} parent=99 // pred_check
          %p736 = pneg %p185
        $region114: #{tpu_custom_call.1} parent=99 // pred_check_branch
          %738 = sbr.rel (%p736) target = $region116
        $region115: #{tpu_custom_call.1} parent=99 // pred_region
          %739 = dma.done [#allocation11], 256
        $region116: #{tpu_custom_call.1} parent=99 // pred_fallthru
          _
        // Predicated region
        $region117: #{tpu_custom_call.1} parent=99 // pred_check
          %p740 = pneg %p206
        $region118: #{tpu_custom_call.1} parent=99 // pred_check_branch
          %742 = sbr.rel (%p740) target = $region120
        $region119: #{tpu_custom_call.1} parent=99 // pred_region
          %743 = dma.done [#allocation11], 256
        $region120: #{tpu_custom_call.1} parent=99 // pred_fallthru
          _
        // Predicated region
        $region121: #{tpu_custom_call.1} parent=99 // pred_check
          %p744 = pneg %p227
        $region122: #{tpu_custom_call.1} parent=99 // pred_check_branch
          %746 = sbr.rel (%p744) target = $region124
        $region123: #{tpu_custom_call.1} parent=99 // pred_region
          %747 = dma.done [#allocation14], 16
        $region124: #{tpu_custom_call.1} parent=99 // pred_fallthru
          _
        // Predicated region
        $region125: #{tpu_custom_call.1} parent=99 // pred_check
          %p748 = pneg %p248
        $region126: #{tpu_custom_call.1} parent=99 // pred_check_branch
          %750 = sbr.rel (%p748) target = $region128
        $region127: #{tpu_custom_call.1} parent=99 // pred_region
          %751 = dma.done [#allocation14], 16
        $region128: #{tpu_custom_call.1} parent=99 // pred_fallthru
          _
        // Predicated region
        $region129: #{tpu_custom_call.1} parent=99 // pred_check
          %p752 = pneg %p269
        $region130: #{tpu_custom_call.1} parent=99 // pred_check_branch
          %754 = sbr.rel (%p752) target = $region132
        $region131: #{tpu_custom_call.1} parent=99 // pred_region
          %755 = dma.done [#allocation17], 16
        $region132: #{tpu_custom_call.1} parent=99 // pred_fallthru
          _
        // Predicated region
        $region133: #{tpu_custom_call.1} parent=99 // pred_check
          %p756 = pneg %p311
        $region134: #{tpu_custom_call.1} parent=99 // pred_check_branch
          %758 = sbr.rel (%p756) target = $region136
        $region135: #{tpu_custom_call.1} parent=99 // pred_region
          %759 = dma.done [#allocation17], 128
        $region136: #{tpu_custom_call.1} parent=99 // pred_fallthru
          _
        // Predicated region
        $region137: #{tpu_custom_call.1} parent=99 // pred_check
          %p760 = pneg %p332
        $region138: #{tpu_custom_call.1} parent=99 // pred_check_branch
          %762 = sbr.rel (%p760) target = $region140
        $region139: #{tpu_custom_call.1} parent=99 // pred_region
          %763 = dma.done [#allocation20], 256
        $region140: #{tpu_custom_call.1} parent=99 // pred_fallthru
          _
        // Predicated region
        $region141: #{tpu_custom_call.1} parent=99 // pred_check
          %p764 = pneg %p353
        $region142: #{tpu_custom_call.1} parent=99 // pred_check_branch
          %766 = sbr.rel (%p764) target = $region144
        $region143: #{tpu_custom_call.1} parent=99 // pred_region
          %767 = dma.done [#allocation20], 16
        $region144: #{tpu_custom_call.1} parent=99 // pred_fallthru
          _
        // Predicated region
        $region145: #{tpu_custom_call.1} parent=99 // pred_check
          %p768 = pneg %p374
        $region146: #{tpu_custom_call.1} parent=99 // pred_check_branch
          %770 = sbr.rel (%p768) target = $region148
        $region147: #{tpu_custom_call.1} parent=99 // pred_region
          %771 = dma.done [#allocation23], 16
        $region148: #{tpu_custom_call.1} parent=99 // pred_fallthru
          _
        // Predicated region
        $region149: #{tpu_custom_call.1} parent=99 // pred_check
          %p772 = pneg %p395
        $region150: #{tpu_custom_call.1} parent=99 // pred_check_branch
          %774 = sbr.rel (%p772) target = $region152
        $region151: #{tpu_custom_call.1} parent=99 // pred_region
          %775 = dma.done [#allocation23], 16
        $region152: #{tpu_custom_call.1} parent=99 // pred_fallthru
          _
        // Predicated region
        $region153: #{tpu_custom_call.1} parent=99 // pred_check
          %p776 = pneg %p437
        $region154: #{tpu_custom_call.1} parent=99 // pred_check_branch
          %778 = sbr.rel (%p776) target = $region156
        $region155: #{tpu_custom_call.1} parent=99 // pred_region
          %779 = dma.done [#allocation26], 32
        $region156: #{tpu_custom_call.1} parent=99 // pred_fallthru
          _
        %p780 = scmp.lt.s32.totalorder %s46, 1
        %s781 = scalar_select %p780, %s46, 1
        %s782 = smul.addr %s781, 2
        %s783 = smul.addr %s782, 8
        %s784 = scalar_lea.vmem %s0, %s783
        %p785 = pneg %p75
        %p786 = pneg %p72
        %p787 = scmp.lt.s32.totalorder %s46, 1
        %s788 = scalar_select %p787, %s46, 1
        %s789 = smul.addr %s788, 8
        %s790 = scalar_lea.vmem %s1, %s789
        %p791 = pneg %p101
        %p792 = pneg %p98
        %p793 = pneg %p122
        %p794 = pneg %p119
        %p795 = pneg %p143
        %p796 = pneg %p140
        %p797 = pneg %p164
        %p798 = pneg %p161
        %p799 = pneg %p185
        %p800 = pneg %p182
        %p801 = pneg %p206
        %p802 = pneg %p203
        %p803 = pneg %p227
        %p804 = pneg %p224
        %p805 = pneg %p248
        %p806 = pneg %p245
        %p807 = pneg %p269
        %p808 = pneg %p266
        %p809 = pneg %p290
        %p810 = pneg %p287
        %p811 = pneg %p311
        %p812 = pneg %p308
        %p813 = pneg %p332
        %p814 = pneg %p329
        %p815 = pneg %p353
        %p816 = pneg %p350
        %p817 = pneg %p374
        %p818 = pneg %p371
        %p819 = pneg %p395
        %p820 = pneg %p392
        %p821 = pneg %p416
        %p822 = pneg %p413
        %p823 = pneg %p437
        %p824 = pneg %p434
        %p825 = pneg %p458
        %p826 = pneg %p455
        %p827 = pneg %p479
        %p828 = pneg %p476
        %p829 = pneg %p507
        %p830 = pneg %p504
        %s831 = sand.u32 %s494, 1
        %s832 = scalar_lea.sflag [#allocation6], %s831
        %s833 = sand.u32 %s494, 1
        %s834 = smul.addr %s833, 8
        %s835 = scalar_lea.vmem [#allocation27], %s834
        %p836 = scmp.lt.s32.totalorder %s46, 1
        %s837 = scalar_select %p836, %s46, 1
        %s838 = smul.addr %s837, 2
        %s839 = smul.addr %s838, 8
        %s840 = scalar_lea.vmem %s0, %s839
        %p841 = scmp.lt.s32.totalorder %s46, 1
        %s842 = scalar_select %p841, %s46, 1
        %s843 = smul.addr %s842, 8
        %s844 = scalar_lea.vmem %s1, %s843
        %p846 = scmp.eq.s32.totalorder %s47, 0
        // Predicated region
        $region157: #{tpu_custom_call.1} parent=99 // pred_check
          %p847 = pneg %p846
        $region158: #{tpu_custom_call.1} parent=99 // pred_check_branch
          %849 = sbr.rel (%p847) target = $region160
        $region159: #{tpu_custom_call.1} parent=99 // pred_region
          %v850 = vld [vmem:[%s840] sm:$0xff]
          %v851 = vld [vmem:[%s840 + $0x8] sm:$0xff]
          %v852 = vld [vmem:[#allocation4] sm:$0x1]
          %v853 = vld [vmem:[#allocation7] sm:$0x1]
          %vm854 = vcmask 261120
          %v855 = vsel %vm854, %v850, 0.0
          %856 = vadd.xlane.f32.xlu0 %v855
          %v857 = vpop.xlane.xlu0 %856
          %v858 = vsel %vm854, %v851, 0.0
          %859 = vadd.xlane.f32.xlu0 %v858
          %v860 = vpop.xlane.xlu0 %859
          %v861 = vrcp.pop 32.0
          %v862 = vmul.f32 %v857, %v861
          %v863 = vmul.f32 %v860, %v861
          %v864 = vsub.f32 %v850, %v862
          %v865 = vsub.f32 %v851, %v863
          %v866 = vmul.f32 %v864, %v864
          %v867 = vmul.f32 %v865, %v865
          %v868 = vsel %vm854, %v866, 0.0
          %869 = vadd.xlane.f32.xlu0 %v868
          %v870 = vpop.xlane.xlu0 %869
          %v871 = vsel %vm854, %v867, 0.0
          %872 = vadd.xlane.f32.xlu0 %v871
          %v873 = vpop.xlane.xlu0 %872
          %v874 = vmul.f32 %v870, %v861
          %v875 = vmul.f32 %v873, %v861
          %v876 = vadd.f32 %v874, 1e-05
          %v877 = vadd.f32 %v875, 1e-05
          %v878 = vrsqrt.pop %v876
          %v879 = vrsqrt.pop %v877
          %v880 = vmul.f32 %v864, %v878
          %v881 = vmul.f32 %v865, %v879
          %v883 = vlaneseq
          %v884 = vshrl.u32 %v883, 7
          %v885 = vsub.s32 0, %v884
          %v886 = vrot.slane %v852, %v885
          %v888 = vmul.f32 %v880, %v886
          %v889 = vmul.f32 %v881, %v886
          %v891 = vlaneseq
          %v892 = vshrl.u32 %v891, 7
          %v893 = vsub.s32 0, %v892
          %v894 = vrot.slane %v853, %v893
          %v896 = vadd.f32 %v888, %v894
          %v897 = vadd.f32 %v889, %v894
          %v898 = vpack.c.bf16 %v897, %v896
          %v899 = vld [vmem:[#allocation10] sm:$0xf]
          %v900 = vld [vmem:[#allocation10 + $0x4] sm:$0xf]
          %v901 = vld [vmem:[#allocation10 + $0x8] sm:$0xf]
          %v902 = vld [vmem:[#allocation10 + $0xc] sm:$0xf]
          %v907 = vunpack.c.l.b16 %v899
          %v908 = vunpack.c.l.b16 %v900
          %v909 = vunpack.c.l.b16 %v901
          %v910 = vunpack.c.l.b16 %v902
          %v911 = vpack.c.b16 %v908, %v907
          %v912 = vpack.c.b16 %v910, %v909
          %v916 = vsel %vm854, %v898, 0
          %918 = vmatprep.subr.bf16.mxu0 0
          %919 = vmatpush1.bf16.msra.mxu0 0
          %920 = vmatprep.subr.bf16.mxu0 0
          %921 = vmatpush1.bf16.msra.mxu0 0
          %922 = vmatprep.subr.bf16.mxu0 0
          %923 = vmatpush1.bf16.msra.mxu0 0
          %924 = vmatprep.subr.bf16.mxu0 0
          %925 = vmatpush1.bf16.msra.mxu0 0
          %926 = vmatprep.subr.bf16.mxu0 0
          %927 = vmatpush1.bf16.msra.mxu0 0
          %928 = vmatprep.subr.bf16.mxu0 0
          %929 = vmatpush1.bf16.msra.mxu0 0
          %930 = vmatprep.subr.bf16.mxu0 0
          %931 = vmatpush1.bf16.msra.mxu0 %v912
          %932 = vmatprep.subr.bf16.mxu0 0
          %933 = vmatpush1.bf16.msra.mxu0 %v911
          %934 = vmatprep.subr.bf16.mxu0 0
          %935 = vmatpush2.bf16.msra.mxu0 0
          %936 = vmatprep.subr.bf16.mxu0 0
          %937 = vmatpush2.bf16.msra.mxu0 0
          %938 = vmatprep.subr.bf16.mxu0 0
          %939 = vmatpush2.bf16.msra.mxu0 0
          %940 = vmatprep.subr.bf16.mxu0 0
          %941 = vmatpush2.bf16.msra.mxu0 0
          %942 = vmatprep.subr.bf16.mxu0 0
          %943 = vmatpush2.bf16.msra.mxu0 0
          %944 = vmatprep.subr.bf16.mxu0 0
          %945 = vmatpush2.bf16.msra.mxu0 0
          %946 = vmatprep.subr.bf16.mxu0 0
          %947 = vmatpush2.bf16.msra.mxu0 0
          %948 = vmatprep.subr.bf16.mxu0 0
          %949 = vmatpush2.bf16.msra.mxu0 0
          %950 = vmatprep.mubr.bf16.mxu0 0
          %951 = vmatmul.mubr.bf16.gmra.mxu0 %v916
          %v952 = vpop.f32.mrf.mxu0
          %v953 = vadd.f32 0.0, %v952
          %v954 = vpop.f32.mrf.mxu0
          %v955 = vpop.f32.mrf.mxu0
          %v956 = vadd.f32 0.0, %v955
          %v957 = vpop.f32.mrf.mxu0
          %958 = vdwg.mxu0
          %v959 = vpack.c.bf16 %v956, %v953
          %v961 = vunpack.c.l.b16 %v959
          %v962 = vunpack.c.h.b16 %v959
          %v963 = vpack.c.b16 %v961, %v961
          %v964 = vpack.c.b16 %v962, %v962
          %vm967 = vcmask 519168
          %968 = vst.msk [vmem:[#allocation2] sm:$0xf] %vm967, %v963
          %969 = vst.msk [vmem:[#allocation2 + $0x4] sm:$0xf] %vm967, %v964
          %v970 = vld [vmem:[%s844] sm:$0xff]
          %v971 = vpack.c.bf16 %v970, %v970
          %v972 = vld [vmem:[#allocation18] sm:$0xf]
          %v973 = vld [vmem:[#allocation18 + $0x4] sm:$0xf]
          %v976 = vunpack.c.l.b16 %v972
          %v977 = vunpack.c.l.b16 %v973
          %v978 = vpack.c.b16 %v977, %v976
          %vm980 = vcmask 130048
          %v982 = vsel %vm980, %v971, 0
          %984 = vmatprep.subr.bf16.mxu0 0
          %985 = vmatpush1.bf16.msra.mxu0 0
          %986 = vmatprep.subr.bf16.mxu0 0
          %987 = vmatpush1.bf16.msra.mxu0 0
          %988 = vmatprep.subr.bf16.mxu0 0
          %989 = vmatpush1.bf16.msra.mxu0 0
          %990 = vmatprep.subr.bf16.mxu0 0
          %991 = vmatpush1.bf16.msra.mxu0 0
          %992 = vmatprep.subr.bf16.mxu0 0
          %993 = vmatpush1.bf16.msra.mxu0 0
          %994 = vmatprep.subr.bf16.mxu0 0
          %995 = vmatpush1.bf16.msra.mxu0 0
          %996 = vmatprep.subr.bf16.mxu0 0
          %997 = vmatpush1.bf16.msra.mxu0 0
          %998 = vmatprep.subr.bf16.mxu0 0
          %999 = vmatpush1.bf16.msra.mxu0 %v978
          %1000 = vmatprep.subr.bf16.mxu0 0
          %1001 = vmatpush2.bf16.msra.mxu0 0
          %1002 = vmatprep.subr.bf16.mxu0 0
          %1003 = vmatpush2.bf16.msra.mxu0 0
          %1004 = vmatprep.subr.bf16.mxu0 0
          %1005 = vmatpush2.bf16.msra.mxu0 0
          %1006 = vmatprep.subr.bf16.mxu0 0
          %1007 = vmatpush2.bf16.msra.mxu0 0
          %1008 = vmatprep.subr.bf16.mxu0 0
          %1009 = vmatpush2.bf16.msra.mxu0 0
          %1010 = vmatprep.subr.bf16.mxu0 0
          %1011 = vmatpush2.bf16.msra.mxu0 0
          %1012 = vmatprep.subr.bf16.mxu0 0
          %1013 = vmatpush2.bf16.msra.mxu0 0
          %1014 = vmatprep.subr.bf16.mxu0 0
          %1015 = vmatpush2.bf16.msra.mxu0 0
          %1016 = vmatprep.mubr.bf16.mxu0 0
          %1017 = vmatmul.mubr.bf16.gmra.mxu0 %v982
          %v1018 = vpop.f32.mrf.mxu0
          %v1019 = vadd.f32 0.0, %v1018
          %v1020 = vpop.f32.mrf.mxu0
          %v1021 = vpop.f32.mrf.mxu0
          %v1022 = vpop.f32.mrf.mxu0
          %1023 = vdwg.mxu0
          %v1024 = vpack.c.bf16 %v1019, %v1019
          %1025 = vst.msk [vmem:[#allocation3] sm:$0xf] %vm967, %v1024
        $region160: #{tpu_custom_call.1} parent=99 // pred_fallthru
          _
        %s1026 = smul.u32 %s47, 8
        %s1027 = scalar_lea.vmem %s840, %s1026
        %v1028 = vld [vmem:[%s1027] sm:$0xff]
        %v1029 = vld [vmem:[#allocation4] sm:$0x1]
        %v1030 = vld [vmem:[#allocation7] sm:$0x1]
        %vm1031 = vcmask 261120
        %v1032 = vsel %vm1031, %v1028, 0.0
        %1033 = vadd.xlane.f32.xlu0 %v1032
        %v1034 = vpop.xlane.xlu0 %1033
        %v1035 = vrcp.pop 32.0
        %v1036 = vmul.f32 %v1034, %v1035
        %v1037 = vsub.f32 %v1028, %v1036
        %v1038 = vmul.f32 %v1037, %v1037
        %v1039 = vsel %vm1031, %v1038, 0.0
        %1040 = vadd.xlane.f32.xlu0 %v1039
        %v1041 = vpop.xlane.xlu0 %1040
        %v1042 = vmul.f32 %v1041, %v1035
        %v1043 = vadd.f32 %v1042, 1e-05
        %v1044 = vrsqrt.pop %v1043
        %v1045 = vmul.f32 %v1037, %v1044
        %v1047 = vlaneseq
        %v1048 = vshrl.u32 %v1047, 7
        %v1049 = vsub.s32 0, %v1048
        %v1050 = vrot.slane %v1029, %v1049
        %v1052 = vmul.f32 %v1045, %v1050
        %v1054 = vlaneseq
        %v1055 = vshrl.u32 %v1054, 7
        %v1056 = vsub.s32 0, %v1055
        %v1057 = vrot.slane %v1030, %v1056
        %v1059 = vadd.f32 %v1052, %v1057
        %v1060 = vld [vmem:[#allocation9] sm:$0xf]
        %v1061 = vld [vmem:[#allocation9 + $0x4] sm:$0xf]
        %v1062 = vld [vmem:[#allocation9 + $0x8] sm:$0xf]
        %v1063 = vld [vmem:[#allocation9 + $0xc] sm:$0xf]
        %v1064 = vld [vmem:[#allocation12] sm:$0xf]
        %v1065 = vld [vmem:[#allocation12 + $0x4] sm:$0xf]
        %v1066 = vld [vmem:[#allocation12 + $0x8] sm:$0xf]
        %v1067 = vld [vmem:[#allocation12 + $0xc] sm:$0xf]
        %v1068 = vld [vmem:[#allocation13] sm:$0x1]
        %v1069 = vpack.c.bf16 %v1059, %v1059
        %v1074 = vunpack.c.l.b16 %v1060
        %v1075 = vunpack.c.l.b16 %v1061
        %v1076 = vunpack.c.l.b16 %v1062
        %v1077 = vunpack.c.l.b16 %v1063
        %v1078 = vpack.c.b16 %v1075, %v1074
        %v1079 = vpack.c.b16 %v1077, %v1076
        %v1083 = vsel %vm1031, %v1069, 0
        %1085 = vmatprep.subr.bf16.mxu0 0
        %1086 = vmatpush1.bf16.msra.mxu0 0
        %1087 = vmatprep.subr.bf16.mxu0 0
        %1088 = vmatpush1.bf16.msra.mxu0 0
        %1089 = vmatprep.subr.bf16.mxu0 0
        %1090 = vmatpush1.bf16.msra.mxu0 0
        %1091 = vmatprep.subr.bf16.mxu0 0
        %1092 = vmatpush1.bf16.msra.mxu0 0
        %1093 = vmatprep.subr.bf16.mxu0 0
        %1094 = vmatpush1.bf16.msra.mxu0 0
        %1095 = vmatprep.subr.bf16.mxu0 0
        %1096 = vmatpush1.bf16.msra.mxu0 0
        %1097 = vmatprep.subr.bf16.mxu0 0
        %1098 = vmatpush1.bf16.msra.mxu0 %v1079
        %1099 = vmatprep.subr.bf16.mxu0 0
        %1100 = vmatpush1.bf16.msra.mxu0 %v1078
        %1101 = vmatprep.subr.bf16.mxu0 0
        %1102 = vmatpush2.bf16.msra.mxu0 0
        %1103 = vmatprep.subr.bf16.mxu0 0
        %1104 = vmatpush2.bf16.msra.mxu0 0
        %1105 = vmatprep.subr.bf16.mxu0 0
        %1106 = vmatpush2.bf16.msra.mxu0 0
        %1107 = vmatprep.subr.bf16.mxu0 0
        %1108 = vmatpush2.bf16.msra.mxu0 0
        %1109 = vmatprep.subr.bf16.mxu0 0
        %1110 = vmatpush2.bf16.msra.mxu0 0
        %1111 = vmatprep.subr.bf16.mxu0 0
        %1112 = vmatpush2.bf16.msra.mxu0 0
        %1113 = vmatprep.subr.bf16.mxu0 0
        %1114 = vmatpush2.bf16.msra.mxu0 0
        %1115 = vmatprep.subr.bf16.mxu0 0
        %1116 = vmatpush2.bf16.msra.mxu0 0
        %1117 = vmatprep.mubr.bf16.mxu0 0
        %1118 = vmatmul.mubr.bf16.gmra.mxu0 %v1083
        %v1119 = vpop.f32.mrf.mxu0
        %v1120 = vadd.f32 0.0, %v1119
        %v1121 = vpop.f32.mrf.mxu0
        %v1122 = vpop.f32.mrf.mxu0
        %v1123 = vpop.f32.mrf.mxu0
        %1124 = vdwg.mxu0
        %v1125 = vpack.c.bf16 %v1120, %v1120
        %v1126 = vld [vmem:[#allocation2] sm:$0xf]
        %v1127 = vld [vmem:[#allocation2 + $0x4] sm:$0xf]
        %v1130 = vunpack.c.l.b16 %v1126
        %v1131 = vunpack.c.l.b16 %v1127
        %v1132 = vpack.c.b16 %v1131, %v1130
        %vm1133 = vcmask 64512
        %v1135 = vsel %vm1133, %v1125, 0
        %v1138 = vsel %vm1133, %v1132, 0
        %1140 = vmatprep.subr.bf16.mxu0 0
        %1141 = vmatpush1.bf16.xpose.msra.mxu0 0
        %1142 = vmatprep.subr.bf16.mxu0 0
        %1143 = vmatpush1.bf16.xpose.msra.mxu0 0
        %1144 = vmatprep.subr.bf16.mxu0 0
        %1145 = vmatpush1.bf16.xpose.msra.mxu0 0
        %1146 = vmatprep.subr.bf16.mxu0 0
        %1147 = vmatpush1.bf16.xpose.msra.mxu0 0
        %1148 = vmatprep.subr.bf16.mxu0 0
        %1149 = vmatpush1.bf16.xpose.msra.mxu0 0
        %1150 = vmatprep.subr.bf16.mxu0 0
        %1151 = vmatpush1.bf16.xpose.msra.mxu0 0
        %1152 = vmatprep.subr.bf16.mxu0 0
        %1153 = vmatpush1.bf16.xpose.msra.mxu0 0
        %1154 = vmatprep.subr.bf16.mxu0 0
        %1155 = vmatpush1.bf16.xpose.msra.mxu0 %v1138
        %1156 = vmatprep.subr.bf16.mxu0 0
        %1157 = vmatpush2.bf16.xpose.msra.mxu0 0
        %1158 = vmatprep.subr.bf16.mxu0 0
        %1159 = vmatpush2.bf16.xpose.msra.mxu0 0
        %1160 = vmatprep.subr.bf16.mxu0 0
        %1161 = vmatpush2.bf16.xpose.msra.mxu0 0
        %1162 = vmatprep.subr.bf16.mxu0 0
        %1163 = vmatpush2.bf16.xpose.msra.mxu0 0
        %1164 = vmatprep.subr.bf16.mxu0 0
        %1165 = vmatpush2.bf16.xpose.msra.mxu0 0
        %1166 = vmatprep.subr.bf16.mxu0 0
        %1167 = vmatpush2.bf16.xpose.msra.mxu0 0
        %1168 = vmatprep.subr.bf16.mxu0 0
        %1169 = vmatpush2.bf16.xpose.msra.mxu0 0
        %1170 = vmatprep.subr.bf16.mxu0 0
        %1171 = vmatpush2.bf16.xpose.msra.mxu0 0
        %1172 = vmatprep.mubr.bf16.mxu0 0
        %1173 = vmatmul.mubr.bf16.gmra.mxu0 %v1135
        %v1174 = vpop.f32.mrf.mxu0
        %v1175 = vadd.f32 0.0, %v1174
        %v1176 = vpop.f32.mrf.mxu0
        %v1177 = vpop.f32.mrf.mxu0
        %v1178 = vpop.f32.mrf.mxu0
        %1179 = vdwg.mxu0
        %v1180 = vmul.f32 %v1175, 0.35355338
        %vm1181 = vcmask 130048
        %v1182 = vsel %vm1181, %v1180, -inf
        %1183 = vmax.xlane.f32.xlu0 %v1182
        %v1184 = vpop.xlane.xlu0 %1183
        %v1185 = vsub.f32 %v1180, %v1184
        %v1186 = vmul.f32 %v1185, 1.442695
        %v1187 = vpow.pop %v1186
        %v1188 = vsel %vm1181, %v1187, 0.0
        %1189 = vadd.xlane.f32.xlu0 %v1188
        %v1190 = vpop.xlane.xlu0 %1189
        %v1191 = vrcp.pop %v1190
        %v1192 = vmul.f32 %v1187, %v1191
        %v1193 = vpack.c.bf16 %v1192, %v1192
        %1194 = vrot.lane.b32.xlu0 %v1132, 96
        %v1195 = vpop.permute.xlu0 %1194
        %v1198 = vsel %vm1181, %v1193, 0
        %1200 = vmatprep.subr.bf16.mxu0 0
        %1201 = vmatpush1.bf16.msra.mxu0 0
        %1202 = vmatprep.subr.bf16.mxu0 0
        %1203 = vmatpush1.bf16.msra.mxu0 0
        %1204 = vmatprep.subr.bf16.mxu0 0
        %1205 = vmatpush1.bf16.msra.mxu0 0
        %1206 = vmatprep.subr.bf16.mxu0 0
        %1207 = vmatpush1.bf16.msra.mxu0 0
        %1208 = vmatprep.subr.bf16.mxu0 0
        %1209 = vmatpush1.bf16.msra.mxu0 0
        %1210 = vmatprep.subr.bf16.mxu0 0
        %1211 = vmatpush1.bf16.msra.mxu0 0
        %1212 = vmatprep.subr.bf16.mxu0 0
        %1213 = vmatpush1.bf16.msra.mxu0 0
        %1214 = vmatprep.subr.bf16.mxu0 0
        %1215 = vmatpush1.bf16.msra.mxu0 %v1195
        %1216 = vmatprep.subr.bf16.mxu0 0
        %1217 = vmatpush2.bf16.msra.mxu0 0
        %1218 = vmatprep.subr.bf16.mxu0 0
        %1219 = vmatpush2.bf16.msra.mxu0 0
        %1220 = vmatprep.subr.bf16.mxu0 0
        %1221 = vmatpush2.bf16.msra.mxu0 0
        %1222 = vmatprep.subr.bf16.mxu0 0
        %1223 = vmatpush2.bf16.msra.mxu0 0
        %1224 = vmatprep.subr.bf16.mxu0 0
        %1225 = vmatpush2.bf16.msra.mxu0 0
        %1226 = vmatprep.subr.bf16.mxu0 0
        %1227 = vmatpush2.bf16.msra.mxu0 0
        %1228 = vmatprep.subr.bf16.mxu0 0
        %1229 = vmatpush2.bf16.msra.mxu0 0
        %1230 = vmatprep.subr.bf16.mxu0 0
        %1231 = vmatpush2.bf16.msra.mxu0 0
        %1232 = vmatprep.mubr.bf16.mxu0 0
        %1233 = vmatmul.mubr.bf16.gmra.mxu0 %v1198
        %v1234 = vpop.f32.mrf.mxu0
        %v1235 = vadd.f32 0.0, %v1234
        %v1236 = vpop.f32.mrf.mxu0
        %v1237 = vpop.f32.mrf.mxu0
        %v1238 = vpop.f32.mrf.mxu0
        %1239 = vdwg.mxu0
        %v1240 = vpack.c.bf16 %v1235, %v1235
        %1242 = vrot.lane.b32.xlu0 %v1125, 120
        %v1243 = vpop.permute.xlu0 %1242
        %1244 = vrot.lane.b32.xlu0 %v1132, 120
        %v1245 = vpop.permute.xlu0 %1244
        %v1247 = vsel %vm1133, %v1243, 0
        %v1250 = vsel %vm1133, %v1245, 0
        %1252 = vmatprep.subr.bf16.mxu0 0
        %1253 = vmatpush1.bf16.xpose.msra.mxu0 0
        %1254 = vmatprep.subr.bf16.mxu0 0
        %1255 = vmatpush1.bf16.xpose.msra.mxu0 0
        %1256 = vmatprep.subr.bf16.mxu0 0
        %1257 = vmatpush1.bf16.xpose.msra.mxu0 0
        %1258 = vmatprep.subr.bf16.mxu0 0
        %1259 = vmatpush1.bf16.xpose.msra.mxu0 0
        %1260 = vmatprep.subr.bf16.mxu0 0
        %1261 = vmatpush1.bf16.xpose.msra.mxu0 0
        %1262 = vmatprep.subr.bf16.mxu0 0
        %1263 = vmatpush1.bf16.xpose.msra.mxu0 0
        %1264 = vmatprep.subr.bf16.mxu0 0
        %1265 = vmatpush1.bf16.xpose.msra.mxu0 0
        %1266 = vmatprep.subr.bf16.mxu0 0
        %1267 = vmatpush1.bf16.xpose.msra.mxu0 %v1250
        %1268 = vmatprep.subr.bf16.mxu0 0
        %1269 = vmatpush2.bf16.xpose.msra.mxu0 0
        %1270 = vmatprep.subr.bf16.mxu0 0
        %1271 = vmatpush2.bf16.xpose.msra.mxu0 0
        %1272 = vmatprep.subr.bf16.mxu0 0
        %1273 = vmatpush2.bf16.xpose.msra.mxu0 0
        %1274 = vmatprep.subr.bf16.mxu0 0
        %1275 = vmatpush2.bf16.xpose.msra.mxu0 0
        %1276 = vmatprep.subr.bf16.mxu0 0
        %1277 = vmatpush2.bf16.xpose.msra.mxu0 0
        %1278 = vmatprep.subr.bf16.mxu0 0
        %1279 = vmatpush2.bf16.xpose.msra.mxu0 0
        %1280 = vmatprep.subr.bf16.mxu0 0
        %1281 = vmatpush2.bf16.xpose.msra.mxu0 0
        %1282 = vmatprep.subr.bf16.mxu0 0
        %1283 = vmatpush2.bf16.xpose.msra.mxu0 0
        %1284 = vmatprep.mubr.bf16.mxu0 0
        %1285 = vmatmul.mubr.bf16.gmra.mxu0 %v1247
        %v1286 = vpop.f32.mrf.mxu0
        %v1287 = vadd.f32 0.0, %v1286
        %v1288 = vpop.f32.mrf.mxu0
        %v1289 = vpop.f32.mrf.mxu0
        %v1290 = vpop.f32.mrf.mxu0
        %1291 = vdwg.mxu0
        %v1292 = vmul.f32 %v1287, 0.35355338
        %v1293 = vsel %vm1181, %v1292, -inf
        %1294 = vmax.xlane.f32.xlu0 %v1293
        %v1295 = vpop.xlane.xlu0 %1294
        %v1296 = vsub.f32 %v1292, %v1295
        %v1297 = vmul.f32 %v1296, 1.442695
        %v1298 = vpow.pop %v1297
        %v1299 = vsel %vm1181, %v1298, 0.0
        %1300 = vadd.xlane.f32.xlu0 %v1299
        %v1301 = vpop.xlane.xlu0 %1300
        %v1302 = vrcp.pop %v1301
        %v1303 = vmul.f32 %v1298, %v1302
        %v1304 = vpack.c.bf16 %v1303, %v1303
        %1305 = vrot.lane.b32.xlu0 %v1132, 88
        %v1306 = vpop.permute.xlu0 %1305
        %v1309 = vsel %vm1181, %v1304, 0
        %1311 = vmatprep.subr.bf16.mxu0 0
        %1312 = vmatpush1.bf16.msra.mxu0 0
        %1313 = vmatprep.subr.bf16.mxu0 0
        %1314 = vmatpush1.bf16.msra.mxu0 0
        %1315 = vmatprep.subr.bf16.mxu0 0
        %1316 = vmatpush1.bf16.msra.mxu0 0
        %1317 = vmatprep.subr.bf16.mxu0 0
        %1318 = vmatpush1.bf16.msra.mxu0 0
        %1319 = vmatprep.subr.bf16.mxu0 0
        %1320 = vmatpush1.bf16.msra.mxu0 0
        %1321 = vmatprep.subr.bf16.mxu0 0
        %1322 = vmatpush1.bf16.msra.mxu0 0
        %1323 = vmatprep.subr.bf16.mxu0 0
        %1324 = vmatpush1.bf16.msra.mxu0 0
        %1325 = vmatprep.subr.bf16.mxu0 0
        %1326 = vmatpush1.bf16.msra.mxu0 %v1306
        %1327 = vmatprep.subr.bf16.mxu0 0
        %1328 = vmatpush2.bf16.msra.mxu0 0
        %1329 = vmatprep.subr.bf16.mxu0 0
        %1330 = vmatpush2.bf16.msra.mxu0 0
        %1331 = vmatprep.subr.bf16.mxu0 0
        %1332 = vmatpush2.bf16.msra.mxu0 0
        %1333 = vmatprep.subr.bf16.mxu0 0
        %1334 = vmatpush2.bf16.msra.mxu0 0
        %1335 = vmatprep.subr.bf16.mxu0 0
        %1336 = vmatpush2.bf16.msra.mxu0 0
        %1337 = vmatprep.subr.bf16.mxu0 0
        %1338 = vmatpush2.bf16.msra.mxu0 0
        %1339 = vmatprep.subr.bf16.mxu0 0
        %1340 = vmatpush2.bf16.msra.mxu0 0
        %1341 = vmatprep.subr.bf16.mxu0 0
        %1342 = vmatpush2.bf16.msra.mxu0 0
        %1343 = vmatprep.mubr.bf16.mxu0 0
        %1344 = vmatmul.mubr.bf16.gmra.mxu0 %v1309
        %v1345 = vpop.f32.mrf.mxu0
        %v1346 = vadd.f32 0.0, %v1345
        %v1347 = vpop.f32.mrf.mxu0
        %v1348 = vpop.f32.mrf.mxu0
        %v1349 = vpop.f32.mrf.mxu0
        %1350 = vdwg.mxu0
        %v1351 = vpack.c.bf16 %v1346, %v1346
        %1352 = vrot.lane.b32.xlu0 %v1125, 112
        %v1353 = vpop.permute.xlu0 %1352
        %1354 = vrot.lane.b32.xlu0 %v1132, 112
        %v1355 = vpop.permute.xlu0 %1354
        %v1357 = vsel %vm1133, %v1353, 0
        %v1360 = vsel %vm1133, %v1355, 0
        %1362 = vmatprep.subr.bf16.mxu0 0
        %1363 = vmatpush1.bf16.xpose.msra.mxu0 0
        %1364 = vmatprep.subr.bf16.mxu0 0
        %1365 = vmatpush1.bf16.xpose.msra.mxu0 0
        %1366 = vmatprep.subr.bf16.mxu0 0
        %1367 = vmatpush1.bf16.xpose.msra.mxu0 0
        %1368 = vmatprep.subr.bf16.mxu0 0
        %1369 = vmatpush1.bf16.xpose.msra.mxu0 0
        %1370 = vmatprep.subr.bf16.mxu0 0
        %1371 = vmatpush1.bf16.xpose.msra.mxu0 0
        %1372 = vmatprep.subr.bf16.mxu0 0
        %1373 = vmatpush1.bf16.xpose.msra.mxu0 0
        %1374 = vmatprep.subr.bf16.mxu0 0
        %1375 = vmatpush1.bf16.xpose.msra.mxu0 0
        %1376 = vmatprep.subr.bf16.mxu0 0
        %1377 = vmatpush1.bf16.xpose.msra.mxu0 %v1360
        %1378 = vmatprep.subr.bf16.mxu0 0
        %1379 = vmatpush2.bf16.xpose.msra.mxu0 0
        %1380 = vmatprep.subr.bf16.mxu0 0
        %1381 = vmatpush2.bf16.xpose.msra.mxu0 0
        %1382 = vmatprep.subr.bf16.mxu0 0
        %1383 = vmatpush2.bf16.xpose.msra.mxu0 0
        %1384 = vmatprep.subr.bf16.mxu0 0
        %1385 = vmatpush2.bf16.xpose.msra.mxu0 0
        %1386 = vmatprep.subr.bf16.mxu0 0
        %1387 = vmatpush2.bf16.xpose.msra.mxu0 0
        %1388 = vmatprep.subr.bf16.mxu0 0
        %1389 = vmatpush2.bf16.xpose.msra.mxu0 0
        %1390 = vmatprep.subr.bf16.mxu0 0
        %1391 = vmatpush2.bf16.xpose.msra.mxu0 0
        %1392 = vmatprep.subr.bf16.mxu0 0
        %1393 = vmatpush2.bf16.xpose.msra.mxu0 0
        %1394 = vmatprep.mubr.bf16.mxu0 0
        %1395 = vmatmul.mubr.bf16.gmra.mxu0 %v1357
        %v1396 = vpop.f32.mrf.mxu0
        %v1397 = vadd.f32 0.0, %v1396
        %v1398 = vpop.f32.mrf.mxu0
        %v1399 = vpop.f32.mrf.mxu0
        %v1400 = vpop.f32.mrf.mxu0
        %1401 = vdwg.mxu0
        %v1402 = vmul.f32 %v1397, 0.35355338
        %v1403 = vsel %vm1181, %v1402, -inf
        %1404 = vmax.xlane.f32.xlu0 %v1403
        %v1405 = vpop.xlane.xlu0 %1404
        %v1406 = vsub.f32 %v1402, %v1405
        %v1407 = vmul.f32 %v1406, 1.442695
        %v1408 = vpow.pop %v1407
        %v1409 = vsel %vm1181, %v1408, 0.0
        %1410 = vadd.xlane.f32.xlu0 %v1409
        %v1411 = vpop.xlane.xlu0 %1410
        %v1412 = vrcp.pop %v1411
        %v1413 = vmul.f32 %v1408, %v1412
        %v1414 = vpack.c.bf16 %v1413, %v1413
        %1415 = vrot.lane.b32.xlu0 %v1132, 80
        %v1416 = vpop.permute.xlu0 %1415
        %v1419 = vsel %vm1181, %v1414, 0
        %1421 = vmatprep.subr.bf16.mxu0 0
        %1422 = vmatpush1.bf16.msra.mxu0 0
        %1423 = vmatprep.subr.bf16.mxu0 0
        %1424 = vmatpush1.bf16.msra.mxu0 0
        %1425 = vmatprep.subr.bf16.mxu0 0
        %1426 = vmatpush1.bf16.msra.mxu0 0
        %1427 = vmatprep.subr.bf16.mxu0 0
        %1428 = vmatpush1.bf16.msra.mxu0 0
        %1429 = vmatprep.subr.bf16.mxu0 0
        %1430 = vmatpush1.bf16.msra.mxu0 0
        %1431 = vmatprep.subr.bf16.mxu0 0
        %1432 = vmatpush1.bf16.msra.mxu0 0
        %1433 = vmatprep.subr.bf16.mxu0 0
        %1434 = vmatpush1.bf16.msra.mxu0 0
        %1435 = vmatprep.subr.bf16.mxu0 0
        %1436 = vmatpush1.bf16.msra.mxu0 %v1416
        %1437 = vmatprep.subr.bf16.mxu0 0
        %1438 = vmatpush2.bf16.msra.mxu0 0
        %1439 = vmatprep.subr.bf16.mxu0 0
        %1440 = vmatpush2.bf16.msra.mxu0 0
        %1441 = vmatprep.subr.bf16.mxu0 0
        %1442 = vmatpush2.bf16.msra.mxu0 0
        %1443 = vmatprep.subr.bf16.mxu0 0
        %1444 = vmatpush2.bf16.msra.mxu0 0
        %1445 = vmatprep.subr.bf16.mxu0 0
        %1446 = vmatpush2.bf16.msra.mxu0 0
        %1447 = vmatprep.subr.bf16.mxu0 0
        %1448 = vmatpush2.bf16.msra.mxu0 0
        %1449 = vmatprep.subr.bf16.mxu0 0
        %1450 = vmatpush2.bf16.msra.mxu0 0
        %1451 = vmatprep.subr.bf16.mxu0 0
        %1452 = vmatpush2.bf16.msra.mxu0 0
        %1453 = vmatprep.mubr.bf16.mxu0 0
        %1454 = vmatmul.mubr.bf16.gmra.mxu0 %v1419
        %v1455 = vpop.f32.mrf.mxu0
        %v1456 = vadd.f32 0.0, %v1455
        %v1457 = vpop.f32.mrf.mxu0
        %v1458 = vpop.f32.mrf.mxu0
        %v1459 = vpop.f32.mrf.mxu0
        %1460 = vdwg.mxu0
        %v1461 = vpack.c.bf16 %v1456, %v1456
        %1462 = vrot.lane.b32.xlu0 %v1125, 104
        %v1463 = vpop.permute.xlu0 %1462
        %1464 = vrot.lane.b32.xlu0 %v1132, 104
        %v1465 = vpop.permute.xlu0 %1464
        %v1467 = vsel %vm1133, %v1463, 0
        %v1470 = vsel %vm1133, %v1465, 0
        %1472 = vmatprep.subr.bf16.mxu0 0
        %1473 = vmatpush1.bf16.xpose.msra.mxu0 0
        %1474 = vmatprep.subr.bf16.mxu0 0
        %1475 = vmatpush1.bf16.xpose.msra.mxu0 0
        %1476 = vmatprep.subr.bf16.mxu0 0
        %1477 = vmatpush1.bf16.xpose.msra.mxu0 0
        %1478 = vmatprep.subr.bf16.mxu0 0
        %1479 = vmatpush1.bf16.xpose.msra.mxu0 0
        %1480 = vmatprep.subr.bf16.mxu0 0
        %1481 = vmatpush1.bf16.xpose.msra.mxu0 0
        %1482 = vmatprep.subr.bf16.mxu0 0
        %1483 = vmatpush1.bf16.xpose.msra.mxu0 0
        %1484 = vmatprep.subr.bf16.mxu0 0
        %1485 = vmatpush1.bf16.xpose.msra.mxu0 0
        %1486 = vmatprep.subr.bf16.mxu0 0
        %1487 = vmatpush1.bf16.xpose.msra.mxu0 %v1470
        %1488 = vmatprep.subr.bf16.mxu0 0
        %1489 = vmatpush2.bf16.xpose.msra.mxu0 0
        %1490 = vmatprep.subr.bf16.mxu0 0
        %1491 = vmatpush2.bf16.xpose.msra.mxu0 0
        %1492 = vmatprep.subr.bf16.mxu0 0
        %1493 = vmatpush2.bf16.xpose.msra.mxu0 0
        %1494 = vmatprep.subr.bf16.mxu0 0
        %1495 = vmatpush2.bf16.xpose.msra.mxu0 0
        %1496 = vmatprep.subr.bf16.mxu0 0
        %1497 = vmatpush2.bf16.xpose.msra.mxu0 0
        %1498 = vmatprep.subr.bf16.mxu0 0
        %1499 = vmatpush2.bf16.xpose.msra.mxu0 0
        %1500 = vmatprep.subr.bf16.mxu0 0
        %1501 = vmatpush2.bf16.xpose.msra.mxu0 0
        %1502 = vmatprep.subr.bf16.mxu0 0
        %1503 = vmatpush2.bf16.xpose.msra.mxu0 0
        %1504 = vmatprep.mubr.bf16.mxu0 0
        %1505 = vmatmul.mubr.bf16.gmra.mxu0 %v1467
        %v1506 = vpop.f32.mrf.mxu0
        %v1507 = vadd.f32 0.0, %v1506
        %v1508 = vpop.f32.mrf.mxu0
        %v1509 = vpop.f32.mrf.mxu0
        %v1510 = vpop.f32.mrf.mxu0
        %1511 = vdwg.mxu0
        %v1512 = vmul.f32 %v1507, 0.35355338
        %v1513 = vsel %vm1181, %v1512, -inf
        %1514 = vmax.xlane.f32.xlu0 %v1513
        %v1515 = vpop.xlane.xlu0 %1514
        %v1516 = vsub.f32 %v1512, %v1515
        %v1517 = vmul.f32 %v1516, 1.442695
        %v1518 = vpow.pop %v1517
        %v1519 = vsel %vm1181, %v1518, 0.0
        %1520 = vadd.xlane.f32.xlu0 %v1519
        %v1521 = vpop.xlane.xlu0 %1520
        %v1522 = vrcp.pop %v1521
        %v1523 = vmul.f32 %v1518, %v1522
        %v1524 = vpack.c.bf16 %v1523, %v1523
        %1525 = vrot.lane.b32.xlu0 %v1132, 72
        %v1526 = vpop.permute.xlu0 %1525
        %v1529 = vsel %vm1181, %v1524, 0
        %1531 = vmatprep.subr.bf16.mxu0 0
        %1532 = vmatpush1.bf16.msra.mxu0 0
        %1533 = vmatprep.subr.bf16.mxu0 0
        %1534 = vmatpush1.bf16.msra.mxu0 0
        %1535 = vmatprep.subr.bf16.mxu0 0
        %1536 = vmatpush1.bf16.msra.mxu0 0
        %1537 = vmatprep.subr.bf16.mxu0 0
        %1538 = vmatpush1.bf16.msra.mxu0 0
        %1539 = vmatprep.subr.bf16.mxu0 0
        %1540 = vmatpush1.bf16.msra.mxu0 0
        %1541 = vmatprep.subr.bf16.mxu0 0
        %1542 = vmatpush1.bf16.msra.mxu0 0
        %1543 = vmatprep.subr.bf16.mxu0 0
        %1544 = vmatpush1.bf16.msra.mxu0 0
        %1545 = vmatprep.subr.bf16.mxu0 0
        %1546 = vmatpush1.bf16.msra.mxu0 %v1526
        %1547 = vmatprep.subr.bf16.mxu0 0
        %1548 = vmatpush2.bf16.msra.mxu0 0
        %1549 = vmatprep.subr.bf16.mxu0 0
        %1550 = vmatpush2.bf16.msra.mxu0 0
        %1551 = vmatprep.subr.bf16.mxu0 0
        %1552 = vmatpush2.bf16.msra.mxu0 0
        %1553 = vmatprep.subr.bf16.mxu0 0
        %1554 = vmatpush2.bf16.msra.mxu0 0
        %1555 = vmatprep.subr.bf16.mxu0 0
        %1556 = vmatpush2.bf16.msra.mxu0 0
        %1557 = vmatprep.subr.bf16.mxu0 0
        %1558 = vmatpush2.bf16.msra.mxu0 0
        %1559 = vmatprep.subr.bf16.mxu0 0
        %1560 = vmatpush2.bf16.msra.mxu0 0
        %1561 = vmatprep.subr.bf16.mxu0 0
        %1562 = vmatpush2.bf16.msra.mxu0 0
        %1563 = vmatprep.mubr.bf16.mxu0 0
        %1564 = vmatmul.mubr.bf16.gmra.mxu0 %v1529
        %v1565 = vpop.f32.mrf.mxu0
        %v1566 = vadd.f32 0.0, %v1565
        %v1567 = vpop.f32.mrf.mxu0
        %v1568 = vpop.f32.mrf.mxu0
        %v1569 = vpop.f32.mrf.mxu0
        %1570 = vdwg.mxu0
        %v1571 = vpack.c.bf16 %v1566, %v1566
        %1573 = vrot.lane.b32.xlu0 %v1351, 8
        %v1574 = vpop.permute.xlu0 %1573
        %1576 = vrot.lane.b32.xlu0 %v1461, 16
        %v1577 = vpop.permute.xlu0 %1576
        %1579 = vrot.lane.b32.xlu0 %v1571, 24
        %v1580 = vpop.permute.xlu0 %1579
        %v1583 = vsel %vm1133, %v1240, %v1574
        %v1585 = vsel %vm1181, %v1583, %v1577
        %vm1586 = vcmask 195584
        %v1588 = vsel %vm1586, %v1585, %v1580
        %v1590 = vlaneseq
        %v1591 = vshrl.u32 %v1590, 7
        %v1592 = vsub.s32 0, %v1591
        %v1593 = vrot.slane %v1068, %v1592
        %v1599 = vunpack.c.l.b16 %v1064
        %v1600 = vunpack.c.l.b16 %v1065
        %v1601 = vunpack.c.l.b16 %v1066
        %v1602 = vunpack.c.l.b16 %v1067
        %v1603 = vpack.c.b16 %v1600, %v1599
        %v1604 = vpack.c.b16 %v1602, %v1601
        %v1607 = vsel %vm1031, %v1588, 0
        %1609 = vmatprep.subr.bf16.mxu0 0
        %1610 = vmatpush1.bf16.msra.mxu0 0
        %1611 = vmatprep.subr.bf16.mxu0 0
        %1612 = vmatpush1.bf16.msra.mxu0 0
        %1613 = vmatprep.subr.bf16.mxu0 0
        %1614 = vmatpush1.bf16.msra.mxu0 0
        %1615 = vmatprep.subr.bf16.mxu0 0
        %1616 = vmatpush1.bf16.msra.mxu0 0
        %1617 = vmatprep.subr.bf16.mxu0 0
        %1618 = vmatpush1.bf16.msra.mxu0 0
        %1619 = vmatprep.subr.bf16.mxu0 0
        %1620 = vmatpush1.bf16.msra.mxu0 0
        %1621 = vmatprep.subr.bf16.mxu0 0
        %1622 = vmatpush1.bf16.msra.mxu0 %v1604
        %1623 = vmatprep.subr.bf16.mxu0 0
        %1624 = vmatpush1.bf16.msra.mxu0 %v1603
        %1625 = vmatprep.subr.bf16.mxu0 0
        %1626 = vmatpush2.bf16.msra.mxu0 0
        %1627 = vmatprep.subr.bf16.mxu0 0
        %1628 = vmatpush2.bf16.msra.mxu0 0
        %1629 = vmatprep.subr.bf16.mxu0 0
        %1630 = vmatpush2.bf16.msra.mxu0 0
        %1631 = vmatprep.subr.bf16.mxu0 0
        %1632 = vmatpush2.bf16.msra.mxu0 0
        %1633 = vmatprep.subr.bf16.mxu0 0
        %1634 = vmatpush2.bf16.msra.mxu0 0
        %1635 = vmatprep.subr.bf16.mxu0 0
        %1636 = vmatpush2.bf16.msra.mxu0 0
        %1637 = vmatprep.subr.bf16.mxu0 0
        %1638 = vmatpush2.bf16.msra.mxu0 0
        %1639 = vmatprep.subr.bf16.mxu0 0
        %1640 = vmatpush2.bf16.msra.mxu0 0
        %1641 = vmatprep.mubr.bf16.mxu0 0
        %1642 = vmatmul.mubr.bf16.gmra.mxu0 %v1607
        %v1643 = vpop.f32.mrf.mxu0
        %v1644 = vadd.f32 %v1593, %v1643
        %v1645 = vpop.f32.mrf.mxu0
        %v1646 = vpop.f32.mrf.mxu0
        %v1647 = vpop.f32.mrf.mxu0
        %1648 = vdwg.mxu0
        %v1649 = vadd.f32 %v1028, %v1644
        %v1650 = vld [vmem:[#allocation15] sm:$0x1]
        %v1651 = vld [vmem:[#allocation16] sm:$0x1]
        %v1652 = vsel %vm1031, %v1649, 0.0
        %1653 = vadd.xlane.f32.xlu0 %v1652
        %v1654 = vpop.xlane.xlu0 %1653
        %v1655 = vmul.f32 %v1654, %v1035
        %v1656 = vsub.f32 %v1649, %v1655
        %v1657 = vmul.f32 %v1656, %v1656
        %v1658 = vsel %vm1031, %v1657, 0.0
        %1659 = vadd.xlane.f32.xlu0 %v1658
        %v1660 = vpop.xlane.xlu0 %1659
        %v1661 = vmul.f32 %v1660, %v1035
        %v1662 = vadd.f32 %v1661, 1e-05
        %v1663 = vrsqrt.pop %v1662
        %v1664 = vmul.f32 %v1656, %v1663
        %v1666 = vlaneseq
        %v1667 = vshrl.u32 %v1666, 7
        %v1668 = vsub.s32 0, %v1667
        %v1669 = vrot.slane %v1650, %v1668
        %v1671 = vmul.f32 %v1664, %v1669
        %v1673 = vlaneseq
        %v1674 = vshrl.u32 %v1673, 7
        %v1675 = vsub.s32 0, %v1674
        %v1676 = vrot.slane %v1651, %v1675
        %v1678 = vadd.f32 %v1671, %v1676
        %v1679 = vld [vmem:[%s10] sm:$0xf]
        %v1680 = vld [vmem:[%s10 + $0x4] sm:$0xf]
        %v1681 = vld [vmem:[%s10 + $0x8] sm:$0xf]
        %v1682 = vld [vmem:[%s10 + $0xc] sm:$0xf]
        %v1683 = vld [vmem:[#allocation19] sm:$0xf]
        %v1684 = vld [vmem:[#allocation19 + $0x4] sm:$0xf]
        %v1685 = vld [vmem:[#allocation19 + $0x8] sm:$0xf]
        %v1686 = vld [vmem:[#allocation19 + $0xc] sm:$0xf]
        %v1687 = vld [vmem:[#allocation21] sm:$0x1]
        %v1688 = vpack.c.bf16 %v1678, %v1678
        %v1693 = vunpack.c.l.b16 %v1679
        %v1694 = vunpack.c.l.b16 %v1680
        %v1695 = vunpack.c.l.b16 %v1681
        %v1696 = vunpack.c.l.b16 %v1682
        %v1697 = vpack.c.b16 %v1694, %v1693
        %v1698 = vpack.c.b16 %v1696, %v1695
        %v1702 = vsel %vm1031, %v1688, 0
        %1704 = vmatprep.subr.bf16.mxu0 0
        %1705 = vmatpush1.bf16.msra.mxu0 0
        %1706 = vmatprep.subr.bf16.mxu0 0
        %1707 = vmatpush1.bf16.msra.mxu0 0
        %1708 = vmatprep.subr.bf16.mxu0 0
        %1709 = vmatpush1.bf16.msra.mxu0 0
        %1710 = vmatprep.subr.bf16.mxu0 0
        %1711 = vmatpush1.bf16.msra.mxu0 0
        %1712 = vmatprep.subr.bf16.mxu0 0
        %1713 = vmatpush1.bf16.msra.mxu0 0
        %1714 = vmatprep.subr.bf16.mxu0 0
        %1715 = vmatpush1.bf16.msra.mxu0 0
        %1716 = vmatprep.subr.bf16.mxu0 0
        %1717 = vmatpush1.bf16.msra.mxu0 %v1698
        %1718 = vmatprep.subr.bf16.mxu0 0
        %1719 = vmatpush1.bf16.msra.mxu0 %v1697
        %1720 = vmatprep.subr.bf16.mxu0 0
        %1721 = vmatpush2.bf16.msra.mxu0 0
        %1722 = vmatprep.subr.bf16.mxu0 0
        %1723 = vmatpush2.bf16.msra.mxu0 0
        %1724 = vmatprep.subr.bf16.mxu0 0
        %1725 = vmatpush2.bf16.msra.mxu0 0
        %1726 = vmatprep.subr.bf16.mxu0 0
        %1727 = vmatpush2.bf16.msra.mxu0 0
        %1728 = vmatprep.subr.bf16.mxu0 0
        %1729 = vmatpush2.bf16.msra.mxu0 0
        %1730 = vmatprep.subr.bf16.mxu0 0
        %1731 = vmatpush2.bf16.msra.mxu0 0
        %1732 = vmatprep.subr.bf16.mxu0 0
        %1733 = vmatpush2.bf16.msra.mxu0 0
        %1734 = vmatprep.subr.bf16.mxu0 0
        %1735 = vmatpush2.bf16.msra.mxu0 0
        %1736 = vmatprep.mubr.bf16.mxu0 0
        %1737 = vmatmul.mubr.bf16.gmra.mxu0 %v1702
        %v1738 = vpop.f32.mrf.mxu0
        %v1739 = vadd.f32 0.0, %v1738
        %v1740 = vpop.f32.mrf.mxu0
        %v1741 = vpop.f32.mrf.mxu0
        %v1742 = vpop.f32.mrf.mxu0
        %1743 = vdwg.mxu0
        %v1744 = vpack.c.bf16 %v1739, %v1739
        %v1745 = vld [vmem:[#allocation3] sm:$0xf]
        %v1747 = vsel %vm1133, %v1744, 0
        %v1750 = vsel %vm1133, %v1745, 0
        %1752 = vmatprep.subr.bf16.mxu0 0
        %1753 = vmatpush1.bf16.xpose.msra.mxu0 0
        %1754 = vmatprep.subr.bf16.mxu0 0
        %1755 = vmatpush1.bf16.xpose.msra.mxu0 0
        %1756 = vmatprep.subr.bf16.mxu0 0
        %1757 = vmatpush1.bf16.xpose.msra.mxu0 0
        %1758 = vmatprep.subr.bf16.mxu0 0
        %1759 = vmatpush1.bf16.xpose.msra.mxu0 0
        %1760 = vmatprep.subr.bf16.mxu0 0
        %1761 = vmatpush1.bf16.xpose.msra.mxu0 0
        %1762 = vmatprep.subr.bf16.mxu0 0
        %1763 = vmatpush1.bf16.xpose.msra.mxu0 0
        %1764 = vmatprep.subr.bf16.mxu0 0
        %1765 = vmatpush1.bf16.xpose.msra.mxu0 0
        %1766 = vmatprep.subr.bf16.mxu0 0
        %1767 = vmatpush1.bf16.xpose.msra.mxu0 %v1750
        %1768 = vmatprep.subr.bf16.mxu0 0
        %1769 = vmatpush2.bf16.xpose.msra.mxu0 0
        %1770 = vmatprep.subr.bf16.mxu0 0
        %1771 = vmatpush2.bf16.xpose.msra.mxu0 0
        %1772 = vmatprep.subr.bf16.mxu0 0
        %1773 = vmatpush2.bf16.xpose.msra.mxu0 0
        %1774 = vmatprep.subr.bf16.mxu0 0
        %1775 = vmatpush2.bf16.xpose.msra.mxu0 0
        %1776 = vmatprep.subr.bf16.mxu0 0
        %1777 = vmatpush2.bf16.xpose.msra.mxu0 0
        %1778 = vmatprep.subr.bf16.mxu0 0
        %1779 = vmatpush2.bf16.xpose.msra.mxu0 0
        %1780 = vmatprep.subr.bf16.mxu0 0
        %1781 = vmatpush2.bf16.xpose.msra.mxu0 0
        %1782 = vmatprep.subr.bf16.mxu0 0
        %1783 = vmatpush2.bf16.xpose.msra.mxu0 0
        %1784 = vmatprep.mubr.bf16.mxu0 0
        %1785 = vmatmul.mubr.bf16.gmra.mxu0 %v1747
        %v1786 = vpop.f32.mrf.mxu0
        %v1787 = vadd.f32 0.0, %v1786
        %v1788 = vpop.f32.mrf.mxu0
        %v1789 = vpop.f32.mrf.mxu0
        %v1790 = vpop.f32.mrf.mxu0
        %1791 = vdwg.mxu0
        %v1792 = vmul.f32 %v1787, 0.35355338
        %v1793 = vsel %vm1133, %v1792, -inf
        %1794 = vmax.xlane.f32.xlu0 %v1793
        %v1795 = vpop.xlane.xlu0 %1794
        %v1796 = vsub.f32 %v1792, %v1795
        %v1797 = vmul.f32 %v1796, 1.442695
        %v1798 = vpow.pop %v1797
        %v1799 = vsel %vm1133, %v1798, 0.0
        %1800 = vadd.xlane.f32.xlu0 %v1799
        %v1801 = vpop.xlane.xlu0 %1800
        %v1802 = vrcp.pop %v1801
        %v1803 = vmul.f32 %v1798, %v1802
        %v1804 = vpack.c.bf16 %v1803, %v1803
        %v1806 = vunpack.c.l.b16 %v1745
        %v1807 = vpack.c.b16 %v1806, %v1806
        %1808 = vrot.lane.b32.xlu0 %v1807, 96
        %v1809 = vpop.permute.xlu0 %1808
        %v1811 = vsel %vm1133, %v1804, 0
        %vm1813 = vcmask 1043456
        %v1815 = vsel %vm1813, %v1809, 0
        %1817 = vmatprep.subr.bf16.mxu0 0
        %1818 = vmatpush1.bf16.msra.mxu0 0
        %1819 = vmatprep.subr.bf16.mxu0 0
        %1820 = vmatpush1.bf16.msra.mxu0 0
        %1821 = vmatprep.subr.bf16.mxu0 0
        %1822 = vmatpush1.bf16.msra.mxu0 0
        %1823 = vmatprep.subr.bf16.mxu0 0
        %1824 = vmatpush1.bf16.msra.mxu0 0
        %1825 = vmatprep.subr.bf16.mxu0 0
        %1826 = vmatpush1.bf16.msra.mxu0 0
        %1827 = vmatprep.subr.bf16.mxu0 0
        %1828 = vmatpush1.bf16.msra.mxu0 0
        %1829 = vmatprep.subr.bf16.mxu0 0
        %1830 = vmatpush1.bf16.msra.mxu0 0
        %1831 = vmatprep.subr.bf16.mxu0 0
        %1832 = vmatpush1.bf16.msra.mxu0 %v1815
        %1833 = vmatprep.subr.bf16.mxu0 0
        %1834 = vmatpush2.bf16.msra.mxu0 0
        %1835 = vmatprep.subr.bf16.mxu0 0
        %1836 = vmatpush2.bf16.msra.mxu0 0
        %1837 = vmatprep.subr.bf16.mxu0 0
        %1838 = vmatpush2.bf16.msra.mxu0 0
        %1839 = vmatprep.subr.bf16.mxu0 0
        %1840 = vmatpush2.bf16.msra.mxu0 0
        %1841 = vmatprep.subr.bf16.mxu0 0
        %1842 = vmatpush2.bf16.msra.mxu0 0
        %1843 = vmatprep.subr.bf16.mxu0 0
        %1844 = vmatpush2.bf16.msra.mxu0 0
        %1845 = vmatprep.subr.bf16.mxu0 0
        %1846 = vmatpush2.bf16.msra.mxu0 0
        %1847 = vmatprep.subr.bf16.mxu0 0
        %1848 = vmatpush2.bf16.msra.mxu0 0
        %1849 = vmatprep.mubr.bf16.mxu0 0
        %1850 = vmatmul.mubr.bf16.gmra.mxu0 %v1811
        %v1851 = vpop.f32.mrf.mxu0
        %v1852 = vadd.f32 0.0, %v1851
        %v1853 = vpop.f32.mrf.mxu0
        %v1854 = vpop.f32.mrf.mxu0
        %v1855 = vpop.f32.mrf.mxu0
        %1856 = vdwg.mxu0
        %v1857 = vpack.c.bf16 %v1852, %v1852
        %1859 = vrot.lane.b32.xlu0 %v1744, 120
        %v1860 = vpop.permute.xlu0 %1859
        %1861 = vrot.lane.b32.xlu0 %v1807, 120
        %v1862 = vpop.permute.xlu0 %1861
        %v1864 = vsel %vm1133, %v1860, 0
        %v1867 = vsel %vm1133, %v1862, 0
        %1869 = vmatprep.subr.bf16.mxu0 0
        %1870 = vmatpush1.bf16.xpose.msra.mxu0 0
        %1871 = vmatprep.subr.bf16.mxu0 0
        %1872 = vmatpush1.bf16.xpose.msra.mxu0 0
        %1873 = vmatprep.subr.bf16.mxu0 0
        %1874 = vmatpush1.bf16.xpose.msra.mxu0 0
        %1875 = vmatprep.subr.bf16.mxu0 0
        %1876 = vmatpush1.bf16.xpose.msra.mxu0 0
        %1877 = vmatprep.subr.bf16.mxu0 0
        %1878 = vmatpush1.bf16.xpose.msra.mxu0 0
        %1879 = vmatprep.subr.bf16.mxu0 0
        %1880 = vmatpush1.bf16.xpose.msra.mxu0 0
        %1881 = vmatprep.subr.bf16.mxu0 0
        %1882 = vmatpush1.bf16.xpose.msra.mxu0 0
        %1883 = vmatprep.subr.bf16.mxu0 0
        %1884 = vmatpush1.bf16.xpose.msra.mxu0 %v1867
        %1885 = vmatprep.subr.bf16.mxu0 0
        %1886 = vmatpush2.bf16.xpose.msra.mxu0 0
        %1887 = vmatprep.subr.bf16.mxu0 0
        %1888 = vmatpush2.bf16.xpose.msra.mxu0 0
        %1889 = vmatprep.subr.bf16.mxu0 0
        %1890 = vmatpush2.bf16.xpose.msra.mxu0 0
        %1891 = vmatprep.subr.bf16.mxu0 0
        %1892 = vmatpush2.bf16.xpose.msra.mxu0 0
        %1893 = vmatprep.subr.bf16.mxu0 0
        %1894 = vmatpush2.bf16.xpose.msra.mxu0 0
        %1895 = vmatprep.subr.bf16.mxu0 0
        %1896 = vmatpush2.bf16.xpose.msra.mxu0 0
        %1897 = vmatprep.subr.bf16.mxu0 0
        %1898 = vmatpush2.bf16.xpose.msra.mxu0 0
        %1899 = vmatprep.subr.bf16.mxu0 0
        %1900 = vmatpush2.bf16.xpose.msra.mxu0 0
        %1901 = vmatprep.mubr.bf16.mxu0 0
        %1902 = vmatmul.mubr.bf16.gmra.mxu0 %v1864
        %v1903 = vpop.f32.mrf.mxu0
        %v1904 = vadd.f32 0.0, %v1903
        %v1905 = vpop.f32.mrf.mxu0
        %v1906 = vpop.f32.mrf.mxu0
        %v1907 = vpop.f32.mrf.mxu0
        %1908 = vdwg.mxu0
        %v1909 = vmul.f32 %v1904, 0.35355338
        %v1910 = vsel %vm1133, %v1909, -inf
        %1911 = vmax.xlane.f32.xlu0 %v1910
        %v1912 = vpop.xlane.xlu0 %1911
        %v1913 = vsub.f32 %v1909, %v1912
        %v1914 = vmul.f32 %v1913, 1.442695
        %v1915 = vpow.pop %v1914
        %v1916 = vsel %vm1133, %v1915, 0.0
        %1917 = vadd.xlane.f32.xlu0 %v1916
        %v1918 = vpop.xlane.xlu0 %1917
        %v1919 = vrcp.pop %v1918
        %v1920 = vmul.f32 %v1915, %v1919
        %v1921 = vpack.c.bf16 %v1920, %v1920
        %1922 = vrot.lane.b32.xlu0 %v1807, 88
        %v1923 = vpop.permute.xlu0 %1922
        %v1925 = vsel %vm1133, %v1921, 0
        %v1928 = vsel %vm1813, %v1923, 0
        %1930 = vmatprep.subr.bf16.mxu0 0
        %1931 = vmatpush1.bf16.msra.mxu0 0
        %1932 = vmatprep.subr.bf16.mxu0 0
        %1933 = vmatpush1.bf16.msra.mxu0 0
        %1934 = vmatprep.subr.bf16.mxu0 0
        %1935 = vmatpush1.bf16.msra.mxu0 0
        %1936 = vmatprep.subr.bf16.mxu0 0
        %1937 = vmatpush1.bf16.msra.mxu0 0
        %1938 = vmatprep.subr.bf16.mxu0 0
        %1939 = vmatpush1.bf16.msra.mxu0 0
        %1940 = vmatprep.subr.bf16.mxu0 0
        %1941 = vmatpush1.bf16.msra.mxu0 0
        %1942 = vmatprep.subr.bf16.mxu0 0
        %1943 = vmatpush1.bf16.msra.mxu0 0
        %1944 = vmatprep.subr.bf16.mxu0 0
        %1945 = vmatpush1.bf16.msra.mxu0 %v1928
        %1946 = vmatprep.subr.bf16.mxu0 0
        %1947 = vmatpush2.bf16.msra.mxu0 0
        %1948 = vmatprep.subr.bf16.mxu0 0
        %1949 = vmatpush2.bf16.msra.mxu0 0
        %1950 = vmatprep.subr.bf16.mxu0 0
        %1951 = vmatpush2.bf16.msra.mxu0 0
        %1952 = vmatprep.subr.bf16.mxu0 0
        %1953 = vmatpush2.bf16.msra.mxu0 0
        %1954 = vmatprep.subr.bf16.mxu0 0
        %1955 = vmatpush2.bf16.msra.mxu0 0
        %1956 = vmatprep.subr.bf16.mxu0 0
        %1957 = vmatpush2.bf16.msra.mxu0 0
        %1958 = vmatprep.subr.bf16.mxu0 0
        %1959 = vmatpush2.bf16.msra.mxu0 0
        %1960 = vmatprep.subr.bf16.mxu0 0
        %1961 = vmatpush2.bf16.msra.mxu0 0
        %1962 = vmatprep.mubr.bf16.mxu0 0
        %1963 = vmatmul.mubr.bf16.gmra.mxu0 %v1925
        %v1964 = vpop.f32.mrf.mxu0
        %v1965 = vadd.f32 0.0, %v1964
        %v1966 = vpop.f32.mrf.mxu0
        %v1967 = vpop.f32.mrf.mxu0
        %v1968 = vpop.f32.mrf.mxu0
        %1969 = vdwg.mxu0
        %v1970 = vpack.c.bf16 %v1965, %v1965
        %1971 = vrot.lane.b32.xlu0 %v1744, 112
        %v1972 = vpop.permute.xlu0 %1971
        %1973 = vrot.lane.b32.xlu0 %v1807, 112
        %v1974 = vpop.permute.xlu0 %1973
        %v1976 = vsel %vm1133, %v1972, 0
        %v1979 = vsel %vm1133, %v1974, 0
        %1981 = vmatprep.subr.bf16.mxu0 0
        %1982 = vmatpush1.bf16.xpose.msra.mxu0 0
        %1983 = vmatprep.subr.bf16.mxu0 0
        %1984 = vmatpush1.bf16.xpose.msra.mxu0 0
        %1985 = vmatprep.subr.bf16.mxu0 0
        %1986 = vmatpush1.bf16.xpose.msra.mxu0 0
        %1987 = vmatprep.subr.bf16.mxu0 0
        %1988 = vmatpush1.bf16.xpose.msra.mxu0 0
        %1989 = vmatprep.subr.bf16.mxu0 0
        %1990 = vmatpush1.bf16.xpose.msra.mxu0 0
        %1991 = vmatprep.subr.bf16.mxu0 0
        %1992 = vmatpush1.bf16.xpose.msra.mxu0 0
        %1993 = vmatprep.subr.bf16.mxu0 0
        %1994 = vmatpush1.bf16.xpose.msra.mxu0 0
        %1995 = vmatprep.subr.bf16.mxu0 0
        %1996 = vmatpush1.bf16.xpose.msra.mxu0 %v1979
        %1997 = vmatprep.subr.bf16.mxu0 0
        %1998 = vmatpush2.bf16.xpose.msra.mxu0 0
        %1999 = vmatprep.subr.bf16.mxu0 0
        %2000 = vmatpush2.bf16.xpose.msra.mxu0 0
        %2001 = vmatprep.subr.bf16.mxu0 0
        %2002 = vmatpush2.bf16.xpose.msra.mxu0 0
        %2003 = vmatprep.subr.bf16.mxu0 0
        %2004 = vmatpush2.bf16.xpose.msra.mxu0 0
        %2005 = vmatprep.subr.bf16.mxu0 0
        %2006 = vmatpush2.bf16.xpose.msra.mxu0 0
        %2007 = vmatprep.subr.bf16.mxu0 0
        %2008 = vmatpush2.bf16.xpose.msra.mxu0 0
        %2009 = vmatprep.subr.bf16.mxu0 0
        %2010 = vmatpush2.bf16.xpose.msra.mxu0 0
        %2011 = vmatprep.subr.bf16.mxu0 0
        %2012 = vmatpush2.bf16.xpose.msra.mxu0 0
        %2013 = vmatprep.mubr.bf16.mxu0 0
        %2014 = vmatmul.mubr.bf16.gmra.mxu0 %v1976
        %v2015 = vpop.f32.mrf.mxu0
        %v2016 = vadd.f32 0.0, %v2015
        %v2017 = vpop.f32.mrf.mxu0
        %v2018 = vpop.f32.mrf.mxu0
        %v2019 = vpop.f32.mrf.mxu0
        %2020 = vdwg.mxu0
        %v2021 = vmul.f32 %v2016, 0.35355338
        %v2022 = vsel %vm1133, %v2021, -inf
        %2023 = vmax.xlane.f32.xlu0 %v2022
        %v2024 = vpop.xlane.xlu0 %2023
        %v2025 = vsub.f32 %v2021, %v2024
        %v2026 = vmul.f32 %v2025, 1.442695
        %v2027 = vpow.pop %v2026
        %v2028 = vsel %vm1133, %v2027, 0.0
        %2029 = vadd.xlane.f32.xlu0 %v2028
        %v2030 = vpop.xlane.xlu0 %2029
        %v2031 = vrcp.pop %v2030
        %v2032 = vmul.f32 %v2027, %v2031
        %v2033 = vpack.c.bf16 %v2032, %v2032
        %2034 = vrot.lane.b32.xlu0 %v1807, 80
        %v2035 = vpop.permute.xlu0 %2034
        %v2037 = vsel %vm1133, %v2033, 0
        %v2040 = vsel %vm1813, %v2035, 0
        %2042 = vmatprep.subr.bf16.mxu0 0
        %2043 = vmatpush1.bf16.msra.mxu0 0
        %2044 = vmatprep.subr.bf16.mxu0 0
        %2045 = vmatpush1.bf16.msra.mxu0 0
        %2046 = vmatprep.subr.bf16.mxu0 0
        %2047 = vmatpush1.bf16.msra.mxu0 0
        %2048 = vmatprep.subr.bf16.mxu0 0
        %2049 = vmatpush1.bf16.msra.mxu0 0
        %2050 = vmatprep.subr.bf16.mxu0 0
        %2051 = vmatpush1.bf16.msra.mxu0 0
        %2052 = vmatprep.subr.bf16.mxu0 0
        %2053 = vmatpush1.bf16.msra.mxu0 0
        %2054 = vmatprep.subr.bf16.mxu0 0
        %2055 = vmatpush1.bf16.msra.mxu0 0
        %2056 = vmatprep.subr.bf16.mxu0 0
        %2057 = vmatpush1.bf16.msra.mxu0 %v2040
        %2058 = vmatprep.subr.bf16.mxu0 0
        %2059 = vmatpush2.bf16.msra.mxu0 0
        %2060 = vmatprep.subr.bf16.mxu0 0
        %2061 = vmatpush2.bf16.msra.mxu0 0
        %2062 = vmatprep.subr.bf16.mxu0 0
        %2063 = vmatpush2.bf16.msra.mxu0 0
        %2064 = vmatprep.subr.bf16.mxu0 0
        %2065 = vmatpush2.bf16.msra.mxu0 0
        %2066 = vmatprep.subr.bf16.mxu0 0
        %2067 = vmatpush2.bf16.msra.mxu0 0
        %2068 = vmatprep.subr.bf16.mxu0 0
        %2069 = vmatpush2.bf16.msra.mxu0 0
        %2070 = vmatprep.subr.bf16.mxu0 0
        %2071 = vmatpush2.bf16.msra.mxu0 0
        %2072 = vmatprep.subr.bf16.mxu0 0
        %2073 = vmatpush2.bf16.msra.mxu0 0
        %2074 = vmatprep.mubr.bf16.mxu0 0
        %2075 = vmatmul.mubr.bf16.gmra.mxu0 %v2037
        %v2076 = vpop.f32.mrf.mxu0
        %v2077 = vadd.f32 0.0, %v2076
        %v2078 = vpop.f32.mrf.mxu0
        %v2079 = vpop.f32.mrf.mxu0
        %v2080 = vpop.f32.mrf.mxu0
        %2081 = vdwg.mxu0
        %v2082 = vpack.c.bf16 %v2077, %v2077
        %2083 = vrot.lane.b32.xlu0 %v1744, 104
        %v2084 = vpop.permute.xlu0 %2083
        %2085 = vrot.lane.b32.xlu0 %v1807, 104
        %v2086 = vpop.permute.xlu0 %2085
        %v2088 = vsel %vm1133, %v2084, 0
        %v2091 = vsel %vm1133, %v2086, 0
        %2093 = vmatprep.subr.bf16.mxu0 0
        %2094 = vmatpush1.bf16.xpose.msra.mxu0 0
        %2095 = vmatprep.subr.bf16.mxu0 0
        %2096 = vmatpush1.bf16.xpose.msra.mxu0 0
        %2097 = vmatprep.subr.bf16.mxu0 0
        %2098 = vmatpush1.bf16.xpose.msra.mxu0 0
        %2099 = vmatprep.subr.bf16.mxu0 0
        %2100 = vmatpush1.bf16.xpose.msra.mxu0 0
        %2101 = vmatprep.subr.bf16.mxu0 0
        %2102 = vmatpush1.bf16.xpose.msra.mxu0 0
        %2103 = vmatprep.subr.bf16.mxu0 0
        %2104 = vmatpush1.bf16.xpose.msra.mxu0 0
        %2105 = vmatprep.subr.bf16.mxu0 0
        %2106 = vmatpush1.bf16.xpose.msra.mxu0 0
        %2107 = vmatprep.subr.bf16.mxu0 0
        %2108 = vmatpush1.bf16.xpose.msra.mxu0 %v2091
        %2109 = vmatprep.subr.bf16.mxu0 0
        %2110 = vmatpush2.bf16.xpose.msra.mxu0 0
        %2111 = vmatprep.subr.bf16.mxu0 0
        %2112 = vmatpush2.bf16.xpose.msra.mxu0 0
        %2113 = vmatprep.subr.bf16.mxu0 0
        %2114 = vmatpush2.bf16.xpose.msra.mxu0 0
        %2115 = vmatprep.subr.bf16.mxu0 0
        %2116 = vmatpush2.bf16.xpose.msra.mxu0 0
        %2117 = vmatprep.subr.bf16.mxu0 0
        %2118 = vmatpush2.bf16.xpose.msra.mxu0 0
        %2119 = vmatprep.subr.bf16.mxu0 0
        %2120 = vmatpush2.bf16.xpose.msra.mxu0 0
        %2121 = vmatprep.subr.bf16.mxu0 0
        %2122 = vmatpush2.bf16.xpose.msra.mxu0 0
        %2123 = vmatprep.subr.bf16.mxu0 0
        %2124 = vmatpush2.bf16.xpose.msra.mxu0 0
        %2125 = vmatprep.mubr.bf16.mxu0 0
        %2126 = vmatmul.mubr.bf16.gmra.mxu0 %v2088
        %v2127 = vpop.f32.mrf.mxu0
        %v2128 = vadd.f32 0.0, %v2127
        %v2129 = vpop.f32.mrf.mxu0
        %v2130 = vpop.f32.mrf.mxu0
        %v2131 = vpop.f32.mrf.mxu0
        %2132 = vdwg.mxu0
        %v2133 = vmul.f32 %v2128, 0.35355338
        %v2134 = vsel %vm1133, %v2133, -inf
        %2135 = vmax.xlane.f32.xlu0 %v2134
        %v2136 = vpop.xlane.xlu0 %2135
        %v2137 = vsub.f32 %v2133, %v2136
        %v2138 = vmul.f32 %v2137, 1.442695
        %v2139 = vpow.pop %v2138
        %v2140 = vsel %vm1133, %v2139, 0.0
        %2141 = vadd.xlane.f32.xlu0 %v2140
        %v2142 = vpop.xlane.xlu0 %2141
        %v2143 = vrcp.pop %v2142
        %v2144 = vmul.f32 %v2139, %v2143
        %v2145 = vpack.c.bf16 %v2144, %v2144
        %2146 = vrot.lane.b32.xlu0 %v1807, 72
        %v2147 = vpop.permute.xlu0 %2146
        %v2149 = vsel %vm1133, %v2145, 0
        %v2152 = vsel %vm1813, %v2147, 0
        %2154 = vmatprep.subr.bf16.mxu0 0
        %2155 = vmatpush1.bf16.msra.mxu0 0
        %2156 = vmatprep.subr.bf16.mxu0 0
        %2157 = vmatpush1.bf16.msra.mxu0 0
        %2158 = vmatprep.subr.bf16.mxu0 0
        %2159 = vmatpush1.bf16.msra.mxu0 0
        %2160 = vmatprep.subr.bf16.mxu0 0
        %2161 = vmatpush1.bf16.msra.mxu0 0
        %2162 = vmatprep.subr.bf16.mxu0 0
        %2163 = vmatpush1.bf16.msra.mxu0 0
        %2164 = vmatprep.subr.bf16.mxu0 0
        %2165 = vmatpush1.bf16.msra.mxu0 0
        %2166 = vmatprep.subr.bf16.mxu0 0
        %2167 = vmatpush1.bf16.msra.mxu0 0
        %2168 = vmatprep.subr.bf16.mxu0 0
        %2169 = vmatpush1.bf16.msra.mxu0 %v2152
        %2170 = vmatprep.subr.bf16.mxu0 0
        %2171 = vmatpush2.bf16.msra.mxu0 0
        %2172 = vmatprep.subr.bf16.mxu0 0
        %2173 = vmatpush2.bf16.msra.mxu0 0
        %2174 = vmatprep.subr.bf16.mxu0 0
        %2175 = vmatpush2.bf16.msra.mxu0 0
        %2176 = vmatprep.subr.bf16.mxu0 0
        %2177 = vmatpush2.bf16.msra.mxu0 0
        %2178 = vmatprep.subr.bf16.mxu0 0
        %2179 = vmatpush2.bf16.msra.mxu0 0
        %2180 = vmatprep.subr.bf16.mxu0 0
        %2181 = vmatpush2.bf16.msra.mxu0 0
        %2182 = vmatprep.subr.bf16.mxu0 0
        %2183 = vmatpush2.bf16.msra.mxu0 0
        %2184 = vmatprep.subr.bf16.mxu0 0
        %2185 = vmatpush2.bf16.msra.mxu0 0
        %2186 = vmatprep.mubr.bf16.mxu0 0
        %2187 = vmatmul.mubr.bf16.gmra.mxu0 %v2149
        %v2188 = vpop.f32.mrf.mxu0
        %v2189 = vadd.f32 0.0, %v2188
        %v2190 = vpop.f32.mrf.mxu0
        %v2191 = vpop.f32.mrf.mxu0
        %v2192 = vpop.f32.mrf.mxu0
        %2193 = vdwg.mxu0
        %v2194 = vpack.c.bf16 %v2189, %v2189
        %2196 = vrot.lane.b32.xlu0 %v1970, 8
        %v2197 = vpop.permute.xlu0 %2196
        %2199 = vrot.lane.b32.xlu0 %v2082, 16
        %v2200 = vpop.permute.xlu0 %2199
        %2202 = vrot.lane.b32.xlu0 %v2194, 24
        %v2203 = vpop.permute.xlu0 %2202
        %v2206 = vsel %vm1133, %v1857, %v2197
        %v2208 = vsel %vm1181, %v2206, %v2200
        %v2210 = vsel %vm1586, %v2208, %v2203
        %v2212 = vlaneseq
        %v2213 = vshrl.u32 %v2212, 7
        %v2214 = vsub.s32 0, %v2213
        %v2215 = vrot.slane %v1687, %v2214
        %v2221 = vunpack.c.l.b16 %v1683
        %v2222 = vunpack.c.l.b16 %v1684
        %v2223 = vunpack.c.l.b16 %v1685
        %v2224 = vunpack.c.l.b16 %v1686
        %v2225 = vpack.c.b16 %v2222, %v2221
        %v2226 = vpack.c.b16 %v2224, %v2223
        %v2229 = vsel %vm1031, %v2210, 0
        %2231 = vmatprep.subr.bf16.mxu0 0
        %2232 = vmatpush1.bf16.msra.mxu0 0
        %2233 = vmatprep.subr.bf16.mxu0 0
        %2234 = vmatpush1.bf16.msra.mxu0 0
        %2235 = vmatprep.subr.bf16.mxu0 0
        %2236 = vmatpush1.bf16.msra.mxu0 0
        %2237 = vmatprep.subr.bf16.mxu0 0
        %2238 = vmatpush1.bf16.msra.mxu0 0
        %2239 = vmatprep.subr.bf16.mxu0 0
        %2240 = vmatpush1.bf16.msra.mxu0 0
        %2241 = vmatprep.subr.bf16.mxu0 0
        %2242 = vmatpush1.bf16.msra.mxu0 0
        %2243 = vmatprep.subr.bf16.mxu0 0
        %2244 = vmatpush1.bf16.msra.mxu0 %v2226
        %2245 = vmatprep.subr.bf16.mxu0 0
        %2246 = vmatpush1.bf16.msra.mxu0 %v2225
        %2247 = vmatprep.subr.bf16.mxu0 0
        %2248 = vmatpush2.bf16.msra.mxu0 0
        %2249 = vmatprep.subr.bf16.mxu0 0
        %2250 = vmatpush2.bf16.msra.mxu0 0
        %2251 = vmatprep.subr.bf16.mxu0 0
        %2252 = vmatpush2.bf16.msra.mxu0 0
        %2253 = vmatprep.subr.bf16.mxu0 0
        %2254 = vmatpush2.bf16.msra.mxu0 0
        %2255 = vmatprep.subr.bf16.mxu0 0
        %2256 = vmatpush2.bf16.msra.mxu0 0
        %2257 = vmatprep.subr.bf16.mxu0 0
        %2258 = vmatpush2.bf16.msra.mxu0 0
        %2259 = vmatprep.subr.bf16.mxu0 0
        %2260 = vmatpush2.bf16.msra.mxu0 0
        %2261 = vmatprep.subr.bf16.mxu0 0
        %2262 = vmatpush2.bf16.msra.mxu0 0
        %2263 = vmatprep.mubr.bf16.mxu0 0
        %2264 = vmatmul.mubr.bf16.gmra.mxu0 %v2229
        %v2265 = vpop.f32.mrf.mxu0
        %v2266 = vadd.f32 %v2215, %v2265
        %v2267 = vpop.f32.mrf.mxu0
        %v2268 = vpop.f32.mrf.mxu0
        %v2269 = vpop.f32.mrf.mxu0
        %2270 = vdwg.mxu0
        %v2271 = vadd.f32 %v1649, %v2266
        %v2272 = vld [vmem:[#allocation22] sm:$0x1]
        %v2273 = vld [vmem:[#allocation24] sm:$0x1]
        %v2274 = vsel %vm1031, %v2271, 0.0
        %2275 = vadd.xlane.f32.xlu0 %v2274
        %v2276 = vpop.xlane.xlu0 %2275
        %v2277 = vmul.f32 %v2276, %v1035
        %v2278 = vsub.f32 %v2271, %v2277
        %v2279 = vmul.f32 %v2278, %v2278
        %v2280 = vsel %vm1031, %v2279, 0.0
        %2281 = vadd.xlane.f32.xlu0 %v2280
        %v2282 = vpop.xlane.xlu0 %2281
        %v2283 = vmul.f32 %v2282, %v1035
        %v2284 = vadd.f32 %v2283, 1e-05
        %v2285 = vrsqrt.pop %v2284
        %v2286 = vmul.f32 %v2278, %v2285
        %v2288 = vlaneseq
        %v2289 = vshrl.u32 %v2288, 7
        %v2290 = vsub.s32 0, %v2289
        %v2291 = vrot.slane %v2272, %v2290
        %v2293 = vmul.f32 %v2286, %v2291
        %v2295 = vlaneseq
        %v2296 = vshrl.u32 %v2295, 7
        %v2297 = vsub.s32 0, %v2296
        %v2298 = vrot.slane %v2273, %v2297
        %v2300 = vadd.f32 %v2293, %v2298
        %v2301 = vpack.c.bf16 %v2300, %v2300
        %v2302 = vld [vmem:[%s16] sm:$0xff]
        %v2303 = vld [vmem:[%s16 + $0x8] sm:$0xff]
        %v2304 = vld [vmem:[%s16 + $0x10] sm:$0xff]
        %v2305 = vld [vmem:[%s16 + $0x18] sm:$0xff]
        %v2306 = vld [vmem:[#allocation25] sm:$0x3]
        %v2308 = vlaneseq
        %v2309 = vshrl.u32 %v2308, 7
        %v2310 = vsub.s32 0, %v2309
        %v2311 = vrot.slane %v2306, %v2310
        %v2312 = vlaneseq
        %v2313 = vshrl.u32 %v2312, 7
        %v2314 = vsub.s32 1, %v2313
        %v2315 = vrot.slane %v2306, %v2314
        %v2322 = vunpack.c.l.b16 %v2302
        %v2323 = vunpack.c.h.b16 %v2302
        %v2324 = vunpack.c.l.b16 %v2303
        %v2325 = vunpack.c.h.b16 %v2303
        %v2326 = vunpack.c.l.b16 %v2304
        %v2327 = vunpack.c.h.b16 %v2304
        %v2328 = vunpack.c.l.b16 %v2305
        %v2329 = vunpack.c.h.b16 %v2305
        %v2330 = vpack.c.b16 %v2324, %v2322
        %v2331 = vpack.c.b16 %v2325, %v2323
        %v2332 = vpack.c.b16 %v2328, %v2326
        %v2333 = vpack.c.b16 %v2329, %v2327
        %v2339 = vsel %vm1031, %v2301, 0
        %2341 = vmatprep.subr.bf16.mxu0 0
        %2342 = vmatpush1.bf16.msra.mxu0 0
        %2343 = vmatprep.subr.bf16.mxu0 0
        %2344 = vmatpush1.bf16.msra.mxu0 0
        %2345 = vmatprep.subr.bf16.mxu0 0
        %2346 = vmatpush1.bf16.msra.mxu0 0
        %2347 = vmatprep.subr.bf16.mxu0 0
        %2348 = vmatpush1.bf16.msra.mxu0 0
        %2349 = vmatprep.subr.bf16.mxu0 0
        %2350 = vmatpush1.bf16.msra.mxu0 0
        %2351 = vmatprep.subr.bf16.mxu0 0
        %2352 = vmatpush1.bf16.msra.mxu0 0
        %2353 = vmatprep.subr.bf16.mxu0 %v2333
        %2354 = vmatpush1.bf16.msra.mxu0 %v2332
        %2355 = vmatprep.subr.bf16.mxu0 %v2331
        %2356 = vmatpush1.bf16.msra.mxu0 %v2330
        %2357 = vmatprep.subr.bf16.mxu0 0
        %2358 = vmatpush2.bf16.msra.mxu0 0
        %2359 = vmatprep.subr.bf16.mxu0 0
        %2360 = vmatpush2.bf16.msra.mxu0 0
        %2361 = vmatprep.subr.bf16.mxu0 0
        %2362 = vmatpush2.bf16.msra.mxu0 0
        %2363 = vmatprep.subr.bf16.mxu0 0
        %2364 = vmatpush2.bf16.msra.mxu0 0
        %2365 = vmatprep.subr.bf16.mxu0 0
        %2366 = vmatpush2.bf16.msra.mxu0 0
        %2367 = vmatprep.subr.bf16.mxu0 0
        %2368 = vmatpush2.bf16.msra.mxu0 0
        %2369 = vmatprep.subr.bf16.mxu0 0
        %2370 = vmatpush2.bf16.msra.mxu0 0
        %2371 = vmatprep.subr.bf16.mxu0 0
        %2372 = vmatpush2.bf16.msra.mxu0 0
        %2373 = vmatprep.mubr.bf16.mxu0 0
        %2374 = vmatmul.mubr.bf16.gmra.mxu0 %v2339
        %v2375 = vpop.f32.mrf.mxu0
        %v2376 = vadd.f32 %v2311, %v2375
        %v2377 = vpop.f32.mrf.mxu0
        %v2378 = vadd.f32 %v2315, %v2377
        %v2379 = vpop.f32.mrf.mxu0
        %v2380 = vpop.f32.mrf.mxu0
        %2381 = vdwg.mxu0
        %v2382 = vmul.f32 %v2378, 0.5
        %v2383 = vmul.f32 %v2378, 0.70710677
        %vm2384 = vcmp.ge.f32.partialorder %v2383, 0.0
        %v2385 = vsel %vm2384, 1.0, -1.0
        %v2386 = vand.u32 2147483647, %v2383
        %v2387 = vmul.f32 %v2386, 0.3275911
        %v2388 = vadd.f32 %v2387, 1.0
        %v2389 = vrcp.pop %v2388
        %v2390 = vmul.f32 1.0, %v2389
        %v2391 = vmul.f32 %v2390, 1.0614054
        %v2392 = vadd.f32 %v2391, -1.4531521
        %v2393 = vmul.f32 %v2392, %v2390
        %v2394 = vadd.f32 %v2393, 1.4214138
        %v2395 = vmul.f32 %v2394, %v2390
        %v2396 = vadd.f32 %v2395, -0.28449672
        %v2397 = vmul.f32 %v2396, %v2390
        %v2398 = vadd.f32 %v2397, 0.2548296
        %v2399 = vmul.f32 %v2398, %v2390
        %v2400 = vsub.f32 0.0, %v2386
        %v2401 = vmul.f32 %v2400, %v2386
        %v2402 = vmul.f32 %v2401, 1.442695
        %v2403 = vpow.pop %v2402
        %v2404 = vmul.f32 %v2399, %v2403
        %v2405 = vsub.f32 1.0, %v2404
        %v2406 = vmul.f32 %v2385, %v2405
        %v2407 = vadd.f32 %v2406, 1.0
        %v2408 = vmul.f32 %v2382, %v2407
        %v2409 = vmul.f32 %v2376, %v2408
        %v2410 = vpack.c.bf16 %v2409, %v2409
        %v2411 = vld [vmem:[%s18] sm:$0xf]
        %v2412 = vld [vmem:[%s18 + $0x4] sm:$0xf]
        %v2413 = vld [vmem:[%s18 + $0x8] sm:$0xf]
        %v2414 = vld [vmem:[%s18 + $0xc] sm:$0xf]
        %v2415 = vld [vmem:[%s18 + $0x10] sm:$0xf]
        %v2416 = vld [vmem:[%s18 + $0x14] sm:$0xf]
        %v2417 = vld [vmem:[%s18 + $0x18] sm:$0xf]
        %v2418 = vld [vmem:[%s18 + $0x1c] sm:$0xf]
        %v2419 = vld [vmem:[%s18 + $0x20] sm:$0xf]
        %v2420 = vld [vmem:[%s18 + $0x24] sm:$0xf]
        %v2421 = vld [vmem:[%s18 + $0x28] sm:$0xf]
        %v2422 = vld [vmem:[%s18 + $0x2c] sm:$0xf]
        %v2423 = vld [vmem:[%s18 + $0x30] sm:$0xf]
        %v2424 = vld [vmem:[%s18 + $0x34] sm:$0xf]
        %v2425 = vld [vmem:[%s18 + $0x38] sm:$0xf]
        %v2426 = vld [vmem:[%s18 + $0x3c] sm:$0xf]
        %v2427 = vld [vmem:[%s19] sm:$0x1]
        %v2429 = vlaneseq
        %v2430 = vshrl.u32 %v2429, 7
        %v2431 = vsub.s32 0, %v2430
        %v2432 = vrot.slane %v2427, %v2431
        %v2450 = vunpack.c.l.b16 %v2411
        %v2451 = vunpack.c.l.b16 %v2412
        %v2452 = vunpack.c.l.b16 %v2413
        %v2453 = vunpack.c.l.b16 %v2414
        %v2454 = vunpack.c.l.b16 %v2415
        %v2455 = vunpack.c.l.b16 %v2416
        %v2456 = vunpack.c.l.b16 %v2417
        %v2457 = vunpack.c.l.b16 %v2418
        %v2458 = vunpack.c.l.b16 %v2419
        %v2459 = vunpack.c.l.b16 %v2420
        %v2460 = vunpack.c.l.b16 %v2421
        %v2461 = vunpack.c.l.b16 %v2422
        %v2462 = vunpack.c.l.b16 %v2423
        %v2463 = vunpack.c.l.b16 %v2424
        %v2464 = vunpack.c.l.b16 %v2425
        %v2465 = vunpack.c.l.b16 %v2426
        %v2466 = vpack.c.b16 %v2451, %v2450
        %v2467 = vpack.c.b16 %v2453, %v2452
        %v2468 = vpack.c.b16 %v2455, %v2454
        %v2469 = vpack.c.b16 %v2457, %v2456
        %v2470 = vpack.c.b16 %v2459, %v2458
        %v2471 = vpack.c.b16 %v2461, %v2460
        %v2472 = vpack.c.b16 %v2463, %v2462
        %v2473 = vpack.c.b16 %v2465, %v2464
        %2482 = vmatprep.subr.bf16.mxu0 0
        %2483 = vmatpush1.bf16.msra.mxu0 %v2473
        %2484 = vmatprep.subr.bf16.mxu0 0
        %2485 = vmatpush1.bf16.msra.mxu0 %v2472
        %2486 = vmatprep.subr.bf16.mxu0 0
        %2487 = vmatpush1.bf16.msra.mxu0 %v2471
        %2488 = vmatprep.subr.bf16.mxu0 0
        %2489 = vmatpush1.bf16.msra.mxu0 %v2470
        %2490 = vmatprep.subr.bf16.mxu0 0
        %2491 = vmatpush1.bf16.msra.mxu0 %v2469
        %2492 = vmatprep.subr.bf16.mxu0 0
        %2493 = vmatpush1.bf16.msra.mxu0 %v2468
        %2494 = vmatprep.subr.bf16.mxu0 0
        %2495 = vmatpush1.bf16.msra.mxu0 %v2467
        %2496 = vmatprep.subr.bf16.mxu0 0
        %2497 = vmatpush1.bf16.msra.mxu0 %v2466
        %2498 = vmatprep.subr.bf16.mxu0 0
        %2499 = vmatpush2.bf16.msra.mxu0 0
        %2500 = vmatprep.subr.bf16.mxu0 0
        %2501 = vmatpush2.bf16.msra.mxu0 0
        %2502 = vmatprep.subr.bf16.mxu0 0
        %2503 = vmatpush2.bf16.msra.mxu0 0
        %2504 = vmatprep.subr.bf16.mxu0 0
        %2505 = vmatpush2.bf16.msra.mxu0 0
        %2506 = vmatprep.subr.bf16.mxu0 0
        %2507 = vmatpush2.bf16.msra.mxu0 0
        %2508 = vmatprep.subr.bf16.mxu0 0
        %2509 = vmatpush2.bf16.msra.mxu0 0
        %2510 = vmatprep.subr.bf16.mxu0 0
        %2511 = vmatpush2.bf16.msra.mxu0 0
        %2512 = vmatprep.subr.bf16.mxu0 0
        %2513 = vmatpush2.bf16.msra.mxu0 0
        %2514 = vmatprep.mubr.bf16.mxu0 0
        %2515 = vmatmul.mubr.bf16.gmra.mxu0 %v2410
        %v2516 = vpop.f32.mrf.mxu0
        %v2517 = vadd.f32 %v2432, %v2516
        %v2518 = vpop.f32.mrf.mxu0
        %v2519 = vpop.f32.mrf.mxu0
        %v2520 = vpop.f32.mrf.mxu0
        %2521 = vdwg.mxu0
        %v2522 = vadd.f32 %v2271, %v2517
        %2523 = vst.msk [vmem:[%s835] sm:$0xff] %vm1031, %v2522
        %s2524 = sand.u32 %s494, 1
        %s2525 = scalar_lea.sflag [#allocation6], %s2524
        %s2526 = sand.u32 %s494, 1
        %s2527 = smul.addr %s2526, 8
        %s2528 = scalar_lea.vmem [#allocation27], %s2527
        // Predicated region
        $region161: #{tpu_custom_call.1} parent=99 // pred_check
          %p2529 = pneg %p504
        $region162: #{tpu_custom_call.1} parent=99 // pred_check_branch
          %2531 = sbr.rel (%p2529) target = $region164
        $region163: #{tpu_custom_call.1} parent=99 // pred_region
          %s2533 = ssub.s32 128, 128
          %2534 = vsyncadd %s2525, %s2533
          %s2535 = smul.addr %s46, 2
          %s2536 = sadd.s32 %s47, %s2535
          %s2537 = smul.addr %s2536, 128
          %s2538 = scalar_lea.hbm %s20, %s2537
          %s2540 = sshll.u32 %s2528, 4
          %s2541 = int_to_ptr.vmem [resolvable:$true] %s2540
          %2543 = dma.vmem_to_hbm [thread:$0]  %s2541, 128, %s2538, %s2525
        $region164: #{tpu_custom_call.1} parent=99 // pred_fallthru
          _
      $region100: #{tpu_custom_call.1} parent=5 // pred_fallthru
        _
      %p2544 = scmp.le.s32.totalorder 2, %s37
      // Predicated region
      $region165: #{tpu_custom_call.1} parent=5 // pred_check
        %p2545 = pneg %p2544
      $region166: #{tpu_custom_call.1} parent=5 // pred_check_branch
        %2547 = sbr.rel (%p2545) target = $region168
      $region167: #{tpu_custom_call.1} parent=5 // pred_region
        %s2548 = ssub.s32 %s37, 2
        // Predicated region
        $region169: #{tpu_custom_call.1} parent=167 // pred_check
          %p2549 = pneg %p510
        $region170: #{tpu_custom_call.1} parent=167 // pred_check_branch
          %2551 = sbr.rel (%p2549) target = $region172
        $region171: #{tpu_custom_call.1} parent=167 // pred_region
          %s2552 = sand.u32 %s495, 1
          %s2553 = scalar_lea.sflag [#allocation6], %s2552
          %s2554 = sand.u32 %s495, 1
          %s2555 = smul.addr %s2554, 8
          %s2556 = scalar_lea.vmem [#allocation27], %s2555
          %2557 = dma.done %s2553, 128
        $region172: #{tpu_custom_call.1} parent=167 // pred_fallthru
          _
      $region168: #{tpu_custom_call.1} parent=5 // pred_fallthru
        _
    $region6: #{tpu_custom_call.1} parent=1 // loop_footer
      %s41 = sadd.s32 1, %s37
    $region7: #{tpu_custom_call.1} parent=1 // loop_footer_branch
      %36 = sbr.rel target = $region3
    $region8: #{tpu_custom_call.1} parent=1 // loop_exit
      _
    %2558 = vsyncpa [#allocation5], 1
    %s2559 = scalar_lea.sflag [#allocation5], 1
    %2560 = vsyncpa %s2559, 1
    %2561 = vsyncpa [#allocation8], 1
    %2562 = vsyncpa [#allocation11], 1
    %2563 = vsyncpa [#allocation14], 1
    %2564 = vsyncpa [#allocation17], 1
    %2565 = vsyncpa [#allocation20], 1
    %2566 = vsyncpa [#allocation23], 1
    %2567 = vsyncpa [#allocation26], 1
    %2568 = vsyncpa [#allocation6], 1
    %s2569 = scalar_lea.sflag [#allocation6], 1
    %2570 = vsyncpa %s2569, 1

</llo_original>
